<compile_context>
chip_gen: v7x
topology: tpu7x:2x2x1
jax: 0.10.0
libtpu: 0.0.40
codegen_flags: <defaults>
</compile_context>

<pallas_src>
import functools

import numpy as np
import jax
import jax.numpy as jnp
from jax import lax
from jax.experimental import pallas as pl
from jax.experimental.pallas import tpu as pltpu


# ----------------------------------------------------------------------------
# Fused encoder kernel (embeddings + 2-layer bidirectional LSTM)
# ----------------------------------------------------------------------------
def encoder_kernel(ci_ref, bi_ref, prev_ref, emb_ref,                  # indices, perm, table
                   w0f_ref, w0b_ref, w0hh_ref, b0_ref,                 # layer 0 (packed)
                   w1f_ref, w1b_ref, w1hh_ref, b1_ref,                 # layer 1 (packed)
                   h0_ref, c0_ref,                                     # (4, B, H) init states
                   y_ref, hn_ref, cn_ref,                              # (B,T*2H), (4,B,H), (4,B,H)
                   x1_scratch):                                        # VMEM (T*B, 2H)
    B = hn_ref.shape[1]
    H = hn_ref.shape[2]
    TB = ci_ref.shape[0]
    T = TB // B
    H2 = 2 * H
    Vtot = emb_ref.shape[0]

    # ---- embeddings: one "two-hot" x block-diagonal table == gather + concat ----
    # TODO(synk): nn.Dropout is identity in eval mode; training-mode stochastic
    # dropout (input + inter-layer LSTM dropout) is not implemented.
    iot = lax.broadcasted_iota(jnp.int32, (TB, Vtot), 1)
    twohot = ((iot == ci_ref[...]) | (iot == bi_ref[...])).astype(jnp.float32)
    x0 = jnp.dot(twohot, emb_ref[...], preferred_element_type=jnp.float32)   # (TB, Ec+Eb)

    p_rev = prev_ref[...]          # (TB, TB) time-reversal permutation (constant)

    def bilstm_layer(x, wf_ref, wb_ref, whh_ref, b_ref, h_cat, c_cat, store):
        # Hoisted input projection for BOTH directions.  Gate columns are
        # interleaved per H-block [i_f i_b f_f f_b g_f g_b o_f o_b]; backward
        # columns are fed the time-reversed rows (x_rev), so unrolled step t
        # handles forward time t AND backward time T-1-t with a single
        # (B,2H) x (2H,8H) block-diagonal recurrent matmul.
        x_rev = jnp.dot(p_rev, x, preferred_element_type=jnp.float32)
        xw = (jnp.dot(x, wf_ref[...], preferred_element_type=jnp.float32)
              + jnp.dot(x_rev, wb_ref[...], preferred_element_type=jnp.float32)
              + b_ref[...])                                                  # (TB, 8H)
        whh = whh_ref[...]                                                   # (2H, 8H)
        for t in range(T):   # fully unrolled: serial recurrence, static indices
            gates = (xw[t * B:(t + 1) * B, :]
                     + jnp.dot(h_cat, whh, preferred_element_type=jnp.float32))
            sg = jax.nn.sigmoid(gates)                 # one wide sigmoid (i, f, o lanes)
            g_cat = jnp.tanh(gates[:, 2 * H2:3 * H2])  # one tanh for both directions' g
            c_cat = sg[:, H2:2 * H2] * c_cat + sg[:, 0:H2] * g_cat
            h_cat = sg[:, 3 * H2:4 * H2] * jnp.tanh(c_cat)
            store(t, h_cat)
        return h_cat, c_cat

    # ------------------------------ layer 0 ----------------------------------
    def store0(t, h_cat):
        tb = T - 1 - t
        x1_scratch[t * B:(t + 1) * B, 0:H] = h_cat[:, 0:H]        # fwd output @ time t
        x1_scratch[tb * B:(tb + 1) * B, H:H2] = h_cat[:, H:H2]    # bwd output @ time T-1-t

    h_cat = jnp.concatenate([h0_ref[0], h0_ref[1]], axis=-1)
    c_cat = jnp.concatenate([c0_ref[0], c0_ref[1]], axis=-1)
    h_cat, c_cat = bilstm_layer(x0, w0f_ref, w0b_ref, w0hh_ref, b0_ref,
                                h_cat, c_cat, store0)
    hn_ref[0] = h_cat[:, 0:H]
    hn_ref[1] = h_cat[:, H:H2]
    cn_ref[0] = c_cat[:, 0:H]
    cn_ref[1] = c_cat[:, H:H2]

    # ---------- layer 1 (inter-layer dropout is identity in eval mode) -------
    def store1(t, h_cat):
        tb = T - 1 - t
        # y is (B, T*2H): batch-first & lane-dense; wrapper only reshapes.
        y_ref[:, t * H2:t * H2 + H] = h_cat[:, 0:H]
        y_ref[:, tb * H2 + H:(tb + 1) * H2] = h_cat[:, H:H2]

    h_cat = jnp.concatenate([h0_ref[2], h0_ref[3]], axis=-1)
    c_cat = jnp.concatenate([c0_ref[2], c0_ref[3]], axis=-1)
    h_cat, c_cat = bilstm_layer(x1_scratch[...], w1f_ref, w1b_ref, w1hh_ref, b1_ref,
                                h_cat, c_cat, store1)
    hn_ref[2] = h_cat[:, 0:H]
    hn_ref[3] = h_cat[:, H:H2]
    cn_ref[2] = c_cat[:, 0:H]
    cn_ref[3] = c_cat[:, H:H2]


# ----------------------------------------------------------------------------
# Wrapper
# ----------------------------------------------------------------------------
def encoder_forward(params, char_idx, bichar_idx, hidden):
    """char_idx/bichar_idx: (B, T) int32.  Returns (output (B,T,2H), (h_n, c_n))."""
    B, T = char_idx.shape
    H = params["w0_hh"].shape[0] // 2
    h0, c0 = hidden

    # Time-major flatten (row = t*B + b); bichar indices offset into the lower
    # block of the block-diagonal embedding table.
    ci = jnp.transpose(char_idx).reshape(T * B, 1).astype(jnp.int32)
    bi = (jnp.transpose(bichar_idx).reshape(T * B, 1).astype(jnp.int32)
          + params["vc_pad"])

    # Static time-reversal permutation (row t*B+b -> row (T-1-t)*B+b), folded
    # into the hoisted backward input projection inside the kernel.
    perm = np.zeros((T * B, T * B), np.float32)
    for t in range(T):
        for b in range(B):
            perm[t * B + b, (T - 1 - t) * B + b] = 1.0
    p_rev = jnp.asarray(perm)

    # Whole-problem-resident design (no grid / no DMA pipeline).  Guard against
    # future growth of T / B / vocab silently blowing the scoped VMEM limit
    # (v7x: 64 MiB physical, 32 MiB default scoped); beyond this, switch to a
    # gridded BlockSpec pipeline + scalar-prefetch row gather for the tables.
    resident_bytes = 4 * (params["emb"].size
                          + sum(params[k].size for k in params
                                if k.startswith("w") or k.startswith("b"))
                          + T * B * (T * B + 16 * H + 2 * H + 2) + 8 * B * H)
    assert resident_bytes < 16 * 1024 * 1024, "switch to a gridded/pipelined design"

    vmem = functools.partial(pl.BlockSpec, memory_space=pltpu.MemorySpace.VMEM)
    y_flat, h_n, c_n = pl.pallas_call(
        encoder_kernel,
        out_shape=(jax.ShapeDtypeStruct((B, T * 2 * H), jnp.float32),
                   jax.ShapeDtypeStruct((4, B, H), jnp.float32),
                   jax.ShapeDtypeStruct((4, B, H), jnp.float32)),
        in_specs=[vmem() for _ in range(14)],
        out_specs=(vmem(), vmem(), vmem()),
        scratch_shapes=[pltpu.VMEM((T * B, 2 * H), jnp.float32)],
    )(ci, bi, p_rev, params["emb"],
      params["w0_ih_f"], params["w0_ih_b"], params["w0_hh"], params["b0"],
      params["w1_ih_f"], params["w1_ih_b"], params["w1_hh"], params["b1"],
      h0, c0)

    output = y_flat.reshape(B, T, 2 * H)      # already batch-first; reshape only
    return output, (h_n, c_n)


# ----------------------------------------------------------------------------
# Parameters: raw (PyTorch-shaped) init + one-time packing for the kernel
# ----------------------------------------------------------------------------
def init_raw_params(key, char_num, char_emb, bichar_num, bichar_emb, hidden):
    keys = jax.random.split(key, 6)
    p = {
        "char_emb": jax.random.normal(keys[0], (char_num, char_emb), jnp.float32),
        "bichar_emb": jax.random.normal(keys[1], (bichar_num, bichar_emb), jnp.float32),
    }
    k = 1.0 / float(hidden) ** 0.5
    in_dims = {0: char_emb + bichar_emb, 1: 2 * hidden}
    idx = 2
    for layer in (0, 1):
        for direction in ("fwd", "bwd"):
            d_in = in_dims[layer]
            ks = jax.random.split(keys[idx], 4)
            idx += 1
            w_ih = jax.random.uniform(ks[0], (4 * hidden, d_in), jnp.float32, -k, k)
            w_hh = jax.random.uniform(ks[1], (4 * hidden, hidden), jnp.float32, -k, k)
            b_ih = jax.random.uniform(ks[2], (4 * hidden,), jnp.float32, -k, k)
            b_hh = jax.random.uniform(ks[3], (4 * hidden,), jnp.float32, -k, k)
            p[f"l{layer}_{direction}"] = (w_ih, w_hh, b_ih, b_hh)
    return p


def _pad_rows_to(x, n):
    pad = n - x.shape[0]
    if pad:
        x = jnp.concatenate([x, jnp.zeros((pad,) + x.shape[1:], x.dtype)], axis=0)
    return x


def _interleave_gate_blocks(left, right, hidden):
    """left/right: (..., 4H) with gate blocks [i f g o]; result (..., 8H) with
    per-gate fwd/bwd interleaving [i_l i_r f_l f_r g_l g_r o_l o_r]."""
    parts = []
    for g in range(4):
        parts.append(left[..., g * hidden:(g + 1) * hidden])
        parts.append(right[..., g * hidden:(g + 1) * hidden])
    return jnp.concatenate(parts, axis=-1)


def prepare_params(raw, hidden):
    """One-time packing: block-diagonal embedding table, gate-interleaved and
    fwd/bwd-split input projections, block-diagonal recurrent weights,
    pre-summed biases."""
    H = hidden
    ce, be = raw["char_emb"], raw["bichar_emb"]
    vc, ec = ce.shape
    vb, eb = be.shape
    vc_pad = ((vc + 127) // 128) * 128
    vb_pad = ((vb + 127) // 128) * 128
    top = jnp.concatenate([_pad_rows_to(ce, vc_pad),
                           jnp.zeros((vc_pad, eb), jnp.float32)], axis=1)
    bot = jnp.concatenate([jnp.zeros((vb_pad, ec), jnp.float32),
                           _pad_rows_to(be, vb_pad)], axis=1)
    p = {"emb": jnp.concatenate([top, bot], axis=0),     # (vc_pad+vb_pad, ec+eb)
         "vc_pad": jnp.int32(vc_pad)}
    for layer in (0, 1):
        w_ih_f, w_hh_f, b_ih_f, b_hh_f = raw[f"l{layer}_fwd"]
        w_ih_b, w_hh_b, b_ih_b, b_hh_b = raw[f"l{layer}_bwd"]
        d_in = w_ih_f.shape[1]
        z_ih = jnp.zeros((d_in, 4 * H), jnp.float32)
        z_hh = jnp.zeros((H, 4 * H), jnp.float32)
        # Hoisted input projection halves (other direction's columns zeroed):
        p[f"w{layer}_ih_f"] = _interleave_gate_blocks(w_ih_f.T, z_ih, H)     # (D, 8H)
        p[f"w{layer}_ih_b"] = _interleave_gate_blocks(z_ih, w_ih_b.T, H)     # (D, 8H)
        # Block-diagonal recurrent weight: rows 0:H act on h_fwd, rows H:2H on h_bwd.
        p[f"w{layer}_hh"] = jnp.concatenate(
            [_interleave_gate_blocks(w_hh_f.T, z_hh, H),
             _interleave_gate_blocks(z_hh, w_hh_b.T, H)], axis=0)            # (2H, 8H)
        p[f"b{layer}"] = _interleave_gate_blocks(
            (b_ih_f + b_hh_f)[None, :], (b_ih_b + b_hh_b)[None, :], H)       # (1, 8H)
    return p


# ----------------------------------------------------------------------------
# Pure-JAX reference (mirrors PyTorch nn.LSTM semantics) for verification
# ----------------------------------------------------------------------------
def encoder_reference(raw, char_idx, bichar_idx, hidden):
    hi = jax.lax.Precision.HIGHEST
    char_rep = jnp.take(raw["char_emb"], char_idx, axis=0)
    bichar_rep = jnp.take(raw["bichar_emb"], bichar_idx, axis=0)
    x = jnp.concatenate([char_rep, bichar_rep], axis=-1)        # (B, T, D)
    h0_all, c0_all = hidden
    H = h0_all.shape[-1]

    def run_dir(x_btd, prm, h, c, reverse):
        w_ih, w_hh, b_ih, b_hh = prm
        T = x_btd.shape[1]
        b = b_ih + b_hh
        order = range(T - 1, -1, -1) if reverse else range(T)
        ys = [None] * T
        for t in order:
            gates = (jnp.dot(x_btd[:, t, :], w_ih.T, precision=hi)
                     + jnp.dot(h, w_hh.T, precision=hi) + b)
            i = jax.nn.sigmoid(gates[:, 0:H])
            f = jax.nn.sigmoid(gates[:, H:2 * H])
            g = jnp.tanh(gates[:, 2 * H:3 * H])
            o = jax.nn.sigmoid(gates[:, 3 * H:4 * H])
            c = f * c + i * g
            h = o * jnp.tanh(c)
            ys[t] = h
        return jnp.stack(ys, axis=1), h, c

    def run_layer(x_btd, pf, pb, h2, c2):
        yf, hf, cf = run_dir(x_btd, pf, h2[0], c2[0], False)
        yb, hb, cb = run_dir(x_btd, pb, h2[1], c2[1], True)
        return (jnp.concatenate([yf, yb], axis=-1),
                jnp.stack([hf, hb]), jnp.stack([cf, cb]))

    y1, hn0, cn0 = run_layer(x, raw["l0_fwd"], raw["l0_bwd"], h0_all[0:2], c0_all[0:2])
    y2, hn1, cn1 = run_layer(y1, raw["l1_fwd"], raw["l1_bwd"], h0_all[2:4], c0_all[2:4])
    return y2, (jnp.concatenate([hn0, hn1], axis=0),
                jnp.concatenate([cn0, cn1], axis=0))


if __name__ == "__main__":
    CHAR_NUM, CHAR_EMB = 50, 16
    BICHAR_NUM, BICHAR_EMB = 60, 16
    HIDDEN = 32
    B, T = 2, 8

    key = jax.random.PRNGKey(0)
    k_param, k_char, k_bichar = jax.random.split(key, 3)

    raw = init_raw_params(k_param, CHAR_NUM, CHAR_EMB, BICHAR_NUM, BICHAR_EMB, HIDDEN)
    params = prepare_params(raw, HIDDEN)

    char_idx = jax.random.randint(k_char, (B, T), 0, CHAR_NUM, dtype=jnp.int32)
    bichar_idx = jax.random.randint(k_bichar, (B, T), 0, BICHAR_NUM, dtype=jnp.int32)

    # init_hidden: zeros of shape (num_layers*num_directions=4, B, H)
    hidden0 = (jnp.zeros((4, B, HIDDEN), jnp.float32),
               jnp.zeros((4, B, HIDDEN), jnp.float32))

    fwd = jax.jit(encoder_forward)
    output, (h_n, c_n) = fwd(params, char_idx, bichar_idx, hidden0)
    jax.block_until_ready((output, h_n, c_n))

    assert output.shape == (B, T, 2 * HIDDEN)
    assert h_n.shape == (4, B, HIDDEN) and c_n.shape == (4, B, HIDDEN)

    # Numerical check against the pure-JAX reference of the PyTorch module.
    out_r, (h_r, c_r) = encoder_reference(raw, char_idx, bichar_idx, hidden0)
    max_err = max(float(jnp.max(jnp.abs(output - out_r))),
                  float(jnp.max(jnp.abs(h_n - h_r))),
                  float(jnp.max(jnp.abs(c_n - c_r))))
    assert max_err < 2e-3, f"mismatch vs reference: {max_err}"

    print("KERNEL_OK")
</pallas_src>

<mosaic_0001>
module attributes {stable_mosaic.version = 11 : i64} {
  func.func @encoder_kernel(%arg0: memref<16x1xi32, #tpu.memory_space<vmem>>, %arg1: memref<16x1xi32, #tpu.memory_space<vmem>>, %arg2: memref<16x16xf32, #tpu.memory_space<vmem>>, %arg3: memref<256x32xf32, #tpu.memory_space<vmem>>, %arg4: memref<32x256xf32, #tpu.memory_space<vmem>>, %arg5: memref<32x256xf32, #tpu.memory_space<vmem>>, %arg6: memref<64x256xf32, #tpu.memory_space<vmem>>, %arg7: memref<1x256xf32, #tpu.memory_space<vmem>>, %arg8: memref<64x256xf32, #tpu.memory_space<vmem>>, %arg9: memref<64x256xf32, #tpu.memory_space<vmem>>, %arg10: memref<64x256xf32, #tpu.memory_space<vmem>>, %arg11: memref<1x256xf32, #tpu.memory_space<vmem>>, %arg12: memref<4x2x32xf32, #tpu.memory_space<vmem>>, %arg13: memref<4x2x32xf32, #tpu.memory_space<vmem>>, %arg14: memref<2x512xf32, #tpu.memory_space<vmem>>, %arg15: memref<4x2x32xf32, #tpu.memory_space<vmem>>, %arg16: memref<4x2x32xf32, #tpu.memory_space<vmem>>, %arg17: memref<16x64xf32, #tpu.memory_space<vmem>>) attributes {dimension_semantics = [], scalar_prefetch = 0 : i64, scratch_operands = 1 : i64, tpu.core_type = #tpu.core_type<tc>} {
    %0 = tpu.iota {dimensions = array<i32: 1>} : vector<16x256xi32>
    %c0 = arith.constant 0 : index
    %c0_0 = arith.constant 0 : index
    %1 = vector.load %arg0[%c0, %c0_0] : memref<16x1xi32, #tpu.memory_space<vmem>>, vector<16x1xi32>
    %2 = vector.broadcast %1 : vector<16x1xi32> to vector<16x256xi32>
    %3 = arith.cmpi eq, %0, %2 : vector<16x256xi32>
    %c0_1 = arith.constant 0 : index
    %c0_2 = arith.constant 0 : index
    %4 = vector.load %arg1[%c0_1, %c0_2] : memref<16x1xi32, #tpu.memory_space<vmem>>, vector<16x1xi32>
    %5 = vector.broadcast %4 : vector<16x1xi32> to vector<16x256xi32>
    %6 = arith.cmpi eq, %0, %5 : vector<16x256xi32>
    %7 = arith.ori %3, %6 : vector<16x256xi1>
    %8 = arith.extui %7 : vector<16x256xi1> to vector<16x256xi32>
    %9 = arith.sitofp %8 : vector<16x256xi32> to vector<16x256xf32>
    %c0_3 = arith.constant 0 : index
    %c0_4 = arith.constant 0 : index
    %10 = vector.load %arg3[%c0_3, %c0_4] : memref<256x32xf32, #tpu.memory_space<vmem>>, vector<256x32xf32>
    %cst = arith.constant dense<0.000000e+00> : vector<16x32xf32>
    %11 = tpu.matmul %9, %10, %cst {dimension_numbers = #tpu.dot_dimension_numbers<[1], [0], [0], [1], [0, 0, 1, 1], [], []>} : vector<16x256xf32>, vector<256x32xf32>, vector<16x32xf32> -> vector<16x32xf32>
    %c0_5 = arith.constant 0 : index
    %c0_6 = arith.constant 0 : index
    %12 = vector.load %arg2[%c0_5, %c0_6] : memref<16x16xf32, #tpu.memory_space<vmem>>, vector<16x16xf32>
    %c0_7 = arith.constant 0 : index
    %c0_8 = arith.constant 0 : index
    %c0_9 = arith.constant 0 : index
    %13 = vector.load %arg12[%c0_7, %c0_8, %c0_9] : memref<4x2x32xf32, #tpu.memory_space<vmem>>, vector<1x2x32xf32>
    %14 = vector.shape_cast %13 : vector<1x2x32xf32> to vector<2x32xf32>
    %c1 = arith.constant 1 : index
    %c0_10 = arith.constant 0 : index
    %c0_11 = arith.constant 0 : index
    %15 = vector.load %arg12[%c1, %c0_10, %c0_11] : memref<4x2x32xf32, #tpu.memory_space<vmem>>, vector<1x2x32xf32>
    %16 = vector.shape_cast %15 : vector<1x2x32xf32> to vector<2x32xf32>
    %17 = tpu.concatenate %14, %16 in 1 : vector<2x32xf32>, vector<2x32xf32> -> vector<2x64xf32>
    %c0_12 = arith.constant 0 : index
    %c0_13 = arith.constant 0 : index
    %c0_14 = arith.constant 0 : index
    %18 = vector.load %arg13[%c0_12, %c0_13, %c0_14] : memref<4x2x32xf32, #tpu.memory_space<vmem>>, vector<1x2x32xf32>
    %19 = vector.shape_cast %18 : vector<1x2x32xf32> to vector<2x32xf32>
    %c1_15 = arith.constant 1 : index
    %c0_16 = arith.constant 0 : index
    %c0_17 = arith.constant 0 : index
    %20 = vector.load %arg13[%c1_15, %c0_16, %c0_17] : memref<4x2x32xf32, #tpu.memory_space<vmem>>, vector<1x2x32xf32>
    %21 = vector.shape_cast %20 : vector<1x2x32xf32> to vector<2x32xf32>
    %22 = tpu.concatenate %19, %21 in 1 : vector<2x32xf32>, vector<2x32xf32> -> vector<2x64xf32>
    %cst_18 = arith.constant dense<0.000000e+00> : vector<16x32xf32>
    %23 = tpu.matmul %12, %11, %cst_18 {dimension_numbers = #tpu.dot_dimension_numbers<[1], [0], [0], [1], [0, 0, 1, 1], [], []>} : vector<16x16xf32>, vector<16x32xf32>, vector<16x32xf32> -> vector<16x32xf32>
    %c0_19 = arith.constant 0 : index
    %c0_20 = arith.constant 0 : index
    %24 = vector.load %arg4[%c0_19, %c0_20] : memref<32x256xf32, #tpu.memory_space<vmem>>, vector<32x256xf32>
    %cst_21 = arith.constant dense<0.000000e+00> : vector<16x256xf32>
    %25 = tpu.matmul %11, %24, %cst_21 {dimension_numbers = #tpu.dot_dimension_numbers<[1], [0], [0], [1], [0, 0, 1, 1], [], []>} : vector<16x32xf32>, vector<32x256xf32>, vector<16x256xf32> -> vector<16x256xf32>
    %c0_22 = arith.constant 0 : index
    %c0_23 = arith.constant 0 : index
    %26 = vector.load %arg5[%c0_22, %c0_23] : memref<32x256xf32, #tpu.memory_space<vmem>>, vector<32x256xf32>
    %cst_24 = arith.constant dense<0.000000e+00> : vector<16x256xf32>
    %27 = tpu.matmul %23, %26, %cst_24 {dimension_numbers = #tpu.dot_dimension_numbers<[1], [0], [0], [1], [0, 0, 1, 1], [], []>} : vector<16x32xf32>, vector<32x256xf32>, vector<16x256xf32> -> vector<16x256xf32>
    %28 = arith.addf %25, %27 : vector<16x256xf32>
    %c0_25 = arith.constant 0 : index
    %c0_26 = arith.constant 0 : index
    %29 = vector.load %arg7[%c0_25, %c0_26] : memref<1x256xf32, #tpu.memory_space<vmem>>, vector<1x256xf32>
    %30 = vector.broadcast %29 : vector<1x256xf32> to vector<16x256xf32>
    %31 = arith.addf %28, %30 : vector<16x256xf32>
    %c0_27 = arith.constant 0 : index
    %c0_28 = arith.constant 0 : index
    %32 = vector.load %arg6[%c0_27, %c0_28] : memref<64x256xf32, #tpu.memory_space<vmem>>, vector<64x256xf32>
    %33 = vector.extract_strided_slice %31 {offsets = [0, 0], sizes = [2, 256], strides = [1, 1]} : vector<16x256xf32> to vector<2x256xf32>
    %cst_29 = arith.constant dense<0.000000e+00> : vector<2x256xf32>
    %34 = tpu.matmul %17, %32, %cst_29 {dimension_numbers = #tpu.dot_dimension_numbers<[1], [0], [0], [1], [0, 0, 1, 1], [], []>} : vector<2x64xf32>, vector<64x256xf32>, vector<2x256xf32> -> vector<2x256xf32>
    %35 = arith.addf %33, %34 : vector<2x256xf32>
    %36 = arith.negf %35 : vector<2x256xf32>
    %37 = math.exp %36 : vector<2x256xf32>
    %cst_30 = arith.constant 1.000000e+00 : f32
    %38 = vector.broadcast %cst_30 : f32 to vector<2x256xf32>
    %39 = arith.addf %38, %37 : vector<2x256xf32>
    %40 = arith.divf %38, %39 : vector<2x256xf32>
    %41 = vector.extract_strided_slice %35 {offsets = [0, 128], sizes = [2, 64], strides = [1, 1]} : vector<2x256xf32> to vector<2x64xf32>
    %42 = math.tanh %41 : vector<2x64xf32>
    %43 = vector.extract_strided_slice %40 {offsets = [0, 64], sizes = [2, 64], strides = [1, 1]} : vector<2x256xf32> to vector<2x64xf32>
    %44 = arith.mulf %43, %22 : vector<2x64xf32>
    %45 = vector.extract_strided_slice %40 {offsets = [0, 0], sizes = [2, 64], strides = [1, 1]} : vector<2x256xf32> to vector<2x64xf32>
    %46 = arith.mulf %45, %42 : vector<2x64xf32>
    %47 = arith.addf %44, %46 : vector<2x64xf32>
    %48 = vector.extract_strided_slice %40 {offsets = [0, 192], sizes = [2, 64], strides = [1, 1]} : vector<2x256xf32> to vector<2x64xf32>
    %49 = math.tanh %47 : vector<2x64xf32>
    %50 = arith.mulf %48, %49 : vector<2x64xf32>
    %51 = vector.extract_strided_slice %50 {offsets = [0, 0], sizes = [2, 32], strides = [1, 1]} : vector<2x64xf32> to vector<2x32xf32>
    %c0_31 = arith.constant 0 : index
    %c0_32 = arith.constant 0 : index
    %52 = vector.load %arg17[%c0_31, %c0_32] : memref<16x64xf32, #tpu.memory_space<vmem>>, vector<2x32xf32>
    tpu.vector_store %arg17[%c0_31, %c0_32], %51 {strides = array<i32>} : memref<16x64xf32, #tpu.memory_space<vmem>>, vector<2x32xf32>,
    %53 = vector.extract_strided_slice %50 {offsets = [0, 32], sizes = [2, 32], strides = [1, 1]} : vector<2x64xf32> to vector<2x32xf32>
    %c14 = arith.constant 14 : index
    %c32 = arith.constant 32 : index
    %54 = vector.load %arg17[%c14, %c32] : memref<16x64xf32, #tpu.memory_space<vmem>>, vector<2x32xf32>
    tpu.vector_store %arg17[%c14, %c32], %53 {strides = array<i32>} : memref<16x64xf32, #tpu.memory_space<vmem>>, vector<2x32xf32>,
    %55 = vector.extract_strided_slice %31 {offsets = [2, 0], sizes = [2, 256], strides = [1, 1]} : vector<16x256xf32> to vector<2x256xf32>
    %cst_33 = arith.constant dense<0.000000e+00> : vector<2x256xf32>
    %56 = tpu.matmul %50, %32, %cst_33 {dimension_numbers = #tpu.dot_dimension_numbers<[1], [0], [0], [1], [0, 0, 1, 1], [], []>} : vector<2x64xf32>, vector<64x256xf32>, vector<2x256xf32> -> vector<2x256xf32>
    %57 = arith.addf %55, %56 : vector<2x256xf32>
    %58 = arith.negf %57 : vector<2x256xf32>
    %59 = math.exp %58 : vector<2x256xf32>
    %cst_34 = arith.constant 1.000000e+00 : f32
    %60 = vector.broadcast %cst_34 : f32 to vector<2x256xf32>
    %61 = arith.addf %60, %59 : vector<2x256xf32>
    %62 = arith.divf %60, %61 : vector<2x256xf32>
    %63 = vector.extract_strided_slice %57 {offsets = [0, 128], sizes = [2, 64], strides = [1, 1]} : vector<2x256xf32> to vector<2x64xf32>
    %64 = math.tanh %63 : vector<2x64xf32>
    %65 = vector.extract_strided_slice %62 {offsets = [0, 64], sizes = [2, 64], strides = [1, 1]} : vector<2x256xf32> to vector<2x64xf32>
    %66 = arith.mulf %65, %47 : vector<2x64xf32>
    %67 = vector.extract_strided_slice %62 {offsets = [0, 0], sizes = [2, 64], strides = [1, 1]} : vector<2x256xf32> to vector<2x64xf32>
    %68 = arith.mulf %67, %64 : vector<2x64xf32>
    %69 = arith.addf %66, %68 : vector<2x64xf32>
    %70 = vector.extract_strided_slice %62 {offsets = [0, 192], sizes = [2, 64], strides = [1, 1]} : vector<2x256xf32> to vector<2x64xf32>
    %71 = math.tanh %69 : vector<2x64xf32>
    %72 = arith.mulf %70, %71 : vector<2x64xf32>
    %73 = vector.extract_strided_slice %72 {offsets = [0, 0], sizes = [2, 32], strides = [1, 1]} : vector<2x64xf32> to vector<2x32xf32>
    %c2 = arith.constant 2 : index
    %c0_35 = arith.constant 0 : index
    %74 = vector.load %arg17[%c2, %c0_35] : memref<16x64xf32, #tpu.memory_space<vmem>>, vector<2x32xf32>
    tpu.vector_store %arg17[%c2, %c0_35], %73 {strides = array<i32>} : memref<16x64xf32, #tpu.memory_space<vmem>>, vector<2x32xf32>,
    %75 = vector.extract_strided_slice %72 {offsets = [0, 32], sizes = [2, 32], strides = [1, 1]} : vector<2x64xf32> to vector<2x32xf32>
    %c12 = arith.constant 12 : index
    %c32_36 = arith.constant 32 : index
    %76 = vector.load %arg17[%c12, %c32_36] : memref<16x64xf32, #tpu.memory_space<vmem>>, vector<2x32xf32>
    tpu.vector_store %arg17[%c12, %c32_36], %75 {strides = array<i32>} : memref<16x64xf32, #tpu.memory_space<vmem>>, vector<2x32xf32>,
    %77 = vector.extract_strided_slice %31 {offsets = [4, 0], sizes = [2, 256], strides = [1, 1]} : vector<16x256xf32> to vector<2x256xf32>
    %cst_37 = arith.constant dense<0.000000e+00> : vector<2x256xf32>
    %78 = tpu.matmul %72, %32, %cst_37 {dimension_numbers = #tpu.dot_dimension_numbers<[1], [0], [0], [1], [0, 0, 1, 1], [], []>} : vector<2x64xf32>, vector<64x256xf32>, vector<2x256xf32> -> vector<2x256xf32>
    %79 = arith.addf %77, %78 : vector<2x256xf32>
    %80 = arith.negf %79 : vector<2x256xf32>
    %81 = math.exp %80 : vector<2x256xf32>
    %cst_38 = arith.constant 1.000000e+00 : f32
    %82 = vector.broadcast %cst_38 : f32 to vector<2x256xf32>
    %83 = arith.addf %82, %81 : vector<2x256xf32>
    %84 = arith.divf %82, %83 : vector<2x256xf32>
    %85 = vector.extract_strided_slice %79 {offsets = [0, 128], sizes = [2, 64], strides = [1, 1]} : vector<2x256xf32> to vector<2x64xf32>
    %86 = math.tanh %85 : vector<2x64xf32>
    %87 = vector.extract_strided_slice %84 {offsets = [0, 64], sizes = [2, 64], strides = [1, 1]} : vector<2x256xf32> to vector<2x64xf32>
    %88 = arith.mulf %87, %69 : vector<2x64xf32>
    %89 = vector.extract_strided_slice %84 {offsets = [0, 0], sizes = [2, 64], strides = [1, 1]} : vector<2x256xf32> to vector<2x64xf32>
    %90 = arith.mulf %89, %86 : vector<2x64xf32>
    %91 = arith.addf %88, %90 : vector<2x64xf32>
    %92 = vector.extract_strided_slice %84 {offsets = [0, 192], sizes = [2, 64], strides = [1, 1]} : vector<2x256xf32> to vector<2x64xf32>
    %93 = math.tanh %91 : vector<2x64xf32>
    %94 = arith.mulf %92, %93 : vector<2x64xf32>
    %95 = vector.extract_strided_slice %94 {offsets = [0, 0], sizes = [2, 32], strides = [1, 1]} : vector<2x64xf32> to vector<2x32xf32>
    %c4 = arith.constant 4 : index
    %c0_39 = arith.constant 0 : index
    %96 = vector.load %arg17[%c4, %c0_39] : memref<16x64xf32, #tpu.memory_space<vmem>>, vector<2x32xf32>
    tpu.vector_store %arg17[%c4, %c0_39], %95 {strides = array<i32>} : memref<16x64xf32, #tpu.memory_space<vmem>>, vector<2x32xf32>,
    %97 = vector.extract_strided_slice %94 {offsets = [0, 32], sizes = [2, 32], strides = [1, 1]} : vector<2x64xf32> to vector<2x32xf32>
    %c10 = arith.constant 10 : index
    %c32_40 = arith.constant 32 : index
    %98 = vector.load %arg17[%c10, %c32_40] : memref<16x64xf32, #tpu.memory_space<vmem>>, vector<2x32xf32>
    tpu.vector_store %arg17[%c10, %c32_40], %97 {strides = array<i32>} : memref<16x64xf32, #tpu.memory_space<vmem>>, vector<2x32xf32>,
    %99 = vector.extract_strided_slice %31 {offsets = [6, 0], sizes = [2, 256], strides = [1, 1]} : vector<16x256xf32> to vector<2x256xf32>
    %cst_41 = arith.constant dense<0.000000e+00> : vector<2x256xf32>
    %100 = tpu.matmul %94, %32, %cst_41 {dimension_numbers = #tpu.dot_dimension_numbers<[1], [0], [0], [1], [0, 0, 1, 1], [], []>} : vector<2x64xf32>, vector<64x256xf32>, vector<2x256xf32> -> vector<2x256xf32>
    %101 = arith.addf %99, %100 : vector<2x256xf32>
    %102 = arith.negf %101 : vector<2x256xf32>
    %103 = math.exp %102 : vector<2x256xf32>
    %cst_42 = arith.constant 1.000000e+00 : f32
    %104 = vector.broadcast %cst_42 : f32 to vector<2x256xf32>
    %105 = arith.addf %104, %103 : vector<2x256xf32>
    %106 = arith.divf %104, %105 : vector<2x256xf32>
    %107 = vector.extract_strided_slice %101 {offsets = [0, 128], sizes = [2, 64], strides = [1, 1]} : vector<2x256xf32> to vector<2x64xf32>
    %108 = math.tanh %107 : vector<2x64xf32>
    %109 = vector.extract_strided_slice %106 {offsets = [0, 64], sizes = [2, 64], strides = [1, 1]} : vector<2x256xf32> to vector<2x64xf32>
    %110 = arith.mulf %109, %91 : vector<2x64xf32>
    %111 = vector.extract_strided_slice %106 {offsets = [0, 0], sizes = [2, 64], strides = [1, 1]} : vector<2x256xf32> to vector<2x64xf32>
    %112 = arith.mulf %111, %108 : vector<2x64xf32>
    %113 = arith.addf %110, %112 : vector<2x64xf32>
    %114 = vector.extract_strided_slice %106 {offsets = [0, 192], sizes = [2, 64], strides = [1, 1]} : vector<2x256xf32> to vector<2x64xf32>
    %115 = math.tanh %113 : vector<2x64xf32>
    %116 = arith.mulf %114, %115 : vector<2x64xf32>
    %117 = vector.extract_strided_slice %116 {offsets = [0, 0], sizes = [2, 32], strides = [1, 1]} : vector<2x64xf32> to vector<2x32xf32>
    %c6 = arith.constant 6 : index
    %c0_43 = arith.constant 0 : index
    %118 = vector.load %arg17[%c6, %c0_43] : memref<16x64xf32, #tpu.memory_space<vmem>>, vector<2x32xf32>
    tpu.vector_store %arg17[%c6, %c0_43], %117 {strides = array<i32>} : memref<16x64xf32, #tpu.memory_space<vmem>>, vector<2x32xf32>,
    %119 = vector.extract_strided_slice %116 {offsets = [0, 32], sizes = [2, 32], strides = [1, 1]} : vector<2x64xf32> to vector<2x32xf32>
    %c8 = arith.constant 8 : index
    %c32_44 = arith.constant 32 : index
    %120 = vector.load %arg17[%c8, %c32_44] : memref<16x64xf32, #tpu.memory_space<vmem>>, vector<2x32xf32>
    tpu.vector_store %arg17[%c8, %c32_44], %119 {strides = array<i32>} : memref<16x64xf32, #tpu.memory_space<vmem>>, vector<2x32xf32>,
    %121 = vector.extract_strided_slice %31 {offsets = [8, 0], sizes = [2, 256], strides = [1, 1]} : vector<16x256xf32> to vector<2x256xf32>
    %cst_45 = arith.constant dense<0.000000e+00> : vector<2x256xf32>
    %122 = tpu.matmul %116, %32, %cst_45 {dimension_numbers = #tpu.dot_dimension_numbers<[1], [0], [0], [1], [0, 0, 1, 1], [], []>} : vector<2x64xf32>, vector<64x256xf32>, vector<2x256xf32> -> vector<2x256xf32>
    %123 = arith.addf %121, %122 : vector<2x256xf32>
    %124 = arith.negf %123 : vector<2x256xf32>
    %125 = math.exp %124 : vector<2x256xf32>
    %cst_46 = arith.constant 1.000000e+00 : f32
    %126 = vector.broadcast %cst_46 : f32 to vector<2x256xf32>
    %127 = arith.addf %126, %125 : vector<2x256xf32>
    %128 = arith.divf %126, %127 : vector<2x256xf32>
    %129 = vector.extract_strided_slice %123 {offsets = [0, 128], sizes = [2, 64], strides = [1, 1]} : vector<2x256xf32> to vector<2x64xf32>
    %130 = math.tanh %129 : vector<2x64xf32>
    %131 = vector.extract_strided_slice %128 {offsets = [0, 64], sizes = [2, 64], strides = [1, 1]} : vector<2x256xf32> to vector<2x64xf32>
    %132 = arith.mulf %131, %113 : vector<2x64xf32>
    %133 = vector.extract_strided_slice %128 {offsets = [0, 0], sizes = [2, 64], strides = [1, 1]} : vector<2x256xf32> to vector<2x64xf32>
    %134 = arith.mulf %133, %130 : vector<2x64xf32>
    %135 = arith.addf %132, %134 : vector<2x64xf32>
    %136 = vector.extract_strided_slice %128 {offsets = [0, 192], sizes = [2, 64], strides = [1, 1]} : vector<2x256xf32> to vector<2x64xf32>
    %137 = math.tanh %135 : vector<2x64xf32>
    %138 = arith.mulf %136, %137 : vector<2x64xf32>
    %139 = vector.extract_strided_slice %138 {offsets = [0, 0], sizes = [2, 32], strides = [1, 1]} : vector<2x64xf32> to vector<2x32xf32>
    %c8_47 = arith.constant 8 : index
    %c0_48 = arith.constant 0 : index
    %140 = vector.load %arg17[%c8_47, %c0_48] : memref<16x64xf32, #tpu.memory_space<vmem>>, vector<2x32xf32>
    tpu.vector_store %arg17[%c8_47, %c0_48], %139 {strides = array<i32>} : memref<16x64xf32, #tpu.memory_space<vmem>>, vector<2x32xf32>,
    %141 = vector.extract_strided_slice %138 {offsets = [0, 32], sizes = [2, 32], strides = [1, 1]} : vector<2x64xf32> to vector<2x32xf32>
    %c6_49 = arith.constant 6 : index
    %c32_50 = arith.constant 32 : index
    %142 = vector.load %arg17[%c6_49, %c32_50] : memref<16x64xf32, #tpu.memory_space<vmem>>, vector<2x32xf32>
    tpu.vector_store %arg17[%c6_49, %c32_50], %141 {strides = array<i32>} : memref<16x64xf32, #tpu.memory_space<vmem>>, vector<2x32xf32>,
    %143 = vector.extract_strided_slice %31 {offsets = [10, 0], sizes = [2, 256], strides = [1, 1]} : vector<16x256xf32> to vector<2x256xf32>
    %cst_51 = arith.constant dense<0.000000e+00> : vector<2x256xf32>
    %144 = tpu.matmul %138, %32, %cst_51 {dimension_numbers = #tpu.dot_dimension_numbers<[1], [0], [0], [1], [0, 0, 1, 1], [], []>} : vector<2x64xf32>, vector<64x256xf32>, vector<2x256xf32> -> vector<2x256xf32>
    %145 = arith.addf %143, %144 : vector<2x256xf32>
    %146 = arith.negf %145 : vector<2x256xf32>
    %147 = math.exp %146 : vector<2x256xf32>
    %cst_52 = arith.constant 1.000000e+00 : f32
    %148 = vector.broadcast %cst_52 : f32 to vector<2x256xf32>
    %149 = arith.addf %148, %147 : vector<2x256xf32>
    %150 = arith.divf %148, %149 : vector<2x256xf32>
    %151 = vector.extract_strided_slice %145 {offsets = [0, 128], sizes = [2, 64], strides = [1, 1]} : vector<2x256xf32> to vector<2x64xf32>
    %152 = math.tanh %151 : vector<2x64xf32>
    %153 = vector.extract_strided_slice %150 {offsets = [0, 64], sizes = [2, 64], strides = [1, 1]} : vector<2x256xf32> to vector<2x64xf32>
    %154 = arith.mulf %153, %135 : vector<2x64xf32>
    %155 = vector.extract_strided_slice %150 {offsets = [0, 0], sizes = [2, 64], strides = [1, 1]} : vector<2x256xf32> to vector<2x64xf32>
    %156 = arith.mulf %155, %152 : vector<2x64xf32>
    %157 = arith.addf %154, %156 : vector<2x64xf32>
    %158 = vector.extract_strided_slice %150 {offsets = [0, 192], sizes = [2, 64], strides = [1, 1]} : vector<2x256xf32> to vector<2x64xf32>
    %159 = math.tanh %157 : vector<2x64xf32>
    %160 = arith.mulf %158, %159 : vector<2x64xf32>
    %161 = vector.extract_strided_slice %160 {offsets = [0, 0], sizes = [2, 32], strides = [1, 1]} : vector<2x64xf32> to vector<2x32xf32>
    %c10_53 = arith.constant 10 : index
    %c0_54 = arith.constant 0 : index
    %162 = vector.load %arg17[%c10_53, %c0_54] : memref<16x64xf32, #tpu.memory_space<vmem>>, vector<2x32xf32>
    tpu.vector_store %arg17[%c10_53, %c0_54], %161 {strides = array<i32>} : memref<16x64xf32, #tpu.memory_space<vmem>>, vector<2x32xf32>,
    %163 = vector.extract_strided_slice %160 {offsets = [0, 32], sizes = [2, 32], strides = [1, 1]} : vector<2x64xf32> to vector<2x32xf32>
    %c4_55 = arith.constant 4 : index
    %c32_56 = arith.constant 32 : index
    %164 = vector.load %arg17[%c4_55, %c32_56] : memref<16x64xf32, #tpu.memory_space<vmem>>, vector<2x32xf32>
    tpu.vector_store %arg17[%c4_55, %c32_56], %163 {strides = array<i32>} : memref<16x64xf32, #tpu.memory_space<vmem>>, vector<2x32xf32>,
    %165 = vector.extract_strided_slice %31 {offsets = [12, 0], sizes = [2, 256], strides = [1, 1]} : vector<16x256xf32> to vector<2x256xf32>
    %cst_57 = arith.constant dense<0.000000e+00> : vector<2x256xf32>
    %166 = tpu.matmul %160, %32, %cst_57 {dimension_numbers = #tpu.dot_dimension_numbers<[1], [0], [0], [1], [0, 0, 1, 1], [], []>} : vector<2x64xf32>, vector<64x256xf32>, vector<2x256xf32> -> vector<2x256xf32>
    %167 = arith.addf %165, %166 : vector<2x256xf32>
    %168 = arith.negf %167 : vector<2x256xf32>
    %169 = math.exp %168 : vector<2x256xf32>
    %cst_58 = arith.constant 1.000000e+00 : f32
    %170 = vector.broadcast %cst_58 : f32 to vector<2x256xf32>
    %171 = arith.addf %170, %169 : vector<2x256xf32>
    %172 = arith.divf %170, %171 : vector<2x256xf32>
    %173 = vector.extract_strided_slice %167 {offsets = [0, 128], sizes = [2, 64], strides = [1, 1]} : vector<2x256xf32> to vector<2x64xf32>
    %174 = math.tanh %173 : vector<2x64xf32>
    %175 = vector.extract_strided_slice %172 {offsets = [0, 64], sizes = [2, 64], strides = [1, 1]} : vector<2x256xf32> to vector<2x64xf32>
    %176 = arith.mulf %175, %157 : vector<2x64xf32>
    %177 = vector.extract_strided_slice %172 {offsets = [0, 0], sizes = [2, 64], strides = [1, 1]} : vector<2x256xf32> to vector<2x64xf32>
    %178 = arith.mulf %177, %174 : vector<2x64xf32>
    %179 = arith.addf %176, %178 : vector<2x64xf32>
    %180 = vector.extract_strided_slice %172 {offsets = [0, 192], sizes = [2, 64], strides = [1, 1]} : vector<2x256xf32> to vector<2x64xf32>
    %181 = math.tanh %179 : vector<2x64xf32>
    %182 = arith.mulf %180, %181 : vector<2x64xf32>
    %183 = vector.extract_strided_slice %182 {offsets = [0, 0], sizes = [2, 32], strides = [1, 1]} : vector<2x64xf32> to vector<2x32xf32>
    %c12_59 = arith.constant 12 : index
    %c0_60 = arith.constant 0 : index
    %184 = vector.load %arg17[%c12_59, %c0_60] : memref<16x64xf32, #tpu.memory_space<vmem>>, vector<2x32xf32>
    tpu.vector_store %arg17[%c12_59, %c0_60], %183 {strides = array<i32>} : memref<16x64xf32, #tpu.memory_space<vmem>>, vector<2x32xf32>,
    %185 = vector.extract_strided_slice %182 {offsets = [0, 32], sizes = [2, 32], strides = [1, 1]} : vector<2x64xf32> to vector<2x32xf32>
    %c2_61 = arith.constant 2 : index
    %c32_62 = arith.constant 32 : index
    %186 = vector.load %arg17[%c2_61, %c32_62] : memref<16x64xf32, #tpu.memory_space<vmem>>, vector<2x32xf32>
    tpu.vector_store %arg17[%c2_61, %c32_62], %185 {strides = array<i32>} : memref<16x64xf32, #tpu.memory_space<vmem>>, vector<2x32xf32>,
    %187 = vector.extract_strided_slice %31 {offsets = [14, 0], sizes = [2, 256], strides = [1, 1]} : vector<16x256xf32> to vector<2x256xf32>
    %cst_63 = arith.constant dense<0.000000e+00> : vector<2x256xf32>
    %188 = tpu.matmul %182, %32, %cst_63 {dimension_numbers = #tpu.dot_dimension_numbers<[1], [0], [0], [1], [0, 0, 1, 1], [], []>} : vector<2x64xf32>, vector<64x256xf32>, vector<2x256xf32> -> vector<2x256xf32>
    %189 = arith.addf %187, %188 : vector<2x256xf32>
    %190 = arith.negf %189 : vector<2x256xf32>
    %191 = math.exp %190 : vector<2x256xf32>
    %cst_64 = arith.constant 1.000000e+00 : f32
    %192 = vector.broadcast %cst_64 : f32 to vector<2x256xf32>
    %193 = arith.addf %192, %191 : vector<2x256xf32>
    %194 = arith.divf %192, %193 : vector<2x256xf32>
    %195 = vector.extract_strided_slice %189 {offsets = [0, 128], sizes = [2, 64], strides = [1, 1]} : vector<2x256xf32> to vector<2x64xf32>
    %196 = math.tanh %195 : vector<2x64xf32>
    %197 = vector.extract_strided_slice %194 {offsets = [0, 64], sizes = [2, 64], strides = [1, 1]} : vector<2x256xf32> to vector<2x64xf32>
    %198 = arith.mulf %197, %179 : vector<2x64xf32>
    %199 = vector.extract_strided_slice %194 {offsets = [0, 0], sizes = [2, 64], strides = [1, 1]} : vector<2x256xf32> to vector<2x64xf32>
    %200 = arith.mulf %199, %196 : vector<2x64xf32>
    %201 = arith.addf %198, %200 : vector<2x64xf32>
    %202 = vector.extract_strided_slice %194 {offsets = [0, 192], sizes = [2, 64], strides = [1, 1]} : vector<2x256xf32> to vector<2x64xf32>
    %203 = math.tanh %201 : vector<2x64xf32>
    %204 = arith.mulf %202, %203 : vector<2x64xf32>
    %205 = vector.extract_strided_slice %204 {offsets = [0, 0], sizes = [2, 32], strides = [1, 1]} : vector<2x64xf32> to vector<2x32xf32>
    %c14_65 = arith.constant 14 : index
    %c0_66 = arith.constant 0 : index
    %206 = vector.load %arg17[%c14_65, %c0_66] : memref<16x64xf32, #tpu.memory_space<vmem>>, vector<2x32xf32>
    tpu.vector_store %arg17[%c14_65, %c0_66], %205 {strides = array<i32>} : memref<16x64xf32, #tpu.memory_space<vmem>>, vector<2x32xf32>,
    %207 = vector.extract_strided_slice %204 {offsets = [0, 32], sizes = [2, 32], strides = [1, 1]} : vector<2x64xf32> to vector<2x32xf32>
    %c0_67 = arith.constant 0 : index
    %c32_68 = arith.constant 32 : index
    %208 = vector.load %arg17[%c0_67, %c32_68] : memref<16x64xf32, #tpu.memory_space<vmem>>, vector<2x32xf32>
    tpu.vector_store %arg17[%c0_67, %c32_68], %207 {strides = array<i32>} : memref<16x64xf32, #tpu.memory_space<vmem>>, vector<2x32xf32>,
    %209 = vector.extract_strided_slice %204 {offsets = [0, 0], sizes = [2, 32], strides = [1, 1]} : vector<2x64xf32> to vector<2x32xf32>
    %c0_69 = arith.constant 0 : index
    %c0_70 = arith.constant 0 : index
    %c0_71 = arith.constant 0 : index
    %210 = vector.load %arg15[%c0_69, %c0_70, %c0_71] : memref<4x2x32xf32, #tpu.memory_space<vmem>>, vector<1x2x32xf32>
    %211 = vector.shape_cast %210 : vector<1x2x32xf32> to vector<2x32xf32>
    %212 = vector.shape_cast %209 : vector<2x32xf32> to vector<1x2x32xf32>
    tpu.vector_store %arg15[%c0_69, %c0_70, %c0_71], %212 {strides = array<i32>} : memref<4x2x32xf32, #tpu.memory_space<vmem>>, vector<1x2x32xf32>,
    %213 = vector.extract_strided_slice %204 {offsets = [0, 32], sizes = [2, 32], strides = [1, 1]} : vector<2x64xf32> to vector<2x32xf32>
    %c1_72 = arith.constant 1 : index
    %c0_73 = arith.constant 0 : index
    %c0_74 = arith.constant 0 : index
    %214 = vector.load %arg15[%c1_72, %c0_73, %c0_74] : memref<4x2x32xf32, #tpu.memory_space<vmem>>, vector<1x2x32xf32>
    %215 = vector.shape_cast %214 : vector<1x2x32xf32> to vector<2x32xf32>
    %216 = vector.shape_cast %213 : vector<2x32xf32> to vector<1x2x32xf32>
    tpu.vector_store %arg15[%c1_72, %c0_73, %c0_74], %216 {strides = array<i32>} : memref<4x2x32xf32, #tpu.memory_space<vmem>>, vector<1x2x32xf32>,
    %217 = vector.extract_strided_slice %201 {offsets = [0, 0], sizes = [2, 32], strides = [1, 1]} : vector<2x64xf32> to vector<2x32xf32>
    %c0_75 = arith.constant 0 : index
    %c0_76 = arith.constant 0 : index
    %c0_77 = arith.constant 0 : index
    %218 = vector.load %arg16[%c0_75, %c0_76, %c0_77] : memref<4x2x32xf32, #tpu.memory_space<vmem>>, vector<1x2x32xf32>
    %219 = vector.shape_cast %218 : vector<1x2x32xf32> to vector<2x32xf32>
    %220 = vector.shape_cast %217 : vector<2x32xf32> to vector<1x2x32xf32>
    tpu.vector_store %arg16[%c0_75, %c0_76, %c0_77], %220 {strides = array<i32>} : memref<4x2x32xf32, #tpu.memory_space<vmem>>, vector<1x2x32xf32>,
    %221 = vector.extract_strided_slice %201 {offsets = [0, 32], sizes = [2, 32], strides = [1, 1]} : vector<2x64xf32> to vector<2x32xf32>
    %c1_78 = arith.constant 1 : index
    %c0_79 = arith.constant 0 : index
    %c0_80 = arith.constant 0 : index
    %222 = vector.load %arg16[%c1_78, %c0_79, %c0_80] : memref<4x2x32xf32, #tpu.memory_space<vmem>>, vector<1x2x32xf32>
    %223 = vector.shape_cast %222 : vector<1x2x32xf32> to vector<2x32xf32>
    %224 = vector.shape_cast %221 : vector<2x32xf32> to vector<1x2x32xf32>
    tpu.vector_store %arg16[%c1_78, %c0_79, %c0_80], %224 {strides = array<i32>} : memref<4x2x32xf32, #tpu.memory_space<vmem>>, vector<1x2x32xf32>,
    %c2_81 = arith.constant 2 : index
    %c0_82 = arith.constant 0 : index
    %c0_83 = arith.constant 0 : index
    %225 = vector.load %arg12[%c2_81, %c0_82, %c0_83] : memref<4x2x32xf32, #tpu.memory_space<vmem>>, vector<1x2x32xf32>
    %226 = vector.shape_cast %225 : vector<1x2x32xf32> to vector<2x32xf32>
    %c3 = arith.constant 3 : index
    %c0_84 = arith.constant 0 : index
    %c0_85 = arith.constant 0 : index
    %227 = vector.load %arg12[%c3, %c0_84, %c0_85] : memref<4x2x32xf32, #tpu.memory_space<vmem>>, vector<1x2x32xf32>
    %228 = vector.shape_cast %227 : vector<1x2x32xf32> to vector<2x32xf32>
    %229 = tpu.concatenate %226, %228 in 1 : vector<2x32xf32>, vector<2x32xf32> -> vector<2x64xf32>
    %c2_86 = arith.constant 2 : index
    %c0_87 = arith.constant 0 : index
    %c0_88 = arith.constant 0 : index
    %230 = vector.load %arg13[%c2_86, %c0_87, %c0_88] : memref<4x2x32xf32, #tpu.memory_space<vmem>>, vector<1x2x32xf32>
    %231 = vector.shape_cast %230 : vector<1x2x32xf32> to vector<2x32xf32>
    %c3_89 = arith.constant 3 : index
    %c0_90 = arith.constant 0 : index
    %c0_91 = arith.constant 0 : index
    %232 = vector.load %arg13[%c3_89, %c0_90, %c0_91] : memref<4x2x32xf32, #tpu.memory_space<vmem>>, vector<1x2x32xf32>
    %233 = vector.shape_cast %232 : vector<1x2x32xf32> to vector<2x32xf32>
    %234 = tpu.concatenate %231, %233 in 1 : vector<2x32xf32>, vector<2x32xf32> -> vector<2x64xf32>
    %c0_92 = arith.constant 0 : index
    %c0_93 = arith.constant 0 : index
    %235 = vector.load %arg17[%c0_92, %c0_93] : memref<16x64xf32, #tpu.memory_space<vmem>>, vector<16x64xf32>
    %cst_94 = arith.constant dense<0.000000e+00> : vector<16x64xf32>
    %236 = tpu.matmul %12, %235, %cst_94 {dimension_numbers = #tpu.dot_dimension_numbers<[1], [0], [0], [1], [0, 0, 1, 1], [], []>} : vector<16x16xf32>, vector<16x64xf32>, vector<16x64xf32> -> vector<16x64xf32>
    %c0_95 = arith.constant 0 : index
    %c0_96 = arith.constant 0 : index
    %237 = vector.load %arg8[%c0_95, %c0_96] : memref<64x256xf32, #tpu.memory_space<vmem>>, vector<64x256xf32>
    %cst_97 = arith.constant dense<0.000000e+00> : vector<16x256xf32>
    %238 = tpu.matmul %235, %237, %cst_97 {dimension_numbers = #tpu.dot_dimension_numbers<[1], [0], [0], [1], [0, 0, 1, 1], [], []>} : vector<16x64xf32>, vector<64x256xf32>, vector<16x256xf32> -> vector<16x256xf32>
    %c0_98 = arith.constant 0 : index
    %c0_99 = arith.constant 0 : index
    %239 = vector.load %arg9[%c0_98, %c0_99] : memref<64x256xf32, #tpu.memory_space<vmem>>, vector<64x256xf32>
    %cst_100 = arith.constant dense<0.000000e+00> : vector<16x256xf32>
    %240 = tpu.matmul %236, %239, %cst_100 {dimension_numbers = #tpu.dot_dimension_numbers<[1], [0], [0], [1], [0, 0, 1, 1], [], []>} : vector<16x64xf32>, vector<64x256xf32>, vector<16x256xf32> -> vector<16x256xf32>
    %241 = arith.addf %238, %240 : vector<16x256xf32>
    %c0_101 = arith.constant 0 : index
    %c0_102 = arith.constant 0 : index
    %242 = vector.load %arg11[%c0_101, %c0_102] : memref<1x256xf32, #tpu.memory_space<vmem>>, vector<1x256xf32>
    %243 = vector.broadcast %242 : vector<1x256xf32> to vector<16x256xf32>
    %244 = arith.addf %241, %243 : vector<16x256xf32>
    %c0_103 = arith.constant 0 : index
    %c0_104 = arith.constant 0 : index
    %245 = vector.load %arg10[%c0_103, %c0_104] : memref<64x256xf32, #tpu.memory_space<vmem>>, vector<64x256xf32>
    %246 = vector.extract_strided_slice %244 {offsets = [0, 0], sizes = [2, 256], strides = [1, 1]} : vector<16x256xf32> to vector<2x256xf32>
    %cst_105 = arith.constant dense<0.000000e+00> : vector<2x256xf32>
    %247 = tpu.matmul %229, %245, %cst_105 {dimension_numbers = #tpu.dot_dimension_numbers<[1], [0], [0], [1], [0, 0, 1, 1], [], []>} : vector<2x64xf32>, vector<64x256xf32>, vector<2x256xf32> -> vector<2x256xf32>
    %248 = arith.addf %246, %247 : vector<2x256xf32>
    %249 = arith.negf %248 : vector<2x256xf32>
    %250 = math.exp %249 : vector<2x256xf32>
    %cst_106 = arith.constant 1.000000e+00 : f32
    %251 = vector.broadcast %cst_106 : f32 to vector<2x256xf32>
    %252 = arith.addf %251, %250 : vector<2x256xf32>
    %253 = arith.divf %251, %252 : vector<2x256xf32>
    %254 = vector.extract_strided_slice %248 {offsets = [0, 128], sizes = [2, 64], strides = [1, 1]} : vector<2x256xf32> to vector<2x64xf32>
    %255 = math.tanh %254 : vector<2x64xf32>
    %256 = vector.extract_strided_slice %253 {offsets = [0, 64], sizes = [2, 64], strides = [1, 1]} : vector<2x256xf32> to vector<2x64xf32>
    %257 = arith.mulf %256, %234 : vector<2x64xf32>
    %258 = vector.extract_strided_slice %253 {offsets = [0, 0], sizes = [2, 64], strides = [1, 1]} : vector<2x256xf32> to vector<2x64xf32>
    %259 = arith.mulf %258, %255 : vector<2x64xf32>
    %260 = arith.addf %257, %259 : vector<2x64xf32>
    %261 = vector.extract_strided_slice %253 {offsets = [0, 192], sizes = [2, 64], strides = [1, 1]} : vector<2x256xf32> to vector<2x64xf32>
    %262 = math.tanh %260 : vector<2x64xf32>
    %263 = arith.mulf %261, %262 : vector<2x64xf32>
    %264 = vector.extract_strided_slice %263 {offsets = [0, 0], sizes = [2, 32], strides = [1, 1]} : vector<2x64xf32> to vector<2x32xf32>
    %c0_107 = arith.constant 0 : index
    %c0_108 = arith.constant 0 : index
    %265 = vector.load %arg14[%c0_107, %c0_108] : memref<2x512xf32, #tpu.memory_space<vmem>>, vector<2x32xf32>
    tpu.vector_store %arg14[%c0_107, %c0_108], %264 {strides = array<i32>} : memref<2x512xf32, #tpu.memory_space<vmem>>, vector<2x32xf32>,
    %266 = vector.extract_strided_slice %263 {offsets = [0, 32], sizes = [2, 32], strides = [1, 1]} : vector<2x64xf32> to vector<2x32xf32>
    %c0_109 = arith.constant 0 : index
    %c480 = arith.constant 480 : index
    %267 = vector.load %arg14[%c0_109, %c480] : memref<2x512xf32, #tpu.memory_space<vmem>>, vector<2x32xf32>
    tpu.vector_store %arg14[%c0_109, %c480], %266 {strides = array<i32>} : memref<2x512xf32, #tpu.memory_space<vmem>>, vector<2x32xf32>,
    %268 = vector.extract_strided_slice %244 {offsets = [2, 0], sizes = [2, 256], strides = [1, 1]} : vector<16x256xf32> to vector<2x256xf32>
    %cst_110 = arith.constant dense<0.000000e+00> : vector<2x256xf32>
    %269 = tpu.matmul %263, %245, %cst_110 {dimension_numbers = #tpu.dot_dimension_numbers<[1], [0], [0], [1], [0, 0, 1, 1], [], []>} : vector<2x64xf32>, vector<64x256xf32>, vector<2x256xf32> -> vector<2x256xf32>
    %270 = arith.addf %268, %269 : vector<2x256xf32>
    %271 = arith.negf %270 : vector<2x256xf32>
    %272 = math.exp %271 : vector<2x256xf32>
    %cst_111 = arith.constant 1.000000e+00 : f32
    %273 = vector.broadcast %cst_111 : f32 to vector<2x256xf32>
    %274 = arith.addf %273, %272 : vector<2x256xf32>
    %275 = arith.divf %273, %274 : vector<2x256xf32>
    %276 = vector.extract_strided_slice %270 {offsets = [0, 128], sizes = [2, 64], strides = [1, 1]} : vector<2x256xf32> to vector<2x64xf32>
    %277 = math.tanh %276 : vector<2x64xf32>
    %278 = vector.extract_strided_slice %275 {offsets = [0, 64], sizes = [2, 64], strides = [1, 1]} : vector<2x256xf32> to vector<2x64xf32>
    %279 = arith.mulf %278, %260 : vector<2x64xf32>
    %280 = vector.extract_strided_slice %275 {offsets = [0, 0], sizes = [2, 64], strides = [1, 1]} : vector<2x256xf32> to vector<2x64xf32>
    %281 = arith.mulf %280, %277 : vector<2x64xf32>
    %282 = arith.addf %279, %281 : vector<2x64xf32>
    %283 = vector.extract_strided_slice %275 {offsets = [0, 192], sizes = [2, 64], strides = [1, 1]} : vector<2x256xf32> to vector<2x64xf32>
    %284 = math.tanh %282 : vector<2x64xf32>
    %285 = arith.mulf %283, %284 : vector<2x64xf32>
    %286 = vector.extract_strided_slice %285 {offsets = [0, 0], sizes = [2, 32], strides = [1, 1]} : vector<2x64xf32> to vector<2x32xf32>
    %c0_112 = arith.constant 0 : index
    %c64 = arith.constant 64 : index
    %287 = vector.load %arg14[%c0_112, %c64] : memref<2x512xf32, #tpu.memory_space<vmem>>, vector<2x32xf32>
    tpu.vector_store %arg14[%c0_112, %c64], %286 {strides = array<i32>} : memref<2x512xf32, #tpu.memory_space<vmem>>, vector<2x32xf32>,
    %288 = vector.extract_strided_slice %285 {offsets = [0, 32], sizes = [2, 32], strides = [1, 1]} : vector<2x64xf32> to vector<2x32xf32>
    %c0_113 = arith.constant 0 : index
    %c416 = arith.constant 416 : index
    %289 = vector.load %arg14[%c0_113, %c416] : memref<2x512xf32, #tpu.memory_space<vmem>>, vector<2x32xf32>
    tpu.vector_store %arg14[%c0_113, %c416], %288 {strides = array<i32>} : memref<2x512xf32, #tpu.memory_space<vmem>>, vector<2x32xf32>,
    %290 = vector.extract_strided_slice %244 {offsets = [4, 0], sizes = [2, 256], strides = [1, 1]} : vector<16x256xf32> to vector<2x256xf32>
    %cst_114 = arith.constant dense<0.000000e+00> : vector<2x256xf32>
    %291 = tpu.matmul %285, %245, %cst_114 {dimension_numbers = #tpu.dot_dimension_numbers<[1], [0], [0], [1], [0, 0, 1, 1], [], []>} : vector<2x64xf32>, vector<64x256xf32>, vector<2x256xf32> -> vector<2x256xf32>
    %292 = arith.addf %290, %291 : vector<2x256xf32>
    %293 = arith.negf %292 : vector<2x256xf32>
    %294 = math.exp %293 : vector<2x256xf32>
    %cst_115 = arith.constant 1.000000e+00 : f32
    %295 = vector.broadcast %cst_115 : f32 to vector<2x256xf32>
    %296 = arith.addf %295, %294 : vector<2x256xf32>
    %297 = arith.divf %295, %296 : vector<2x256xf32>
    %298 = vector.extract_strided_slice %292 {offsets = [0, 128], sizes = [2, 64], strides = [1, 1]} : vector<2x256xf32> to vector<2x64xf32>
    %299 = math.tanh %298 : vector<2x64xf32>
    %300 = vector.extract_strided_slice %297 {offsets = [0, 64], sizes = [2, 64], strides = [1, 1]} : vector<2x256xf32> to vector<2x64xf32>
    %301 = arith.mulf %300, %282 : vector<2x64xf32>
    %302 = vector.extract_strided_slice %297 {offsets = [0, 0], sizes = [2, 64], strides = [1, 1]} : vector<2x256xf32> to vector<2x64xf32>
    %303 = arith.mulf %302, %299 : vector<2x64xf32>
    %304 = arith.addf %301, %303 : vector<2x64xf32>
    %305 = vector.extract_strided_slice %297 {offsets = [0, 192], sizes = [2, 64], strides = [1, 1]} : vector<2x256xf32> to vector<2x64xf32>
    %306 = math.tanh %304 : vector<2x64xf32>
    %307 = arith.mulf %305, %306 : vector<2x64xf32>
    %308 = vector.extract_strided_slice %307 {offsets = [0, 0], sizes = [2, 32], strides = [1, 1]} : vector<2x64xf32> to vector<2x32xf32>
    %c0_116 = arith.constant 0 : index
    %c128 = arith.constant 128 : index
    %309 = vector.load %arg14[%c0_116, %c128] : memref<2x512xf32, #tpu.memory_space<vmem>>, vector<2x32xf32>
    tpu.vector_store %arg14[%c0_116, %c128], %308 {strides = array<i32>} : memref<2x512xf32, #tpu.memory_space<vmem>>, vector<2x32xf32>,
    %310 = vector.extract_strided_slice %307 {offsets = [0, 32], sizes = [2, 32], strides = [1, 1]} : vector<2x64xf32> to vector<2x32xf32>
    %c0_117 = arith.constant 0 : index
    %c352 = arith.constant 352 : index
    %311 = vector.load %arg14[%c0_117, %c352] : memref<2x512xf32, #tpu.memory_space<vmem>>, vector<2x32xf32>
    tpu.vector_store %arg14[%c0_117, %c352], %310 {strides = array<i32>} : memref<2x512xf32, #tpu.memory_space<vmem>>, vector<2x32xf32>,
    %312 = vector.extract_strided_slice %244 {offsets = [6, 0], sizes = [2, 256], strides = [1, 1]} : vector<16x256xf32> to vector<2x256xf32>
    %cst_118 = arith.constant dense<0.000000e+00> : vector<2x256xf32>
    %313 = tpu.matmul %307, %245, %cst_118 {dimension_numbers = #tpu.dot_dimension_numbers<[1], [0], [0], [1], [0, 0, 1, 1], [], []>} : vector<2x64xf32>, vector<64x256xf32>, vector<2x256xf32> -> vector<2x256xf32>
    %314 = arith.addf %312, %313 : vector<2x256xf32>
    %315 = arith.negf %314 : vector<2x256xf32>
    %316 = math.exp %315 : vector<2x256xf32>
    %cst_119 = arith.constant 1.000000e+00 : f32
    %317 = vector.broadcast %cst_119 : f32 to vector<2x256xf32>
    %318 = arith.addf %317, %316 : vector<2x256xf32>
    %319 = arith.divf %317, %318 : vector<2x256xf32>
    %320 = vector.extract_strided_slice %314 {offsets = [0, 128], sizes = [2, 64], strides = [1, 1]} : vector<2x256xf32> to vector<2x64xf32>
    %321 = math.tanh %320 : vector<2x64xf32>
    %322 = vector.extract_strided_slice %319 {offsets = [0, 64], sizes = [2, 64], strides = [1, 1]} : vector<2x256xf32> to vector<2x64xf32>
    %323 = arith.mulf %322, %304 : vector<2x64xf32>
    %324 = vector.extract_strided_slice %319 {offsets = [0, 0], sizes = [2, 64], strides = [1, 1]} : vector<2x256xf32> to vector<2x64xf32>
    %325 = arith.mulf %324, %321 : vector<2x64xf32>
    %326 = arith.addf %323, %325 : vector<2x64xf32>
    %327 = vector.extract_strided_slice %319 {offsets = [0, 192], sizes = [2, 64], strides = [1, 1]} : vector<2x256xf32> to vector<2x64xf32>
    %328 = math.tanh %326 : vector<2x64xf32>
    %329 = arith.mulf %327, %328 : vector<2x64xf32>
    %330 = vector.extract_strided_slice %329 {offsets = [0, 0], sizes = [2, 32], strides = [1, 1]} : vector<2x64xf32> to vector<2x32xf32>
    %c0_120 = arith.constant 0 : index
    %c192 = arith.constant 192 : index
    %331 = vector.load %arg14[%c0_120, %c192] : memref<2x512xf32, #tpu.memory_space<vmem>>, vector<2x32xf32>
    tpu.vector_store %arg14[%c0_120, %c192], %330 {strides = array<i32>} : memref<2x512xf32, #tpu.memory_space<vmem>>, vector<2x32xf32>,
    %332 = vector.extract_strided_slice %329 {offsets = [0, 32], sizes = [2, 32], strides = [1, 1]} : vector<2x64xf32> to vector<2x32xf32>
    %c0_121 = arith.constant 0 : index
    %c288 = arith.constant 288 : index
    %333 = vector.load %arg14[%c0_121, %c288] : memref<2x512xf32, #tpu.memory_space<vmem>>, vector<2x32xf32>
    tpu.vector_store %arg14[%c0_121, %c288], %332 {strides = array<i32>} : memref<2x512xf32, #tpu.memory_space<vmem>>, vector<2x32xf32>,
    %334 = vector.extract_strided_slice %244 {offsets = [8, 0], sizes = [2, 256], strides = [1, 1]} : vector<16x256xf32> to vector<2x256xf32>
    %cst_122 = arith.constant dense<0.000000e+00> : vector<2x256xf32>
    %335 = tpu.matmul %329, %245, %cst_122 {dimension_numbers = #tpu.dot_dimension_numbers<[1], [0], [0], [1], [0, 0, 1, 1], [], []>} : vector<2x64xf32>, vector<64x256xf32>, vector<2x256xf32> -> vector<2x256xf32>
    %336 = arith.addf %334, %335 : vector<2x256xf32>
    %337 = arith.negf %336 : vector<2x256xf32>
    %338 = math.exp %337 : vector<2x256xf32>
    %cst_123 = arith.constant 1.000000e+00 : f32
    %339 = vector.broadcast %cst_123 : f32 to vector<2x256xf32>
    %340 = arith.addf %339, %338 : vector<2x256xf32>
    %341 = arith.divf %339, %340 : vector<2x256xf32>
    %342 = vector.extract_strided_slice %336 {offsets = [0, 128], sizes = [2, 64], strides = [1, 1]} : vector<2x256xf32> to vector<2x64xf32>
    %343 = math.tanh %342 : vector<2x64xf32>
    %344 = vector.extract_strided_slice %341 {offsets = [0, 64], sizes = [2, 64], strides = [1, 1]} : vector<2x256xf32> to vector<2x64xf32>
    %345 = arith.mulf %344, %326 : vector<2x64xf32>
    %346 = vector.extract_strided_slice %341 {offsets = [0, 0], sizes = [2, 64], strides = [1, 1]} : vector<2x256xf32> to vector<2x64xf32>
    %347 = arith.mulf %346, %343 : vector<2x64xf32>
    %348 = arith.addf %345, %347 : vector<2x64xf32>
    %349 = vector.extract_strided_slice %341 {offsets = [0, 192], sizes = [2, 64], strides = [1, 1]} : vector<2x256xf32> to vector<2x64xf32>
    %350 = math.tanh %348 : vector<2x64xf32>
    %351 = arith.mulf %349, %350 : vector<2x64xf32>
    %352 = vector.extract_strided_slice %351 {offsets = [0, 0], sizes = [2, 32], strides = [1, 1]} : vector<2x64xf32> to vector<2x32xf32>
    %c0_124 = arith.constant 0 : index
    %c256 = arith.constant 256 : index
    %353 = vector.load %arg14[%c0_124, %c256] : memref<2x512xf32, #tpu.memory_space<vmem>>, vector<2x32xf32>
    tpu.vector_store %arg14[%c0_124, %c256], %352 {strides = array<i32>} : memref<2x512xf32, #tpu.memory_space<vmem>>, vector<2x32xf32>,
    %354 = vector.extract_strided_slice %351 {offsets = [0, 32], sizes = [2, 32], strides = [1, 1]} : vector<2x64xf32> to vector<2x32xf32>
    %c0_125 = arith.constant 0 : index
    %c224 = arith.constant 224 : index
    %355 = vector.load %arg14[%c0_125, %c224] : memref<2x512xf32, #tpu.memory_space<vmem>>, vector<2x32xf32>
    tpu.vector_store %arg14[%c0_125, %c224], %354 {strides = array<i32>} : memref<2x512xf32, #tpu.memory_space<vmem>>, vector<2x32xf32>,
    %356 = vector.extract_strided_slice %244 {offsets = [10, 0], sizes = [2, 256], strides = [1, 1]} : vector<16x256xf32> to vector<2x256xf32>
    %cst_126 = arith.constant dense<0.000000e+00> : vector<2x256xf32>
    %357 = tpu.matmul %351, %245, %cst_126 {dimension_numbers = #tpu.dot_dimension_numbers<[1], [0], [0], [1], [0, 0, 1, 1], [], []>} : vector<2x64xf32>, vector<64x256xf32>, vector<2x256xf32> -> vector<2x256xf32>
    %358 = arith.addf %356, %357 : vector<2x256xf32>
    %359 = arith.negf %358 : vector<2x256xf32>
    %360 = math.exp %359 : vector<2x256xf32>
    %cst_127 = arith.constant 1.000000e+00 : f32
    %361 = vector.broadcast %cst_127 : f32 to vector<2x256xf32>
    %362 = arith.addf %361, %360 : vector<2x256xf32>
    %363 = arith.divf %361, %362 : vector<2x256xf32>
    %364 = vector.extract_strided_slice %358 {offsets = [0, 128], sizes = [2, 64], strides = [1, 1]} : vector<2x256xf32> to vector<2x64xf32>
    %365 = math.tanh %364 : vector<2x64xf32>
    %366 = vector.extract_strided_slice %363 {offsets = [0, 64], sizes = [2, 64], strides = [1, 1]} : vector<2x256xf32> to vector<2x64xf32>
    %367 = arith.mulf %366, %348 : vector<2x64xf32>
    %368 = vector.extract_strided_slice %363 {offsets = [0, 0], sizes = [2, 64], strides = [1, 1]} : vector<2x256xf32> to vector<2x64xf32>
    %369 = arith.mulf %368, %365 : vector<2x64xf32>
    %370 = arith.addf %367, %369 : vector<2x64xf32>
    %371 = vector.extract_strided_slice %363 {offsets = [0, 192], sizes = [2, 64], strides = [1, 1]} : vector<2x256xf32> to vector<2x64xf32>
    %372 = math.tanh %370 : vector<2x64xf32>
    %373 = arith.mulf %371, %372 : vector<2x64xf32>
    %374 = vector.extract_strided_slice %373 {offsets = [0, 0], sizes = [2, 32], strides = [1, 1]} : vector<2x64xf32> to vector<2x32xf32>
    %c0_128 = arith.constant 0 : index
    %c320 = arith.constant 320 : index
    %375 = vector.load %arg14[%c0_128, %c320] : memref<2x512xf32, #tpu.memory_space<vmem>>, vector<2x32xf32>
    tpu.vector_store %arg14[%c0_128, %c320], %374 {strides = array<i32>} : memref<2x512xf32, #tpu.memory_space<vmem>>, vector<2x32xf32>,
    %376 = vector.extract_strided_slice %373 {offsets = [0, 32], sizes = [2, 32], strides = [1, 1]} : vector<2x64xf32> to vector<2x32xf32>
    %c0_129 = arith.constant 0 : index
    %c160 = arith.constant 160 : index
    %377 = vector.load %arg14[%c0_129, %c160] : memref<2x512xf32, #tpu.memory_space<vmem>>, vector<2x32xf32>
    tpu.vector_store %arg14[%c0_129, %c160], %376 {strides = array<i32>} : memref<2x512xf32, #tpu.memory_space<vmem>>, vector<2x32xf32>,
    %378 = vector.extract_strided_slice %244 {offsets = [12, 0], sizes = [2, 256], strides = [1, 1]} : vector<16x256xf32> to vector<2x256xf32>
    %cst_130 = arith.constant dense<0.000000e+00> : vector<2x256xf32>
    %379 = tpu.matmul %373, %245, %cst_130 {dimension_numbers = #tpu.dot_dimension_numbers<[1], [0], [0], [1], [0, 0, 1, 1], [], []>} : vector<2x64xf32>, vector<64x256xf32>, vector<2x256xf32> -> vector<2x256xf32>
    %380 = arith.addf %378, %379 : vector<2x256xf32>
    %381 = arith.negf %380 : vector<2x256xf32>
    %382 = math.exp %381 : vector<2x256xf32>
    %cst_131 = arith.constant 1.000000e+00 : f32
    %383 = vector.broadcast %cst_131 : f32 to vector<2x256xf32>
    %384 = arith.addf %383, %382 : vector<2x256xf32>
    %385 = arith.divf %383, %384 : vector<2x256xf32>
    %386 = vector.extract_strided_slice %380 {offsets = [0, 128], sizes = [2, 64], strides = [1, 1]} : vector<2x256xf32> to vector<2x64xf32>
    %387 = math.tanh %386 : vector<2x64xf32>
    %388 = vector.extract_strided_slice %385 {offsets = [0, 64], sizes = [2, 64], strides = [1, 1]} : vector<2x256xf32> to vector<2x64xf32>
    %389 = arith.mulf %388, %370 : vector<2x64xf32>
    %390 = vector.extract_strided_slice %385 {offsets = [0, 0], sizes = [2, 64], strides = [1, 1]} : vector<2x256xf32> to vector<2x64xf32>
    %391 = arith.mulf %390, %387 : vector<2x64xf32>
    %392 = arith.addf %389, %391 : vector<2x64xf32>
    %393 = vector.extract_strided_slice %385 {offsets = [0, 192], sizes = [2, 64], strides = [1, 1]} : vector<2x256xf32> to vector<2x64xf32>
    %394 = math.tanh %392 : vector<2x64xf32>
    %395 = arith.mulf %393, %394 : vector<2x64xf32>
    %396 = vector.extract_strided_slice %395 {offsets = [0, 0], sizes = [2, 32], strides = [1, 1]} : vector<2x64xf32> to vector<2x32xf32>
    %c0_132 = arith.constant 0 : index
    %c384 = arith.constant 384 : index
    %397 = vector.load %arg14[%c0_132, %c384] : memref<2x512xf32, #tpu.memory_space<vmem>>, vector<2x32xf32>
    tpu.vector_store %arg14[%c0_132, %c384], %396 {strides = array<i32>} : memref<2x512xf32, #tpu.memory_space<vmem>>, vector<2x32xf32>,
    %398 = vector.extract_strided_slice %395 {offsets = [0, 32], sizes = [2, 32], strides = [1, 1]} : vector<2x64xf32> to vector<2x32xf32>
    %c0_133 = arith.constant 0 : index
    %c96 = arith.constant 96 : index
    %399 = vector.load %arg14[%c0_133, %c96] : memref<2x512xf32, #tpu.memory_space<vmem>>, vector<2x32xf32>
    tpu.vector_store %arg14[%c0_133, %c96], %398 {strides = array<i32>} : memref<2x512xf32, #tpu.memory_space<vmem>>, vector<2x32xf32>,
    %400 = vector.extract_strided_slice %244 {offsets = [14, 0], sizes = [2, 256], strides = [1, 1]} : vector<16x256xf32> to vector<2x256xf32>
    %cst_134 = arith.constant dense<0.000000e+00> : vector<2x256xf32>
    %401 = tpu.matmul %395, %245, %cst_134 {dimension_numbers = #tpu.dot_dimension_numbers<[1], [0], [0], [1], [0, 0, 1, 1], [], []>} : vector<2x64xf32>, vector<64x256xf32>, vector<2x256xf32> -> vector<2x256xf32>
    %402 = arith.addf %400, %401 : vector<2x256xf32>
    %403 = arith.negf %402 : vector<2x256xf32>
    %404 = math.exp %403 : vector<2x256xf32>
    %cst_135 = arith.constant 1.000000e+00 : f32
    %405 = vector.broadcast %cst_135 : f32 to vector<2x256xf32>
    %406 = arith.addf %405, %404 : vector<2x256xf32>
    %407 = arith.divf %405, %406 : vector<2x256xf32>
    %408 = vector.extract_strided_slice %402 {offsets = [0, 128], sizes = [2, 64], strides = [1, 1]} : vector<2x256xf32> to vector<2x64xf32>
    %409 = math.tanh %408 : vector<2x64xf32>
    %410 = vector.extract_strided_slice %407 {offsets = [0, 64], sizes = [2, 64], strides = [1, 1]} : vector<2x256xf32> to vector<2x64xf32>
    %411 = arith.mulf %410, %392 : vector<2x64xf32>
    %412 = vector.extract_strided_slice %407 {offsets = [0, 0], sizes = [2, 64], strides = [1, 1]} : vector<2x256xf32> to vector<2x64xf32>
    %413 = arith.mulf %412, %409 : vector<2x64xf32>
    %414 = arith.addf %411, %413 : vector<2x64xf32>
    %415 = vector.extract_strided_slice %407 {offsets = [0, 192], sizes = [2, 64], strides = [1, 1]} : vector<2x256xf32> to vector<2x64xf32>
    %416 = math.tanh %414 : vector<2x64xf32>
    %417 = arith.mulf %415, %416 : vector<2x64xf32>
    %418 = vector.extract_strided_slice %417 {offsets = [0, 0], sizes = [2, 32], strides = [1, 1]} : vector<2x64xf32> to vector<2x32xf32>
    %c0_136 = arith.constant 0 : index
    %c448 = arith.constant 448 : index
    %419 = vector.load %arg14[%c0_136, %c448] : memref<2x512xf32, #tpu.memory_space<vmem>>, vector<2x32xf32>
    tpu.vector_store %arg14[%c0_136, %c448], %418 {strides = array<i32>} : memref<2x512xf32, #tpu.memory_space<vmem>>, vector<2x32xf32>,
    %420 = vector.extract_strided_slice %417 {offsets = [0, 32], sizes = [2, 32], strides = [1, 1]} : vector<2x64xf32> to vector<2x32xf32>
    %c0_137 = arith.constant 0 : index
    %c32_138 = arith.constant 32 : index
    %421 = vector.load %arg14[%c0_137, %c32_138] : memref<2x512xf32, #tpu.memory_space<vmem>>, vector<2x32xf32>
    tpu.vector_store %arg14[%c0_137, %c32_138], %420 {strides = array<i32>} : memref<2x512xf32, #tpu.memory_space<vmem>>, vector<2x32xf32>,
    %422 = vector.extract_strided_slice %417 {offsets = [0, 0], sizes = [2, 32], strides = [1, 1]} : vector<2x64xf32> to vector<2x32xf32>
    %c2_139 = arith.constant 2 : index
    %c0_140 = arith.constant 0 : index
    %c0_141 = arith.constant 0 : index
    %423 = vector.load %arg15[%c2_139, %c0_140, %c0_141] : memref<4x2x32xf32, #tpu.memory_space<vmem>>, vector<1x2x32xf32>
    %424 = vector.shape_cast %423 : vector<1x2x32xf32> to vector<2x32xf32>
    %425 = vector.shape_cast %422 : vector<2x32xf32> to vector<1x2x32xf32>
    tpu.vector_store %arg15[%c2_139, %c0_140, %c0_141], %425 {strides = array<i32>} : memref<4x2x32xf32, #tpu.memory_space<vmem>>, vector<1x2x32xf32>,
    %426 = vector.extract_strided_slice %417 {offsets = [0, 32], sizes = [2, 32], strides = [1, 1]} : vector<2x64xf32> to vector<2x32xf32>
    %c3_142 = arith.constant 3 : index
    %c0_143 = arith.constant 0 : index
    %c0_144 = arith.constant 0 : index
    %427 = vector.load %arg15[%c3_142, %c0_143, %c0_144] : memref<4x2x32xf32, #tpu.memory_space<vmem>>, vector<1x2x32xf32>
    %428 = vector.shape_cast %427 : vector<1x2x32xf32> to vector<2x32xf32>
    %429 = vector.shape_cast %426 : vector<2x32xf32> to vector<1x2x32xf32>
    tpu.vector_store %arg15[%c3_142, %c0_143, %c0_144], %429 {strides = array<i32>} : memref<4x2x32xf32, #tpu.memory_space<vmem>>, vector<1x2x32xf32>,
    %430 = vector.extract_strided_slice %414 {offsets = [0, 0], sizes = [2, 32], strides = [1, 1]} : vector<2x64xf32> to vector<2x32xf32>
    %c2_145 = arith.constant 2 : index
    %c0_146 = arith.constant 0 : index
    %c0_147 = arith.constant 0 : index
    %431 = vector.load %arg16[%c2_145, %c0_146, %c0_147] : memref<4x2x32xf32, #tpu.memory_space<vmem>>, vector<1x2x32xf32>
    %432 = vector.shape_cast %431 : vector<1x2x32xf32> to vector<2x32xf32>
    %433 = vector.shape_cast %430 : vector<2x32xf32> to vector<1x2x32xf32>
    tpu.vector_store %arg16[%c2_145, %c0_146, %c0_147], %433 {strides = array<i32>} : memref<4x2x32xf32, #tpu.memory_space<vmem>>, vector<1x2x32xf32>,
    %434 = vector.extract_strided_slice %414 {offsets = [0, 32], sizes = [2, 32], strides = [1, 1]} : vector<2x64xf32> to vector<2x32xf32>
    %c3_148 = arith.constant 3 : index
    %c0_149 = arith.constant 0 : index
    %c0_150 = arith.constant 0 : index
    %435 = vector.load %arg16[%c3_148, %c0_149, %c0_150] : memref<4x2x32xf32, #tpu.memory_space<vmem>>, vector<1x2x32xf32>
    %436 = vector.shape_cast %435 : vector<1x2x32xf32> to vector<2x32xf32>
    %437 = vector.shape_cast %434 : vector<2x32xf32> to vector<1x2x32xf32>
    tpu.vector_store %arg16[%c3_148, %c0_149, %c0_150], %437 {strides = array<i32>} : memref<4x2x32xf32, #tpu.memory_space<vmem>>, vector<1x2x32xf32>,
    return
  }
}

</mosaic_0001>

<llo_original>
// kernel: encoder_forward.1
$region0: #{encoder_forward.1}
  #allocation0 [shape = 'u32[]', space=smem, size = 0x4, offset = 0x4, fixed_abs, tag = 'smem constant byte address 0x4 - core index']
  #allocation1 [shape = 'u32[144,128]{1,0:T(1,128)}', space=vmem, size = 0x12000, scoped, tag = 'internal scratch']
  #allocation2 [shape = 'f32[16,64]{1,0:T(8,128)}', space=vmem, size = 0x2000, scoped, tag = 'scratch operand']
  %s0 = inlined_call_operand.vmem [shape: s32[16,1], index: 0, kind: input, shape index: {}]
  %s1 = inlined_call_operand.vmem [shape: s32[16,1], index: 1, kind: input, shape index: {}]
  %s2 = inlined_call_operand.vmem [shape: f32[16,16], index: 2, kind: input, shape index: {}]
  %s3 = inlined_call_operand.vmem [shape: f32[256,32], index: 3, kind: input, shape index: {}]
  %s4 = inlined_call_operand.hbm [shape: f32[32,256], index: 4, kind: input, shape index: {}]
  %s5 = inlined_call_operand.hbm [shape: f32[32,256], index: 5, kind: input, shape index: {}]
  %s6 = inlined_call_operand.vmem [shape: f32[64,256], index: 6, kind: input, shape index: {}]
  %s7 = inlined_call_operand.hbm [shape: f32[1,256], index: 7, kind: input, shape index: {}]
  %s8 = inlined_call_operand.vmem [shape: f32[64,256], index: 8, kind: input, shape index: {}]
  %s9 = inlined_call_operand.vmem [shape: f32[64,256], index: 9, kind: input, shape index: {}]
  %s10 = inlined_call_operand.hbm [shape: f32[64,256], index: 10, kind: input, shape index: {}]
  %s11 = inlined_call_operand.hbm [shape: f32[1,256], index: 11, kind: input, shape index: {}]
  %s12 = inlined_call_operand.vmem [shape: f32[4,2,32], index: 12, kind: input, shape index: {}]
  %s13 = inlined_call_operand.vmem [shape: f32[4,2,32], index: 13, kind: input, shape index: {}]
  %s14 = inlined_call_operand.vmem [shape: f32[2,512], index: 14, kind: output, shape index: {0}]
  %s15 = inlined_call_operand.hbm [shape: f32[4,2,32], index: 15, kind: output, shape index: {1}]
  %s16 = inlined_call_operand.hbm [shape: f32[4,2,32], index: 16, kind: output, shape index: {2}]
  %17 = xla_tuple %s14, %s15, %s16
  %s18 = sld [smem:[#allocation0]]
  $region102: #{encoder_forward.1} parent=0
    _
  %s20 = ssub.s32 1, %s18
  %s21 = scalar_select 0, %s20, %s18
  $region1: #{encoder_forward.1} parent=0
    #allocation3 [shape = 'u8[32768]{0}', space=vmem, size = 0x8000, scoped, tag = 'input window, operand 4, single buffered']
    #allocation4 [shape = 's32[1]{0}', space=sflag, size = 0x4, scoped, tag = 'scoped memory for encoder_forward.1']
    #allocation5 [shape = 's32[1]{0}', space=sflag, size = 0x4, scoped, tag = 'scoped memory for encoder_forward.1']
    #allocation6 [shape = 'u8[32768]{0}', space=vmem, size = 0x8000, scoped, tag = 'input window, operand 5, single buffered']
    #allocation7 [shape = 's32[1]{0}', space=sflag, size = 0x4, scoped, tag = 'scoped memory for encoder_forward.1']
    #allocation8 [shape = 'u8[1024]{0}', space=vmem, size = 0x400, scoped, tag = 'input window, operand 7, single buffered']
    #allocation9 [shape = 'u8[65536]{0}', space=vmem, size = 0x10000, scoped, tag = 'input window, operand 10, single buffered']
    #allocation10 [shape = 's32[1]{0}', space=sflag, size = 0x4, scoped, tag = 'scoped memory for encoder_forward.1']
    #allocation11 [shape = 'u8[1024]{0}', space=vmem, size = 0x400, scoped, tag = 'input window, operand 11, single buffered']
    #allocation12 [shape = 'u8[4096]{0}', space=vmem, size = 0x1000, scoped, tag = 'output window, operand 1, single buffered']
    #allocation13 [shape = 'u8[4096]{0}', space=vmem, size = 0x1000, scoped, tag = 'output window, operand 2, single buffered']
    #allocation14 [shape = 's32[1]{0}', space=sflag, size = 0x4, scoped, tag = 'scoped memory for encoder_forward.1']
    %22 = vsyncpa [#allocation4], 0
    %23 = vsyncpa [#allocation7], 0
    %24 = vsyncpa [#allocation10], 0
    %25 = vsyncpa [#allocation5], 0
    %26 = vsyncpa [#allocation14], 0
    // Predicated region
    $region2: #{encoder_forward.1} parent=1 // pred_check
      _
    $region3: #{encoder_forward.1} parent=1 // pred_check_branch
      %28 = sbr.rel (0) target = $region5
    $region4: #{encoder_forward.1} parent=1 // pred_region
      _
    $region5: #{encoder_forward.1} parent=1 // pred_fallthru
      _
    // Predicated region
    $region6: #{encoder_forward.1} parent=1 // pred_check
      _
    $region7: #{encoder_forward.1} parent=1 // pred_check_branch
      %30 = sbr.rel (0) target = $region9
    $region8: #{encoder_forward.1} parent=1 // pred_region
      _
    $region9: #{encoder_forward.1} parent=1 // pred_fallthru
      _
    // Predicated region
    $region10: #{encoder_forward.1} parent=1 // pred_check
      _
    $region11: #{encoder_forward.1} parent=1 // pred_check_branch
      %32 = sbr.rel (0) target = $region13
    $region12: #{encoder_forward.1} parent=1 // pred_region
      _
    $region13: #{encoder_forward.1} parent=1 // pred_fallthru
      _
    // Predicated region
    $region14: #{encoder_forward.1} parent=1 // pred_check
      _
    $region15: #{encoder_forward.1} parent=1 // pred_check_branch
      %34 = sbr.rel (0) target = $region17
    $region16: #{encoder_forward.1} parent=1 // pred_region
      _
    $region17: #{encoder_forward.1} parent=1 // pred_fallthru
      _
    // Predicated region
    $region18: #{encoder_forward.1} parent=1 // pred_check
      _
    $region19: #{encoder_forward.1} parent=1 // pred_check_branch
      %36 = sbr.rel (0) target = $region21
    $region20: #{encoder_forward.1} parent=1 // pred_region
      %s38 = ssub.s32 1024, 1024
      %39 = vsyncadd [#allocation4], %s38
      %s40 = sshll.u32 [#allocation3], 4
      %s41 = int_to_ptr.vmem [resolvable:$true] %s40
      %46 = dma.hbm_to_vmem [thread:$0]  %s4, 1024, %s41, [#allocation4], 256, 256, 16
    $region21: #{encoder_forward.1} parent=1 // pred_fallthru
      _
    // Predicated region
    $region22: #{encoder_forward.1} parent=1 // pred_check
      _
    $region23: #{encoder_forward.1} parent=1 // pred_check_branch
      %48 = sbr.rel (0) target = $region25
    $region24: #{encoder_forward.1} parent=1 // pred_region
      %s50 = ssub.s32 1024, 1024
      %51 = vsyncadd [#allocation7], %s50
      %s52 = sshll.u32 [#allocation6], 4
      %s53 = int_to_ptr.vmem [resolvable:$true] %s52
      %58 = dma.hbm_to_vmem [thread:$0]  %s5, 1024, %s53, [#allocation7], 256, 256, 16
    $region25: #{encoder_forward.1} parent=1 // pred_fallthru
      _
    // Predicated region
    $region26: #{encoder_forward.1} parent=1 // pred_check
      _
    $region27: #{encoder_forward.1} parent=1 // pred_check_branch
      %60 = sbr.rel (0) target = $region29
    $region28: #{encoder_forward.1} parent=1 // pred_region
      _
    $region29: #{encoder_forward.1} parent=1 // pred_fallthru
      _
    // Predicated region
    $region30: #{encoder_forward.1} parent=1 // pred_check
      _
    $region31: #{encoder_forward.1} parent=1 // pred_check_branch
      %62 = sbr.rel (0) target = $region33
    $region32: #{encoder_forward.1} parent=1 // pred_region
      %s64 = ssub.s32 32, 32
      %65 = vsyncadd [#allocation7], %s64
      %s67 = sshll.u32 [#allocation8], 4
      %s68 = int_to_ptr.vmem [resolvable:$true] %s67
      %70 = dma.hbm_to_vmem [thread:$0]  %s7, 32, %s68, [#allocation7]
    $region33: #{encoder_forward.1} parent=1 // pred_fallthru
      _
    // Predicated region
    $region34: #{encoder_forward.1} parent=1 // pred_check
      _
    $region35: #{encoder_forward.1} parent=1 // pred_check_branch
      %72 = sbr.rel (0) target = $region37
    $region36: #{encoder_forward.1} parent=1 // pred_region
      _
    $region37: #{encoder_forward.1} parent=1 // pred_fallthru
      _
    // Predicated region
    $region38: #{encoder_forward.1} parent=1 // pred_check
      _
    $region39: #{encoder_forward.1} parent=1 // pred_check_branch
      %74 = sbr.rel (0) target = $region41
    $region40: #{encoder_forward.1} parent=1 // pred_region
      _
    $region41: #{encoder_forward.1} parent=1 // pred_fallthru
      _
    // Predicated region
    $region42: #{encoder_forward.1} parent=1 // pred_check
      _
    $region43: #{encoder_forward.1} parent=1 // pred_check_branch
      %76 = sbr.rel (0) target = $region45
    $region44: #{encoder_forward.1} parent=1 // pred_region
      %s78 = ssub.s32 2048, 2048
      %79 = vsyncadd [#allocation10], %s78
      %s80 = sshll.u32 [#allocation9], 4
      %s81 = int_to_ptr.vmem [resolvable:$true] %s80
      %86 = dma.hbm_to_vmem [thread:$0]  %s10, 2048, %s81, [#allocation10], 256, 256, 16
    $region45: #{encoder_forward.1} parent=1 // pred_fallthru
      _
    // Predicated region
    $region46: #{encoder_forward.1} parent=1 // pred_check
      _
    $region47: #{encoder_forward.1} parent=1 // pred_check_branch
      %88 = sbr.rel (0) target = $region49
    $region48: #{encoder_forward.1} parent=1 // pred_region
      %s90 = ssub.s32 32, 32
      %91 = vsyncadd [#allocation10], %s90
      %s93 = sshll.u32 [#allocation11], 4
      %s94 = int_to_ptr.vmem [resolvable:$true] %s93
      %96 = dma.hbm_to_vmem [thread:$0]  %s11, 32, %s94, [#allocation10]
    $region49: #{encoder_forward.1} parent=1 // pred_fallthru
      _
    // Predicated region
    $region50: #{encoder_forward.1} parent=1 // pred_check
      _
    $region51: #{encoder_forward.1} parent=1 // pred_check_branch
      %98 = sbr.rel (0) target = $region53
    $region52: #{encoder_forward.1} parent=1 // pred_region
      _
    $region53: #{encoder_forward.1} parent=1 // pred_fallthru
      _
    // Predicated region
    $region54: #{encoder_forward.1} parent=1 // pred_check
      _
    $region55: #{encoder_forward.1} parent=1 // pred_check_branch
      %100 = sbr.rel (0) target = $region57
    $region56: #{encoder_forward.1} parent=1 // pred_region
      _
    $region57: #{encoder_forward.1} parent=1 // pred_fallthru
      _
    // Predicated region
    $region58: #{encoder_forward.1} parent=1 // pred_check
      _
    $region59: #{encoder_forward.1} parent=1 // pred_check_branch
      %102 = sbr.rel (0) target = $region61
    $region60: #{encoder_forward.1} parent=1 // pred_region
      %103 = dma.done [#allocation4], 1024
    $region61: #{encoder_forward.1} parent=1 // pred_fallthru
      _
    // Predicated region
    $region62: #{encoder_forward.1} parent=1 // pred_check
      _
    $region63: #{encoder_forward.1} parent=1 // pred_check_branch
      %105 = sbr.rel (0) target = $region65
    $region64: #{encoder_forward.1} parent=1 // pred_region
      %106 = dma.done [#allocation7], 1024
    $region65: #{encoder_forward.1} parent=1 // pred_fallthru
      _
    // Predicated region
    $region66: #{encoder_forward.1} parent=1 // pred_check
      _
    $region67: #{encoder_forward.1} parent=1 // pred_check_branch
      %108 = sbr.rel (0) target = $region69
    $region68: #{encoder_forward.1} parent=1 // pred_region
      %109 = dma.done [#allocation7], 32
    $region69: #{encoder_forward.1} parent=1 // pred_fallthru
      _
    // Predicated region
    $region70: #{encoder_forward.1} parent=1 // pred_check
      _
    $region71: #{encoder_forward.1} parent=1 // pred_check_branch
      %111 = sbr.rel (0) target = $region73
    $region72: #{encoder_forward.1} parent=1 // pred_region
      %112 = dma.done [#allocation10], 2048
    $region73: #{encoder_forward.1} parent=1 // pred_fallthru
      _
    // Predicated region
    $region74: #{encoder_forward.1} parent=1 // pred_check
      _
    $region75: #{encoder_forward.1} parent=1 // pred_check_branch
      %114 = sbr.rel (0) target = $region77
    $region76: #{encoder_forward.1} parent=1 // pred_region
      %115 = dma.done [#allocation10], 32
    $region77: #{encoder_forward.1} parent=1 // pred_fallthru
      _
    %v116 = vlaneseq
    %v117 = vand.u32 %v116, 127
    %v118 = vadd.s32 %v117, 128
    %v119 = vld [vmem:[%s0] sm:$0xff]
    %v120 = vld [vmem:[%s0 + $0x8] sm:$0xff]
    %121 = vset.pattern.permute.xlu0 0
    %122 = vperm.xlu0 %121, %v119
    %v123 = vpop.permute.xlu0 %122
    %124 = vset.pattern.permute.xlu0 0
    %125 = vperm.xlu0 %124, %v120
    %v126 = vpop.permute.xlu0 %125
    %vm127 = vcmp.eq.s32.totalorder %v117, %v123
    %vm128 = vcmp.eq.s32.totalorder %v118, %v123
    %vm129 = vcmp.eq.s32.totalorder %v117, %v126
    %vm130 = vcmp.eq.s32.totalorder %v118, %v126
    %v131 = vld [vmem:[%s1] sm:$0xff]
    %v132 = vld [vmem:[%s1 + $0x8] sm:$0xff]
    %133 = vset.pattern.permute.xlu0 0
    %134 = vperm.xlu0 %133, %v131
    %v135 = vpop.permute.xlu0 %134
    %136 = vset.pattern.permute.xlu0 0
    %137 = vperm.xlu0 %136, %v132
    %v138 = vpop.permute.xlu0 %137
    %vm139 = vcmp.eq.s32.totalorder %v117, %v135
    %vm140 = vcmp.eq.s32.totalorder %v118, %v135
    %vm141 = vcmp.eq.s32.totalorder %v117, %v138
    %vm142 = vcmp.eq.s32.totalorder %v118, %v138
    %vm143 = vmor %vm127, %vm139
    %vm144 = vmor %vm128, %vm140
    %vm145 = vmor %vm129, %vm141
    %vm146 = vmor %vm130, %vm142
    %v147 = vsel %vm143, 1, 0
    %v148 = vsel %vm144, 1, 0
    %v149 = vsel %vm145, 1, 0
    %v150 = vsel %vm146, 1, 0
    %v151 = vcvt.s32.f32 %v147
    %v152 = vcvt.s32.f32 %v148
    %v153 = vcvt.s32.f32 %v149
    %v154 = vcvt.s32.f32 %v150
    %v155 = vld [vmem:[%s3] sm:$0xff]
    %v156 = vld [vmem:[%s3 + $0x8] sm:$0xff]
    %v157 = vld [vmem:[%s3 + $0x10] sm:$0xff]
    %v158 = vld [vmem:[%s3 + $0x18] sm:$0xff]
    %v159 = vld [vmem:[%s3 + $0x20] sm:$0xff]
    %v160 = vld [vmem:[%s3 + $0x28] sm:$0xff]
    %v161 = vld [vmem:[%s3 + $0x30] sm:$0xff]
    %v162 = vld [vmem:[%s3 + $0x38] sm:$0xff]
    %v163 = vld [vmem:[%s3 + $0x40] sm:$0xff]
    %v164 = vld [vmem:[%s3 + $0x48] sm:$0xff]
    %v165 = vld [vmem:[%s3 + $0x50] sm:$0xff]
    %v166 = vld [vmem:[%s3 + $0x58] sm:$0xff]
    %v167 = vld [vmem:[%s3 + $0x60] sm:$0xff]
    %v168 = vld [vmem:[%s3 + $0x68] sm:$0xff]
    %v169 = vld [vmem:[%s3 + $0x70] sm:$0xff]
    %v170 = vld [vmem:[%s3 + $0x78] sm:$0xff]
    %v171 = vld [vmem:[%s3 + $0x80] sm:$0xff]
    %v172 = vld [vmem:[%s3 + $0x88] sm:$0xff]
    %v173 = vld [vmem:[%s3 + $0x90] sm:$0xff]
    %v174 = vld [vmem:[%s3 + $0x98] sm:$0xff]
    %v175 = vld [vmem:[%s3 + $0xa0] sm:$0xff]
    %v176 = vld [vmem:[%s3 + $0xa8] sm:$0xff]
    %v177 = vld [vmem:[%s3 + $0xb0] sm:$0xff]
    %v178 = vld [vmem:[%s3 + $0xb8] sm:$0xff]
    %v179 = vld [vmem:[%s3 + $0xc0] sm:$0xff]
    %v180 = vld [vmem:[%s3 + $0xc8] sm:$0xff]
    %v181 = vld [vmem:[%s3 + $0xd0] sm:$0xff]
    %v182 = vld [vmem:[%s3 + $0xd8] sm:$0xff]
    %v183 = vld [vmem:[%s3 + $0xe0] sm:$0xff]
    %v184 = vld [vmem:[%s3 + $0xe8] sm:$0xff]
    %v185 = vld [vmem:[%s3 + $0xf0] sm:$0xff]
    %v186 = vld [vmem:[%s3 + $0xf8] sm:$0xff]
    %187 = vmatprep.subr.mxu0 0.0
    %188 = vmatpush1.msra.mxu0 %v155
    %189 = vmatprep.subr.mxu0 0.0
    %190 = vmatpush1.msra.mxu0 %v156
    %191 = vmatprep.subr.mxu0 0.0
    %192 = vmatpush1.msra.mxu0 %v157
    %193 = vmatprep.subr.mxu0 0.0
    %194 = vmatpush1.msra.mxu0 %v158
    %195 = vmatprep.subr.mxu0 0.0
    %196 = vmatpush1.msra.mxu0 %v159
    %197 = vmatprep.subr.mxu0 0.0
    %198 = vmatpush1.msra.mxu0 %v160
    %199 = vmatprep.subr.mxu0 0.0
    %200 = vmatpush1.msra.mxu0 %v161
    %201 = vmatprep.subr.mxu0 0.0
    %202 = vmatpush1.msra.mxu0 %v162
    %203 = vmatprep.subr.mxu0 0.0
    %204 = vmatpush1.msra.mxu0 %v163
    %205 = vmatprep.subr.mxu0 0.0
    %206 = vmatpush1.msra.mxu0 %v164
    %207 = vmatprep.subr.mxu0 0.0
    %208 = vmatpush1.msra.mxu0 %v165
    %209 = vmatprep.subr.mxu0 0.0
    %210 = vmatpush1.msra.mxu0 %v166
    %211 = vmatprep.subr.mxu0 0.0
    %212 = vmatpush1.msra.mxu0 %v167
    %213 = vmatprep.subr.mxu0 0.0
    %214 = vmatpush1.msra.mxu0 %v168
    %215 = vmatprep.subr.mxu0 0.0
    %216 = vmatpush1.msra.mxu0 %v169
    %217 = vmatprep.subr.mxu0 0.0
    %218 = vmatpush1.msra.mxu0 %v170
    %219 = vmatprep.subr.mxu0 0.0
    %220 = vmatpush1.msra.mxu0 %v171
    %221 = vmatprep.subr.mxu0 0.0
    %222 = vmatpush1.msra.mxu0 %v172
    %223 = vmatprep.subr.mxu0 0.0
    %224 = vmatpush1.msra.mxu0 %v173
    %225 = vmatprep.subr.mxu0 0.0
    %226 = vmatpush1.msra.mxu0 %v174
    %227 = vmatprep.subr.mxu0 0.0
    %228 = vmatpush1.msra.mxu0 %v175
    %229 = vmatprep.subr.mxu0 0.0
    %230 = vmatpush1.msra.mxu0 %v176
    %231 = vmatprep.subr.mxu0 0.0
    %232 = vmatpush1.msra.mxu0 %v177
    %233 = vmatprep.subr.mxu0 0.0
    %234 = vmatpush1.msra.mxu0 %v178
    %235 = vmatprep.subr.mxu0 0.0
    %236 = vmatpush1.msra.mxu0 %v179
    %237 = vmatprep.subr.mxu0 0.0
    %238 = vmatpush1.msra.mxu0 %v180
    %239 = vmatprep.subr.mxu0 0.0
    %240 = vmatpush1.msra.mxu0 %v181
    %241 = vmatprep.subr.mxu0 0.0
    %242 = vmatpush1.msra.mxu0 %v182
    %243 = vmatprep.subr.mxu0 0.0
    %244 = vmatpush1.msra.mxu0 %v183
    %245 = vmatprep.subr.mxu0 0.0
    %246 = vmatpush1.msra.mxu0 %v184
    %247 = vmatprep.subr.mxu0 0.0
    %248 = vmatpush1.msra.mxu0 %v185
    %249 = vmatprep.subr.mxu0 0.0
    %250 = vmatpush1.msra.mxu0 %v186
    %251 = vmatprep.mubr.f32.mxu0 %v152
    %252 = vmatmul.mubr.f32.gmra.mrb[0].mxu0 %v151
    %v253 = vpop.f32.mrb[0].mxu0
    %v254 = vadd.f32 0.0, %v253
    %v255 = vpop.f32.mrb[0].mxu0
    %256 = vmatprep.mubr.f32.mxu0 %v154
    %257 = vmatmul.mubr.f32.gmra.mrb[0].mxu0 %v153
    %v258 = vpop.f32.mrb[0].mxu0
    %v259 = vadd.f32 0.0, %v258
    %v260 = vpop.f32.mrb[0].mxu0
    %261 = vdwg.mxu0
    %v262 = vld [vmem:[%s2] sm:$0xff]
    %v263 = vld [vmem:[%s2 + $0x8] sm:$0xff]
    %v264 = vld [vmem:[%s12] sm:$0x3]
    %s265 = scalar_lea.vmem %s12, 2
    %v266 = vld [vmem:[%s265] sm:$0x3]
    %268 = vrot.lane.b32.xlu0 %v266, 32
    %v269 = vpop.permute.xlu0 %268
    %vm271 = vcmask 261120
    %v272 = vsel %vm271, %v264, %v269
    %v273 = vld [vmem:[%s13] sm:$0x3]
    %s274 = scalar_lea.vmem %s13, 2
    %v275 = vld [vmem:[%s274] sm:$0x3]
    %277 = vrot.lane.b32.xlu0 %v275, 32
    %v278 = vpop.permute.xlu0 %277
    %v280 = vsel %vm271, %v273, %v278
    %vm281 = vcmask 130048
    %v283 = vsel %vm281, %v262, 0
    %v286 = vsel %vm281, %v263, 0
    %288 = vmatprep.subr.mxu0 0.0
    %289 = vmatpush1.msra.mxu0 %v254
    %290 = vmatprep.subr.mxu0 0.0
    %291 = vmatpush1.msra.mxu0 %v259
    %292 = vmatprep.subr.mxu0 0.0
    %293 = vmatpush1.msra.mxu0 0.0
    %294 = vmatprep.subr.mxu0 0.0
    %295 = vmatpush1.msra.mxu0 0.0
    %296 = vmatprep.subr.mxu0 0.0
    %297 = vmatpush1.msra.mxu0 0.0
    %298 = vmatprep.subr.mxu0 0.0
    %299 = vmatpush1.msra.mxu0 0.0
    %300 = vmatprep.subr.mxu0 0.0
    %301 = vmatpush1.msra.mxu0 0.0
    %302 = vmatprep.subr.mxu0 0.0
    %303 = vmatpush1.msra.mxu0 0.0
    %304 = vmatprep.subr.mxu0 0.0
    %305 = vmatpush1.msra.mxu0 0.0
    %306 = vmatprep.subr.mxu0 0.0
    %307 = vmatpush1.msra.mxu0 0.0
    %308 = vmatprep.subr.mxu0 0.0
    %309 = vmatpush1.msra.mxu0 0.0
    %310 = vmatprep.subr.mxu0 0.0
    %311 = vmatpush1.msra.mxu0 0.0
    %312 = vmatprep.subr.mxu0 0.0
    %313 = vmatpush1.msra.mxu0 0.0
    %314 = vmatprep.subr.mxu0 0.0
    %315 = vmatpush1.msra.mxu0 0.0
    %316 = vmatprep.subr.mxu0 0.0
    %317 = vmatpush1.msra.mxu0 0.0
    %318 = vmatprep.subr.mxu0 0.0
    %319 = vmatpush1.msra.mxu0 0.0
    %320 = vmatprep.subr.mxu0 0.0
    %321 = vmatpush1.msra.mxu0 0.0
    %322 = vmatprep.subr.mxu0 0.0
    %323 = vmatpush1.msra.mxu0 0.0
    %324 = vmatprep.subr.mxu0 0.0
    %325 = vmatpush1.msra.mxu0 0.0
    %326 = vmatprep.subr.mxu0 0.0
    %327 = vmatpush1.msra.mxu0 0.0
    %328 = vmatprep.subr.mxu0 0.0
    %329 = vmatpush1.msra.mxu0 0.0
    %330 = vmatprep.subr.mxu0 0.0
    %331 = vmatpush1.msra.mxu0 0.0
    %332 = vmatprep.subr.mxu0 0.0
    %333 = vmatpush1.msra.mxu0 0.0
    %334 = vmatprep.subr.mxu0 0.0
    %335 = vmatpush1.msra.mxu0 0.0
    %336 = vmatprep.subr.mxu0 0.0
    %337 = vmatpush1.msra.mxu0 0.0
    %338 = vmatprep.subr.mxu0 0.0
    %339 = vmatpush1.msra.mxu0 0.0
    %340 = vmatprep.subr.mxu0 0.0
    %341 = vmatpush1.msra.mxu0 0.0
    %342 = vmatprep.subr.mxu0 0.0
    %343 = vmatpush1.msra.mxu0 0.0
    %344 = vmatprep.subr.mxu0 0.0
    %345 = vmatpush1.msra.mxu0 0.0
    %346 = vmatprep.subr.mxu0 0.0
    %347 = vmatpush1.msra.mxu0 0.0
    %348 = vmatprep.subr.mxu0 0.0
    %349 = vmatpush1.msra.mxu0 0.0
    %350 = vmatprep.subr.mxu0 0.0
    %351 = vmatpush1.msra.mxu0 0.0
    %352 = vmatprep.mubr.f32.mxu0 0.0
    %353 = vmatmul.mubr.f32.gmra.mrb[0].mxu0 %v283
    %v354 = vpop.f32.mrb[0].mxu0
    %v355 = vadd.f32 0.0, %v354
    %v356 = vpop.f32.mrb[0].mxu0
    %357 = vmatprep.mubr.f32.mxu0 0.0
    %358 = vmatmul.mubr.f32.gmra.mrb[0].mxu0 %v286
    %v359 = vpop.f32.mrb[0].mxu0
    %v360 = vadd.f32 0.0, %v359
    %v361 = vpop.f32.mrb[0].mxu0
    %362 = vdwg.mxu0
    %v363 = vld [vmem:[#allocation3] sm:$0xff]
    %v364 = vld [vmem:[#allocation3 + $0x8] sm:$0xff]
    %v365 = vld [vmem:[#allocation3 + $0x10] sm:$0xff]
    %v366 = vld [vmem:[#allocation3 + $0x18] sm:$0xff]
    %v367 = vld [vmem:[#allocation3 + $0x20] sm:$0xff]
    %v368 = vld [vmem:[#allocation3 + $0x28] sm:$0xff]
    %v369 = vld [vmem:[#allocation3 + $0x30] sm:$0xff]
    %v370 = vld [vmem:[#allocation3 + $0x38] sm:$0xff]
    %v371 = vld [vmem:[#allocation6] sm:$0xff]
    %v372 = vld [vmem:[#allocation6 + $0x8] sm:$0xff]
    %v373 = vld [vmem:[#allocation6 + $0x10] sm:$0xff]
    %v374 = vld [vmem:[#allocation6 + $0x18] sm:$0xff]
    %v375 = vld [vmem:[#allocation6 + $0x20] sm:$0xff]
    %v376 = vld [vmem:[#allocation6 + $0x28] sm:$0xff]
    %v377 = vld [vmem:[#allocation6 + $0x30] sm:$0xff]
    %v378 = vld [vmem:[#allocation6 + $0x38] sm:$0xff]
    %v380 = vsel %vm271, %v355, 0
    %v383 = vsel %vm271, %v360, 0
    %385 = vmatprep.subr.mxu0 %v372
    %386 = vmatpush1.msra.mxu0 %v371
    %387 = vmatprep.subr.mxu0 %v374
    %388 = vmatpush1.msra.mxu0 %v373
    %389 = vmatprep.subr.mxu0 %v376
    %390 = vmatpush1.msra.mxu0 %v375
    %391 = vmatprep.subr.mxu0 %v378
    %392 = vmatpush1.msra.mxu0 %v377
    %393 = vmatprep.subr.mxu0 0.0
    %394 = vmatpush1.msra.mxu0 0.0
    %395 = vmatprep.subr.mxu0 0.0
    %396 = vmatpush1.msra.mxu0 0.0
    %397 = vmatprep.subr.mxu0 0.0
    %398 = vmatpush1.msra.mxu0 0.0
    %399 = vmatprep.subr.mxu0 0.0
    %400 = vmatpush1.msra.mxu0 0.0
    %401 = vmatprep.subr.mxu0 0.0
    %402 = vmatpush1.msra.mxu0 0.0
    %403 = vmatprep.subr.mxu0 0.0
    %404 = vmatpush1.msra.mxu0 0.0
    %405 = vmatprep.subr.mxu0 0.0
    %406 = vmatpush1.msra.mxu0 0.0
    %407 = vmatprep.subr.mxu0 0.0
    %408 = vmatpush1.msra.mxu0 0.0
    %409 = vmatprep.subr.mxu0 0.0
    %410 = vmatpush1.msra.mxu0 0.0
    %411 = vmatprep.subr.mxu0 0.0
    %412 = vmatpush1.msra.mxu0 0.0
    %413 = vmatprep.subr.mxu0 0.0
    %414 = vmatpush1.msra.mxu0 0.0
    %415 = vmatprep.subr.mxu0 0.0
    %416 = vmatpush1.msra.mxu0 0.0
    %417 = vmatprep.subr.mxu0 0.0
    %418 = vmatpush1.msra.mxu0 0.0
    %419 = vmatprep.subr.mxu0 0.0
    %420 = vmatpush1.msra.mxu0 0.0
    %421 = vmatprep.subr.mxu0 0.0
    %422 = vmatpush1.msra.mxu0 0.0
    %423 = vmatprep.subr.mxu0 0.0
    %424 = vmatpush1.msra.mxu0 0.0
    %425 = vmatprep.subr.mxu0 0.0
    %426 = vmatpush1.msra.mxu0 0.0
    %427 = vmatprep.subr.mxu0 0.0
    %428 = vmatpush1.msra.mxu0 0.0
    %429 = vmatprep.subr.mxu0 0.0
    %430 = vmatpush1.msra.mxu0 0.0
    %431 = vmatprep.subr.mxu0 0.0
    %432 = vmatpush1.msra.mxu0 0.0
    %433 = vmatprep.subr.mxu0 0.0
    %434 = vmatpush1.msra.mxu0 0.0
    %435 = vmatprep.subr.mxu0 0.0
    %436 = vmatpush1.msra.mxu0 0.0
    %437 = vmatprep.subr.mxu0 0.0
    %438 = vmatpush1.msra.mxu0 0.0
    %439 = vmatprep.subr.mxu0 0.0
    %440 = vmatpush1.msra.mxu0 0.0
    %441 = vmatprep.subr.mxu0 0.0
    %442 = vmatpush1.msra.mxu0 0.0
    %443 = vmatprep.subr.mxu0 0.0
    %444 = vmatpush1.msra.mxu0 0.0
    %445 = vmatprep.subr.mxu0 0.0
    %446 = vmatpush1.msra.mxu0 0.0
    %447 = vmatprep.subr.mxu0 0.0
    %448 = vmatpush1.msra.mxu0 0.0
    %449 = vmatprep.mubr.f32.mxu0 0.0
    %450 = vmatmul.mubr.f32.gmra.mrb[0].mxu0 %v380
    %v451 = vpop.f32.mrb[0].mxu0
    %v452 = vadd.f32 0.0, %v451
    %v453 = vpop.f32.mrb[0].mxu0
    %v454 = vadd.f32 0.0, %v453
    %455 = vmatprep.mubr.f32.mxu0 0.0
    %456 = vmatmul.mubr.f32.gmra.mrb[0].mxu0 %v383
    %v457 = vpop.f32.mrb[0].mxu0
    %v458 = vadd.f32 0.0, %v457
    %v459 = vpop.f32.mrb[0].mxu0
    %v460 = vadd.f32 0.0, %v459
    %461 = vdwg.mxu0
    %v463 = vsel %vm271, %v254, 0
    %v466 = vsel %vm271, %v259, 0
    %468 = vmatprep.subr.mxu0 %v364
    %469 = vmatpush1.msra.mxu0 %v363
    %470 = vmatprep.subr.mxu0 %v366
    %471 = vmatpush1.msra.mxu0 %v365
    %472 = vmatprep.subr.mxu0 %v368
    %473 = vmatpush1.msra.mxu0 %v367
    %474 = vmatprep.subr.mxu0 %v370
    %475 = vmatpush1.msra.mxu0 %v369
    %476 = vmatprep.subr.mxu0 0.0
    %477 = vmatpush1.msra.mxu0 0.0
    %478 = vmatprep.subr.mxu0 0.0
    %479 = vmatpush1.msra.mxu0 0.0
    %480 = vmatprep.subr.mxu0 0.0
    %481 = vmatpush1.msra.mxu0 0.0
    %482 = vmatprep.subr.mxu0 0.0
    %483 = vmatpush1.msra.mxu0 0.0
    %484 = vmatprep.subr.mxu0 0.0
    %485 = vmatpush1.msra.mxu0 0.0
    %486 = vmatprep.subr.mxu0 0.0
    %487 = vmatpush1.msra.mxu0 0.0
    %488 = vmatprep.subr.mxu0 0.0
    %489 = vmatpush1.msra.mxu0 0.0
    %490 = vmatprep.subr.mxu0 0.0
    %491 = vmatpush1.msra.mxu0 0.0
    %492 = vmatprep.subr.mxu0 0.0
    %493 = vmatpush1.msra.mxu0 0.0
    %494 = vmatprep.subr.mxu0 0.0
    %495 = vmatpush1.msra.mxu0 0.0
    %496 = vmatprep.subr.mxu0 0.0
    %497 = vmatpush1.msra.mxu0 0.0
    %498 = vmatprep.subr.mxu0 0.0
    %499 = vmatpush1.msra.mxu0 0.0
    %500 = vmatprep.subr.mxu0 0.0
    %501 = vmatpush1.msra.mxu0 0.0
    %502 = vmatprep.subr.mxu0 0.0
    %503 = vmatpush1.msra.mxu0 0.0
    %504 = vmatprep.subr.mxu0 0.0
    %505 = vmatpush1.msra.mxu0 0.0
    %506 = vmatprep.subr.mxu0 0.0
    %507 = vmatpush1.msra.mxu0 0.0
    %508 = vmatprep.subr.mxu0 0.0
    %509 = vmatpush1.msra.mxu0 0.0
    %510 = vmatprep.subr.mxu0 0.0
    %511 = vmatpush1.msra.mxu0 0.0
    %512 = vmatprep.subr.mxu0 0.0
    %513 = vmatpush1.msra.mxu0 0.0
    %514 = vmatprep.subr.mxu0 0.0
    %515 = vmatpush1.msra.mxu0 0.0
    %516 = vmatprep.subr.mxu0 0.0
    %517 = vmatpush1.msra.mxu0 0.0
    %518 = vmatprep.subr.mxu0 0.0
    %519 = vmatpush1.msra.mxu0 0.0
    %520 = vmatprep.subr.mxu0 0.0
    %521 = vmatpush1.msra.mxu0 0.0
    %522 = vmatprep.subr.mxu0 0.0
    %523 = vmatpush1.msra.mxu0 0.0
    %524 = vmatprep.subr.mxu0 0.0
    %525 = vmatpush1.msra.mxu0 0.0
    %526 = vmatprep.subr.mxu0 0.0
    %527 = vmatpush1.msra.mxu0 0.0
    %528 = vmatprep.subr.mxu0 0.0
    %529 = vmatpush1.msra.mxu0 0.0
    %530 = vmatprep.subr.mxu0 0.0
    %531 = vmatpush1.msra.mxu0 0.0
    %532 = vmatprep.mubr.f32.mxu0 0.0
    %533 = vmatmul.mubr.f32.gmra.mrb[0].mxu0 %v463
    %v534 = vpop.f32.mrb[0].mxu0
    %v535 = vadd.f32 %v452, %v534
    %v536 = vpop.f32.mrb[0].mxu0
    %v537 = vadd.f32 %v454, %v536
    %538 = vmatprep.mubr.f32.mxu0 0.0
    %539 = vmatmul.mubr.f32.gmra.mrb[0].mxu0 %v466
    %v540 = vpop.f32.mrb[0].mxu0
    %v541 = vadd.f32 %v458, %v540
    %v542 = vpop.f32.mrb[0].mxu0
    %v543 = vadd.f32 %v460, %v542
    %544 = vdwg.mxu0
    %v545 = vld [vmem:[#allocation8] sm:$0x3]
    %v547 = vlaneseq
    %v548 = vshrl.u32 %v547, 7
    %v549 = vsub.s32 0, %v548
    %v550 = vrot.slane %v545, %v549
    %v551 = vlaneseq
    %v552 = vshrl.u32 %v551, 7
    %v553 = vsub.s32 1, %v552
    %v554 = vrot.slane %v545, %v553
    %v557 = vadd.f32 %v535, %v550
    %v558 = vadd.f32 %v537, %v554
    %v559 = vadd.f32 %v541, %v550
    %v560 = vadd.f32 %v543, %v554
    %v561 = vld [vmem:[%s6] sm:$0xff]
    %v562 = vld [vmem:[%s6 + $0x8] sm:$0xff]
    %v563 = vld [vmem:[%s6 + $0x10] sm:$0xff]
    %v564 = vld [vmem:[%s6 + $0x18] sm:$0xff]
    %v565 = vld [vmem:[%s6 + $0x20] sm:$0xff]
    %v566 = vld [vmem:[%s6 + $0x28] sm:$0xff]
    %v567 = vld [vmem:[%s6 + $0x30] sm:$0xff]
    %v568 = vld [vmem:[%s6 + $0x38] sm:$0xff]
    %v569 = vld [vmem:[%s6 + $0x40] sm:$0xff]
    %v570 = vld [vmem:[%s6 + $0x48] sm:$0xff]
    %v571 = vld [vmem:[%s6 + $0x50] sm:$0xff]
    %v572 = vld [vmem:[%s6 + $0x58] sm:$0xff]
    %v573 = vld [vmem:[%s6 + $0x60] sm:$0xff]
    %v574 = vld [vmem:[%s6 + $0x68] sm:$0xff]
    %v575 = vld [vmem:[%s6 + $0x70] sm:$0xff]
    %v576 = vld [vmem:[%s6 + $0x78] sm:$0xff]
    %vm577 = vcmask 523264
    %v579 = vsel %vm577, %v272, 0
    %581 = vmatprep.subr.mxu0 %v562
    %582 = vmatpush1.msra.mxu0 %v561
    %583 = vmatprep.subr.mxu0 %v564
    %584 = vmatpush1.msra.mxu0 %v563
    %585 = vmatprep.subr.mxu0 %v566
    %586 = vmatpush1.msra.mxu0 %v565
    %587 = vmatprep.subr.mxu0 %v568
    %588 = vmatpush1.msra.mxu0 %v567
    %589 = vmatprep.subr.mxu0 %v570
    %590 = vmatpush1.msra.mxu0 %v569
    %591 = vmatprep.subr.mxu0 %v572
    %592 = vmatpush1.msra.mxu0 %v571
    %593 = vmatprep.subr.mxu0 %v574
    %594 = vmatpush1.msra.mxu0 %v573
    %595 = vmatprep.subr.mxu0 %v576
    %596 = vmatpush1.msra.mxu0 %v575
    %597 = vmatprep.subr.mxu0 0.0
    %598 = vmatpush1.msra.mxu0 0.0
    %599 = vmatprep.subr.mxu0 0.0
    %600 = vmatpush1.msra.mxu0 0.0
    %601 = vmatprep.subr.mxu0 0.0
    %602 = vmatpush1.msra.mxu0 0.0
    %603 = vmatprep.subr.mxu0 0.0
    %604 = vmatpush1.msra.mxu0 0.0
    %605 = vmatprep.subr.mxu0 0.0
    %606 = vmatpush1.msra.mxu0 0.0
    %607 = vmatprep.subr.mxu0 0.0
    %608 = vmatpush1.msra.mxu0 0.0
    %609 = vmatprep.subr.mxu0 0.0
    %610 = vmatpush1.msra.mxu0 0.0
    %611 = vmatprep.subr.mxu0 0.0
    %612 = vmatpush1.msra.mxu0 0.0
    %613 = vmatprep.subr.mxu0 0.0
    %614 = vmatpush1.msra.mxu0 0.0
    %615 = vmatprep.subr.mxu0 0.0
    %616 = vmatpush1.msra.mxu0 0.0
    %617 = vmatprep.subr.mxu0 0.0
    %618 = vmatpush1.msra.mxu0 0.0
    %619 = vmatprep.subr.mxu0 0.0
    %620 = vmatpush1.msra.mxu0 0.0
    %621 = vmatprep.subr.mxu0 0.0
    %622 = vmatpush1.msra.mxu0 0.0
    %623 = vmatprep.subr.mxu0 0.0
    %624 = vmatpush1.msra.mxu0 0.0
    %625 = vmatprep.subr.mxu0 0.0
    %626 = vmatpush1.msra.mxu0 0.0
    %627 = vmatprep.subr.mxu0 0.0
    %628 = vmatpush1.msra.mxu0 0.0
    %629 = vmatprep.subr.mxu0 0.0
    %630 = vmatpush1.msra.mxu0 0.0
    %631 = vmatprep.subr.mxu0 0.0
    %632 = vmatpush1.msra.mxu0 0.0
    %633 = vmatprep.subr.mxu0 0.0
    %634 = vmatpush1.msra.mxu0 0.0
    %635 = vmatprep.subr.mxu0 0.0
    %636 = vmatpush1.msra.mxu0 0.0
    %637 = vmatprep.subr.mxu0 0.0
    %638 = vmatpush1.msra.mxu0 0.0
    %639 = vmatprep.subr.mxu0 0.0
    %640 = vmatpush1.msra.mxu0 0.0
    %641 = vmatprep.subr.mxu0 0.0
    %642 = vmatpush1.msra.mxu0 0.0
    %643 = vmatprep.subr.mxu0 0.0
    %644 = vmatpush1.msra.mxu0 0.0
    %645 = vmatprep.mubr.f32.mxu0 0.0
    %646 = vmatmul.mubr.f32.gmra.mrb[0].mxu0 %v579
    %v647 = vpop.f32.mrb[0].mxu0
    %v648 = vadd.f32 0.0, %v647
    %v649 = vpop.f32.mrb[0].mxu0
    %v650 = vadd.f32 0.0, %v649
    %651 = vdwg.mxu0
    %v652 = vadd.f32 %v557, %v648
    %v653 = vadd.f32 %v558, %v650
    %v654 = vxor.u32 %v652, 2147483648
    %v655 = vxor.u32 %v653, 2147483648
    %v656 = vmul.f32 %v654, 1.442695
    %v657 = vpow.pop %v656
    %v658 = vmul.f32 %v655, 1.442695
    %v659 = vpow.pop %v658
    %v660 = vadd.f32 %v657, 1.0
    %v661 = vadd.f32 %v659, 1.0
    %v662 = vrcp.pop %v660
    %v663 = vmul.f32 1.0, %v662
    %v664 = vrcp.pop %v661
    %v665 = vmul.f32 1.0, %v664
    %v666 = vtanh.pop %v653
    %668 = vrot.lane.b32.xlu0 %v280, 64
    %v669 = vpop.permute.xlu0 %668
    %v671 = vmul.f32 %v663, %v669
    %v672 = vmul.f32 %v663, %v666
    %674 = vrot.lane.b32.xlu0 %v672, 64
    %v675 = vpop.permute.xlu0 %674
    %v677 = vadd.f32 %v671, %v675
    %v678 = vtanh.pop %v677
    %v679 = vmul.f32 %v665, %v678
    %681 = vrot.lane.b32.xlu0 %v679, 64
    %v682 = vpop.permute.xlu0 %681
    %vm684 = vcmask 254976
    %685 = vst.msk [vmem:[#allocation2] sm:$0x3] %vm684, %v682
    %vm686 = vcmask 517376
    %687 = vst.msk [vmem:[#allocation2 + $0xe] sm:$0x3] %vm686, %v682
    %v688 = vsel %vm577, %v682, 0
    %690 = vmatprep.subr.mxu0 %v562
    %691 = vmatpush1.msra.mxu0 %v561
    %692 = vmatprep.subr.mxu0 %v564
    %693 = vmatpush1.msra.mxu0 %v563
    %694 = vmatprep.subr.mxu0 %v566
    %695 = vmatpush1.msra.mxu0 %v565
    %696 = vmatprep.subr.mxu0 %v568
    %697 = vmatpush1.msra.mxu0 %v567
    %698 = vmatprep.subr.mxu0 %v570
    %699 = vmatpush1.msra.mxu0 %v569
    %700 = vmatprep.subr.mxu0 %v572
    %701 = vmatpush1.msra.mxu0 %v571
    %702 = vmatprep.subr.mxu0 %v574
    %703 = vmatpush1.msra.mxu0 %v573
    %704 = vmatprep.subr.mxu0 %v576
    %705 = vmatpush1.msra.mxu0 %v575
    %706 = vmatprep.subr.mxu0 0.0
    %707 = vmatpush1.msra.mxu0 0.0
    %708 = vmatprep.subr.mxu0 0.0
    %709 = vmatpush1.msra.mxu0 0.0
    %710 = vmatprep.subr.mxu0 0.0
    %711 = vmatpush1.msra.mxu0 0.0
    %712 = vmatprep.subr.mxu0 0.0
    %713 = vmatpush1.msra.mxu0 0.0
    %714 = vmatprep.subr.mxu0 0.0
    %715 = vmatpush1.msra.mxu0 0.0
    %716 = vmatprep.subr.mxu0 0.0
    %717 = vmatpush1.msra.mxu0 0.0
    %718 = vmatprep.subr.mxu0 0.0
    %719 = vmatpush1.msra.mxu0 0.0
    %720 = vmatprep.subr.mxu0 0.0
    %721 = vmatpush1.msra.mxu0 0.0
    %722 = vmatprep.subr.mxu0 0.0
    %723 = vmatpush1.msra.mxu0 0.0
    %724 = vmatprep.subr.mxu0 0.0
    %725 = vmatpush1.msra.mxu0 0.0
    %726 = vmatprep.subr.mxu0 0.0
    %727 = vmatpush1.msra.mxu0 0.0
    %728 = vmatprep.subr.mxu0 0.0
    %729 = vmatpush1.msra.mxu0 0.0
    %730 = vmatprep.subr.mxu0 0.0
    %731 = vmatpush1.msra.mxu0 0.0
    %732 = vmatprep.subr.mxu0 0.0
    %733 = vmatpush1.msra.mxu0 0.0
    %734 = vmatprep.subr.mxu0 0.0
    %735 = vmatpush1.msra.mxu0 0.0
    %736 = vmatprep.subr.mxu0 0.0
    %737 = vmatpush1.msra.mxu0 0.0
    %738 = vmatprep.subr.mxu0 0.0
    %739 = vmatpush1.msra.mxu0 0.0
    %740 = vmatprep.subr.mxu0 0.0
    %741 = vmatpush1.msra.mxu0 0.0
    %742 = vmatprep.subr.mxu0 0.0
    %743 = vmatpush1.msra.mxu0 0.0
    %744 = vmatprep.subr.mxu0 0.0
    %745 = vmatpush1.msra.mxu0 0.0
    %746 = vmatprep.subr.mxu0 0.0
    %747 = vmatpush1.msra.mxu0 0.0
    %748 = vmatprep.subr.mxu0 0.0
    %749 = vmatpush1.msra.mxu0 0.0
    %750 = vmatprep.subr.mxu0 0.0
    %751 = vmatpush1.msra.mxu0 0.0
    %752 = vmatprep.subr.mxu0 0.0
    %753 = vmatpush1.msra.mxu0 0.0
    %754 = vmatprep.mubr.f32.mxu0 0.0
    %755 = vmatmul.mubr.f32.gmra.mrb[0].mxu0 %v688
    %v756 = vpop.f32.mrb[0].mxu0
    %v757 = vadd.f32 0.0, %v756
    %v758 = vpop.f32.mrb[0].mxu0
    %v759 = vadd.f32 0.0, %v758
    %760 = vdwg.mxu0
    %v763 = vrot.slane %v757, 6
    %v764 = vrot.slane %v759, 6
    %v767 = vadd.f32 %v557, %v763
    %v768 = vadd.f32 %v558, %v764
    %v769 = vxor.u32 %v767, 2147483648
    %v770 = vxor.u32 %v768, 2147483648
    %v771 = vmul.f32 %v769, 1.442695
    %v772 = vpow.pop %v771
    %v773 = vmul.f32 %v770, 1.442695
    %v774 = vpow.pop %v773
    %v775 = vadd.f32 %v772, 1.0
    %v776 = vadd.f32 %v774, 1.0
    %v777 = vrcp.pop %v775
    %v778 = vmul.f32 1.0, %v777
    %v779 = vrcp.pop %v776
    %v780 = vmul.f32 1.0, %v779
    %v781 = vtanh.pop %v768
    %v783 = vrot.slane %v677, 6
    %v785 = vmul.f32 %v778, %v783
    %v786 = vmul.f32 %v778, %v781
    %788 = vrot.lane.b32.xlu0 %v786, 64
    %v789 = vpop.permute.xlu0 %788
    %v791 = vadd.f32 %v785, %v789
    %v792 = vtanh.pop %v791
    %v793 = vmul.f32 %v780, %v792
    %795 = vrot.lane.b32.xlu0 %v793, 64
    %v796 = vpop.permute.xlu0 %795
    %vm798 = vcmask 257026
    %799 = vst.msk [vmem:[#allocation2] sm:$0xc] %vm798, %v796
    %vm800 = vcmask 519426
    %801 = vst.msk [vmem:[#allocation2 + $0xa] sm:$0xc] %vm800, %v796
    %v802 = vrot.slane %v793, 2
    %803 = vrot.lane.b32.xlu0 %v802, 64
    %v804 = vpop.permute.xlu0 %803
    %v805 = vsel %vm577, %v804, 0
    %807 = vmatprep.subr.mxu0 %v562
    %808 = vmatpush1.msra.mxu0 %v561
    %809 = vmatprep.subr.mxu0 %v564
    %810 = vmatpush1.msra.mxu0 %v563
    %811 = vmatprep.subr.mxu0 %v566
    %812 = vmatpush1.msra.mxu0 %v565
    %813 = vmatprep.subr.mxu0 %v568
    %814 = vmatpush1.msra.mxu0 %v567
    %815 = vmatprep.subr.mxu0 %v570
    %816 = vmatpush1.msra.mxu0 %v569
    %817 = vmatprep.subr.mxu0 %v572
    %818 = vmatpush1.msra.mxu0 %v571
    %819 = vmatprep.subr.mxu0 %v574
    %820 = vmatpush1.msra.mxu0 %v573
    %821 = vmatprep.subr.mxu0 %v576
    %822 = vmatpush1.msra.mxu0 %v575
    %823 = vmatprep.subr.mxu0 0.0
    %824 = vmatpush1.msra.mxu0 0.0
    %825 = vmatprep.subr.mxu0 0.0
    %826 = vmatpush1.msra.mxu0 0.0
    %827 = vmatprep.subr.mxu0 0.0
    %828 = vmatpush1.msra.mxu0 0.0
    %829 = vmatprep.subr.mxu0 0.0
    %830 = vmatpush1.msra.mxu0 0.0
    %831 = vmatprep.subr.mxu0 0.0
    %832 = vmatpush1.msra.mxu0 0.0
    %833 = vmatprep.subr.mxu0 0.0
    %834 = vmatpush1.msra.mxu0 0.0
    %835 = vmatprep.subr.mxu0 0.0
    %836 = vmatpush1.msra.mxu0 0.0
    %837 = vmatprep.subr.mxu0 0.0
    %838 = vmatpush1.msra.mxu0 0.0
    %839 = vmatprep.subr.mxu0 0.0
    %840 = vmatpush1.msra.mxu0 0.0
    %841 = vmatprep.subr.mxu0 0.0
    %842 = vmatpush1.msra.mxu0 0.0
    %843 = vmatprep.subr.mxu0 0.0
    %844 = vmatpush1.msra.mxu0 0.0
    %845 = vmatprep.subr.mxu0 0.0
    %846 = vmatpush1.msra.mxu0 0.0
    %847 = vmatprep.subr.mxu0 0.0
    %848 = vmatpush1.msra.mxu0 0.0
    %849 = vmatprep.subr.mxu0 0.0
    %850 = vmatpush1.msra.mxu0 0.0
    %851 = vmatprep.subr.mxu0 0.0
    %852 = vmatpush1.msra.mxu0 0.0
    %853 = vmatprep.subr.mxu0 0.0
    %854 = vmatpush1.msra.mxu0 0.0
    %855 = vmatprep.subr.mxu0 0.0
    %856 = vmatpush1.msra.mxu0 0.0
    %857 = vmatprep.subr.mxu0 0.0
    %858 = vmatpush1.msra.mxu0 0.0
    %859 = vmatprep.subr.mxu0 0.0
    %860 = vmatpush1.msra.mxu0 0.0
    %861 = vmatprep.subr.mxu0 0.0
    %862 = vmatpush1.msra.mxu0 0.0
    %863 = vmatprep.subr.mxu0 0.0
    %864 = vmatpush1.msra.mxu0 0.0
    %865 = vmatprep.subr.mxu0 0.0
    %866 = vmatpush1.msra.mxu0 0.0
    %867 = vmatprep.subr.mxu0 0.0
    %868 = vmatpush1.msra.mxu0 0.0
    %869 = vmatprep.subr.mxu0 0.0
    %870 = vmatpush1.msra.mxu0 0.0
    %871 = vmatprep.mubr.f32.mxu0 0.0
    %872 = vmatmul.mubr.f32.gmra.mrb[0].mxu0 %v805
    %v873 = vpop.f32.mrb[0].mxu0
    %v874 = vadd.f32 0.0, %v873
    %v875 = vpop.f32.mrb[0].mxu0
    %v876 = vadd.f32 0.0, %v875
    %877 = vdwg.mxu0
    %v880 = vrot.slane %v874, 4
    %v881 = vrot.slane %v876, 4
    %v884 = vadd.f32 %v557, %v880
    %v885 = vadd.f32 %v558, %v881
    %v886 = vxor.u32 %v884, 2147483648
    %v887 = vxor.u32 %v885, 2147483648
    %v888 = vmul.f32 %v886, 1.442695
    %v889 = vpow.pop %v888
    %v890 = vmul.f32 %v887, 1.442695
    %v891 = vpow.pop %v890
    %v892 = vadd.f32 %v889, 1.0
    %v893 = vadd.f32 %v891, 1.0
    %v894 = vrcp.pop %v892
    %v895 = vmul.f32 1.0, %v894
    %v896 = vrcp.pop %v893
    %v897 = vmul.f32 1.0, %v896
    %v898 = vtanh.pop %v885
    %v900 = vrot.slane %v791, 6
    %v902 = vmul.f32 %v895, %v900
    %v903 = vmul.f32 %v895, %v898
    %905 = vrot.lane.b32.xlu0 %v903, 64
    %v906 = vpop.permute.xlu0 %905
    %v908 = vadd.f32 %v902, %v906
    %v909 = vtanh.pop %v908
    %v910 = vmul.f32 %v897, %v909
    %912 = vrot.lane.b32.xlu0 %v910, 64
    %v913 = vpop.permute.xlu0 %912
    %vm915 = vcmask 259076
    %916 = vst.msk [vmem:[#allocation2] sm:$0x30] %vm915, %v913
    %vm917 = vcmask 521476
    %918 = vst.msk [vmem:[#allocation2 + $0x6] sm:$0x30] %vm917, %v913
    %v919 = vrot.slane %v910, 4
    %920 = vrot.lane.b32.xlu0 %v919, 64
    %v921 = vpop.permute.xlu0 %920
    %v922 = vsel %vm577, %v921, 0
    %924 = vmatprep.subr.mxu0 %v562
    %925 = vmatpush1.msra.mxu0 %v561
    %926 = vmatprep.subr.mxu0 %v564
    %927 = vmatpush1.msra.mxu0 %v563
    %928 = vmatprep.subr.mxu0 %v566
    %929 = vmatpush1.msra.mxu0 %v565
    %930 = vmatprep.subr.mxu0 %v568
    %931 = vmatpush1.msra.mxu0 %v567
    %932 = vmatprep.subr.mxu0 %v570
    %933 = vmatpush1.msra.mxu0 %v569
    %934 = vmatprep.subr.mxu0 %v572
    %935 = vmatpush1.msra.mxu0 %v571
    %936 = vmatprep.subr.mxu0 %v574
    %937 = vmatpush1.msra.mxu0 %v573
    %938 = vmatprep.subr.mxu0 %v576
    %939 = vmatpush1.msra.mxu0 %v575
    %940 = vmatprep.subr.mxu0 0.0
    %941 = vmatpush1.msra.mxu0 0.0
    %942 = vmatprep.subr.mxu0 0.0
    %943 = vmatpush1.msra.mxu0 0.0
    %944 = vmatprep.subr.mxu0 0.0
    %945 = vmatpush1.msra.mxu0 0.0
    %946 = vmatprep.subr.mxu0 0.0
    %947 = vmatpush1.msra.mxu0 0.0
    %948 = vmatprep.subr.mxu0 0.0
    %949 = vmatpush1.msra.mxu0 0.0
    %950 = vmatprep.subr.mxu0 0.0
    %951 = vmatpush1.msra.mxu0 0.0
    %952 = vmatprep.subr.mxu0 0.0
    %953 = vmatpush1.msra.mxu0 0.0
    %954 = vmatprep.subr.mxu0 0.0
    %955 = vmatpush1.msra.mxu0 0.0
    %956 = vmatprep.subr.mxu0 0.0
    %957 = vmatpush1.msra.mxu0 0.0
    %958 = vmatprep.subr.mxu0 0.0
    %959 = vmatpush1.msra.mxu0 0.0
    %960 = vmatprep.subr.mxu0 0.0
    %961 = vmatpush1.msra.mxu0 0.0
    %962 = vmatprep.subr.mxu0 0.0
    %963 = vmatpush1.msra.mxu0 0.0
    %964 = vmatprep.subr.mxu0 0.0
    %965 = vmatpush1.msra.mxu0 0.0
    %966 = vmatprep.subr.mxu0 0.0
    %967 = vmatpush1.msra.mxu0 0.0
    %968 = vmatprep.subr.mxu0 0.0
    %969 = vmatpush1.msra.mxu0 0.0
    %970 = vmatprep.subr.mxu0 0.0
    %971 = vmatpush1.msra.mxu0 0.0
    %972 = vmatprep.subr.mxu0 0.0
    %973 = vmatpush1.msra.mxu0 0.0
    %974 = vmatprep.subr.mxu0 0.0
    %975 = vmatpush1.msra.mxu0 0.0
    %976 = vmatprep.subr.mxu0 0.0
    %977 = vmatpush1.msra.mxu0 0.0
    %978 = vmatprep.subr.mxu0 0.0
    %979 = vmatpush1.msra.mxu0 0.0
    %980 = vmatprep.subr.mxu0 0.0
    %981 = vmatpush1.msra.mxu0 0.0
    %982 = vmatprep.subr.mxu0 0.0
    %983 = vmatpush1.msra.mxu0 0.0
    %984 = vmatprep.subr.mxu0 0.0
    %985 = vmatpush1.msra.mxu0 0.0
    %986 = vmatprep.subr.mxu0 0.0
    %987 = vmatpush1.msra.mxu0 0.0
    %988 = vmatprep.mubr.f32.mxu0 0.0
    %989 = vmatmul.mubr.f32.gmra.mrb[0].mxu0 %v922
    %v990 = vpop.f32.mrb[0].mxu0
    %v991 = vadd.f32 0.0, %v990
    %v992 = vpop.f32.mrb[0].mxu0
    %v993 = vadd.f32 0.0, %v992
    %994 = vdwg.mxu0
    %v997 = vrot.slane %v991, 2
    %v998 = vrot.slane %v993, 2
    %v1001 = vadd.f32 %v557, %v997
    %v1002 = vadd.f32 %v558, %v998
    %v1003 = vxor.u32 %v1001, 2147483648
    %v1004 = vxor.u32 %v1002, 2147483648
    %v1005 = vmul.f32 %v1003, 1.442695
    %v1006 = vpow.pop %v1005
    %v1007 = vmul.f32 %v1004, 1.442695
    %v1008 = vpow.pop %v1007
    %v1009 = vadd.f32 %v1006, 1.0
    %v1010 = vadd.f32 %v1008, 1.0
    %v1011 = vrcp.pop %v1009
    %v1012 = vmul.f32 1.0, %v1011
    %v1013 = vrcp.pop %v1010
    %v1014 = vmul.f32 1.0, %v1013
    %v1015 = vtanh.pop %v1002
    %v1017 = vrot.slane %v908, 6
    %v1019 = vmul.f32 %v1012, %v1017
    %v1020 = vmul.f32 %v1012, %v1015
    %1022 = vrot.lane.b32.xlu0 %v1020, 64
    %v1023 = vpop.permute.xlu0 %1022
    %v1025 = vadd.f32 %v1019, %v1023
    %v1026 = vtanh.pop %v1025
    %v1027 = vmul.f32 %v1014, %v1026
    %1029 = vrot.lane.b32.xlu0 %v1027, 64
    %v1030 = vpop.permute.xlu0 %1029
    %vm1032 = vcmask 261126
    %1033 = vst.msk [vmem:[#allocation2] sm:$0xc0] %vm1032, %v1030
    %vm1034 = vcmask 523526
    %1035 = vst.msk [vmem:[#allocation2 + $0x2] sm:$0xc0] %vm1034, %v1030
    %v1036 = vrot.slane %v1027, 6
    %1037 = vrot.lane.b32.xlu0 %v1036, 64
    %v1038 = vpop.permute.xlu0 %1037
    %v1039 = vsel %vm577, %v1038, 0
    %1041 = vmatprep.subr.mxu0 %v562
    %1042 = vmatpush1.msra.mxu0 %v561
    %1043 = vmatprep.subr.mxu0 %v564
    %1044 = vmatpush1.msra.mxu0 %v563
    %1045 = vmatprep.subr.mxu0 %v566
    %1046 = vmatpush1.msra.mxu0 %v565
    %1047 = vmatprep.subr.mxu0 %v568
    %1048 = vmatpush1.msra.mxu0 %v567
    %1049 = vmatprep.subr.mxu0 %v570
    %1050 = vmatpush1.msra.mxu0 %v569
    %1051 = vmatprep.subr.mxu0 %v572
    %1052 = vmatpush1.msra.mxu0 %v571
    %1053 = vmatprep.subr.mxu0 %v574
    %1054 = vmatpush1.msra.mxu0 %v573
    %1055 = vmatprep.subr.mxu0 %v576
    %1056 = vmatpush1.msra.mxu0 %v575
    %1057 = vmatprep.subr.mxu0 0.0
    %1058 = vmatpush1.msra.mxu0 0.0
    %1059 = vmatprep.subr.mxu0 0.0
    %1060 = vmatpush1.msra.mxu0 0.0
    %1061 = vmatprep.subr.mxu0 0.0
    %1062 = vmatpush1.msra.mxu0 0.0
    %1063 = vmatprep.subr.mxu0 0.0
    %1064 = vmatpush1.msra.mxu0 0.0
    %1065 = vmatprep.subr.mxu0 0.0
    %1066 = vmatpush1.msra.mxu0 0.0
    %1067 = vmatprep.subr.mxu0 0.0
    %1068 = vmatpush1.msra.mxu0 0.0
    %1069 = vmatprep.subr.mxu0 0.0
    %1070 = vmatpush1.msra.mxu0 0.0
    %1071 = vmatprep.subr.mxu0 0.0
    %1072 = vmatpush1.msra.mxu0 0.0
    %1073 = vmatprep.subr.mxu0 0.0
    %1074 = vmatpush1.msra.mxu0 0.0
    %1075 = vmatprep.subr.mxu0 0.0
    %1076 = vmatpush1.msra.mxu0 0.0
    %1077 = vmatprep.subr.mxu0 0.0
    %1078 = vmatpush1.msra.mxu0 0.0
    %1079 = vmatprep.subr.mxu0 0.0
    %1080 = vmatpush1.msra.mxu0 0.0
    %1081 = vmatprep.subr.mxu0 0.0
    %1082 = vmatpush1.msra.mxu0 0.0
    %1083 = vmatprep.subr.mxu0 0.0
    %1084 = vmatpush1.msra.mxu0 0.0
    %1085 = vmatprep.subr.mxu0 0.0
    %1086 = vmatpush1.msra.mxu0 0.0
    %1087 = vmatprep.subr.mxu0 0.0
    %1088 = vmatpush1.msra.mxu0 0.0
    %1089 = vmatprep.subr.mxu0 0.0
    %1090 = vmatpush1.msra.mxu0 0.0
    %1091 = vmatprep.subr.mxu0 0.0
    %1092 = vmatpush1.msra.mxu0 0.0
    %1093 = vmatprep.subr.mxu0 0.0
    %1094 = vmatpush1.msra.mxu0 0.0
    %1095 = vmatprep.subr.mxu0 0.0
    %1096 = vmatpush1.msra.mxu0 0.0
    %1097 = vmatprep.subr.mxu0 0.0
    %1098 = vmatpush1.msra.mxu0 0.0
    %1099 = vmatprep.subr.mxu0 0.0
    %1100 = vmatpush1.msra.mxu0 0.0
    %1101 = vmatprep.subr.mxu0 0.0
    %1102 = vmatpush1.msra.mxu0 0.0
    %1103 = vmatprep.subr.mxu0 0.0
    %1104 = vmatpush1.msra.mxu0 0.0
    %1105 = vmatprep.mubr.f32.mxu0 0.0
    %1106 = vmatmul.mubr.f32.gmra.mrb[0].mxu0 %v1039
    %v1107 = vpop.f32.mrb[0].mxu0
    %v1108 = vadd.f32 0.0, %v1107
    %v1109 = vpop.f32.mrb[0].mxu0
    %v1110 = vadd.f32 0.0, %v1109
    %1111 = vdwg.mxu0
    %v1112 = vadd.f32 %v559, %v1108
    %v1113 = vadd.f32 %v560, %v1110
    %v1114 = vxor.u32 %v1112, 2147483648
    %v1115 = vxor.u32 %v1113, 2147483648
    %v1116 = vmul.f32 %v1114, 1.442695
    %v1117 = vpow.pop %v1116
    %v1118 = vmul.f32 %v1115, 1.442695
    %v1119 = vpow.pop %v1118
    %v1120 = vadd.f32 %v1117, 1.0
    %v1121 = vadd.f32 %v1119, 1.0
    %v1122 = vrcp.pop %v1120
    %v1123 = vmul.f32 1.0, %v1122
    %v1124 = vrcp.pop %v1121
    %v1125 = vmul.f32 1.0, %v1124
    %v1126 = vtanh.pop %v1113
    %v1128 = vrot.slane %v1025, 6
    %v1130 = vmul.f32 %v1123, %v1128
    %v1131 = vmul.f32 %v1123, %v1126
    %1133 = vrot.lane.b32.xlu0 %v1131, 64
    %v1134 = vpop.permute.xlu0 %1133
    %v1136 = vadd.f32 %v1130, %v1134
    %v1137 = vtanh.pop %v1136
    %v1138 = vmul.f32 %v1125, %v1137
    %1140 = vrot.lane.b32.xlu0 %v1138, 64
    %v1141 = vpop.permute.xlu0 %1140
    %1143 = vst.msk [vmem:[#allocation2 + $0x8] sm:$0x3] %vm684, %v1141
    %1144 = vst.msk [vmem:[#allocation2 + $0x6] sm:$0x3] %vm686, %v1141
    %v1145 = vsel %vm577, %v1141, 0
    %1147 = vmatprep.subr.mxu0 %v562
    %1148 = vmatpush1.msra.mxu0 %v561
    %1149 = vmatprep.subr.mxu0 %v564
    %1150 = vmatpush1.msra.mxu0 %v563
    %1151 = vmatprep.subr.mxu0 %v566
    %1152 = vmatpush1.msra.mxu0 %v565
    %1153 = vmatprep.subr.mxu0 %v568
    %1154 = vmatpush1.msra.mxu0 %v567
    %1155 = vmatprep.subr.mxu0 %v570
    %1156 = vmatpush1.msra.mxu0 %v569
    %1157 = vmatprep.subr.mxu0 %v572
    %1158 = vmatpush1.msra.mxu0 %v571
    %1159 = vmatprep.subr.mxu0 %v574
    %1160 = vmatpush1.msra.mxu0 %v573
    %1161 = vmatprep.subr.mxu0 %v576
    %1162 = vmatpush1.msra.mxu0 %v575
    %1163 = vmatprep.subr.mxu0 0.0
    %1164 = vmatpush1.msra.mxu0 0.0
    %1165 = vmatprep.subr.mxu0 0.0
    %1166 = vmatpush1.msra.mxu0 0.0
    %1167 = vmatprep.subr.mxu0 0.0
    %1168 = vmatpush1.msra.mxu0 0.0
    %1169 = vmatprep.subr.mxu0 0.0
    %1170 = vmatpush1.msra.mxu0 0.0
    %1171 = vmatprep.subr.mxu0 0.0
    %1172 = vmatpush1.msra.mxu0 0.0
    %1173 = vmatprep.subr.mxu0 0.0
    %1174 = vmatpush1.msra.mxu0 0.0
    %1175 = vmatprep.subr.mxu0 0.0
    %1176 = vmatpush1.msra.mxu0 0.0
    %1177 = vmatprep.subr.mxu0 0.0
    %1178 = vmatpush1.msra.mxu0 0.0
    %1179 = vmatprep.subr.mxu0 0.0
    %1180 = vmatpush1.msra.mxu0 0.0
    %1181 = vmatprep.subr.mxu0 0.0
    %1182 = vmatpush1.msra.mxu0 0.0
    %1183 = vmatprep.subr.mxu0 0.0
    %1184 = vmatpush1.msra.mxu0 0.0
    %1185 = vmatprep.subr.mxu0 0.0
    %1186 = vmatpush1.msra.mxu0 0.0
    %1187 = vmatprep.subr.mxu0 0.0
    %1188 = vmatpush1.msra.mxu0 0.0
    %1189 = vmatprep.subr.mxu0 0.0
    %1190 = vmatpush1.msra.mxu0 0.0
    %1191 = vmatprep.subr.mxu0 0.0
    %1192 = vmatpush1.msra.mxu0 0.0
    %1193 = vmatprep.subr.mxu0 0.0
    %1194 = vmatpush1.msra.mxu0 0.0
    %1195 = vmatprep.subr.mxu0 0.0
    %1196 = vmatpush1.msra.mxu0 0.0
    %1197 = vmatprep.subr.mxu0 0.0
    %1198 = vmatpush1.msra.mxu0 0.0
    %1199 = vmatprep.subr.mxu0 0.0
    %1200 = vmatpush1.msra.mxu0 0.0
    %1201 = vmatprep.subr.mxu0 0.0
    %1202 = vmatpush1.msra.mxu0 0.0
    %1203 = vmatprep.subr.mxu0 0.0
    %1204 = vmatpush1.msra.mxu0 0.0
    %1205 = vmatprep.subr.mxu0 0.0
    %1206 = vmatpush1.msra.mxu0 0.0
    %1207 = vmatprep.subr.mxu0 0.0
    %1208 = vmatpush1.msra.mxu0 0.0
    %1209 = vmatprep.subr.mxu0 0.0
    %1210 = vmatpush1.msra.mxu0 0.0
    %1211 = vmatprep.mubr.f32.mxu0 0.0
    %1212 = vmatmul.mubr.f32.gmra.mrb[0].mxu0 %v1145
    %v1213 = vpop.f32.mrb[0].mxu0
    %v1214 = vadd.f32 0.0, %v1213
    %v1215 = vpop.f32.mrb[0].mxu0
    %v1216 = vadd.f32 0.0, %v1215
    %1217 = vdwg.mxu0
    %v1220 = vrot.slane %v1214, 6
    %v1221 = vrot.slane %v1216, 6
    %v1224 = vadd.f32 %v559, %v1220
    %v1225 = vadd.f32 %v560, %v1221
    %v1226 = vxor.u32 %v1224, 2147483648
    %v1227 = vxor.u32 %v1225, 2147483648
    %v1228 = vmul.f32 %v1226, 1.442695
    %v1229 = vpow.pop %v1228
    %v1230 = vmul.f32 %v1227, 1.442695
    %v1231 = vpow.pop %v1230
    %v1232 = vadd.f32 %v1229, 1.0
    %v1233 = vadd.f32 %v1231, 1.0
    %v1234 = vrcp.pop %v1232
    %v1235 = vmul.f32 1.0, %v1234
    %v1236 = vrcp.pop %v1233
    %v1237 = vmul.f32 1.0, %v1236
    %v1238 = vtanh.pop %v1225
    %v1240 = vrot.slane %v1136, 6
    %v1242 = vmul.f32 %v1235, %v1240
    %v1243 = vmul.f32 %v1235, %v1238
    %1245 = vrot.lane.b32.xlu0 %v1243, 64
    %v1246 = vpop.permute.xlu0 %1245
    %v1248 = vadd.f32 %v1242, %v1246
    %v1249 = vtanh.pop %v1248
    %v1250 = vmul.f32 %v1237, %v1249
    %1252 = vrot.lane.b32.xlu0 %v1250, 64
    %v1253 = vpop.permute.xlu0 %1252
    %1255 = vst.msk [vmem:[#allocation2 + $0x8] sm:$0xc] %vm798, %v1253
    %1256 = vst.msk [vmem:[#allocation2 + $0x2] sm:$0xc] %vm800, %v1253
    %v1257 = vrot.slane %v1250, 2
    %1258 = vrot.lane.b32.xlu0 %v1257, 64
    %v1259 = vpop.permute.xlu0 %1258
    %v1260 = vsel %vm577, %v1259, 0
    %1262 = vmatprep.subr.mxu0 %v562
    %1263 = vmatpush1.msra.mxu0 %v561
    %1264 = vmatprep.subr.mxu0 %v564
    %1265 = vmatpush1.msra.mxu0 %v563
    %1266 = vmatprep.subr.mxu0 %v566
    %1267 = vmatpush1.msra.mxu0 %v565
    %1268 = vmatprep.subr.mxu0 %v568
    %1269 = vmatpush1.msra.mxu0 %v567
    %1270 = vmatprep.subr.mxu0 %v570
    %1271 = vmatpush1.msra.mxu0 %v569
    %1272 = vmatprep.subr.mxu0 %v572
    %1273 = vmatpush1.msra.mxu0 %v571
    %1274 = vmatprep.subr.mxu0 %v574
    %1275 = vmatpush1.msra.mxu0 %v573
    %1276 = vmatprep.subr.mxu0 %v576
    %1277 = vmatpush1.msra.mxu0 %v575
    %1278 = vmatprep.subr.mxu0 0.0
    %1279 = vmatpush1.msra.mxu0 0.0
    %1280 = vmatprep.subr.mxu0 0.0
    %1281 = vmatpush1.msra.mxu0 0.0
    %1282 = vmatprep.subr.mxu0 0.0
    %1283 = vmatpush1.msra.mxu0 0.0
    %1284 = vmatprep.subr.mxu0 0.0
    %1285 = vmatpush1.msra.mxu0 0.0
    %1286 = vmatprep.subr.mxu0 0.0
    %1287 = vmatpush1.msra.mxu0 0.0
    %1288 = vmatprep.subr.mxu0 0.0
    %1289 = vmatpush1.msra.mxu0 0.0
    %1290 = vmatprep.subr.mxu0 0.0
    %1291 = vmatpush1.msra.mxu0 0.0
    %1292 = vmatprep.subr.mxu0 0.0
    %1293 = vmatpush1.msra.mxu0 0.0
    %1294 = vmatprep.subr.mxu0 0.0
    %1295 = vmatpush1.msra.mxu0 0.0
    %1296 = vmatprep.subr.mxu0 0.0
    %1297 = vmatpush1.msra.mxu0 0.0
    %1298 = vmatprep.subr.mxu0 0.0
    %1299 = vmatpush1.msra.mxu0 0.0
    %1300 = vmatprep.subr.mxu0 0.0
    %1301 = vmatpush1.msra.mxu0 0.0
    %1302 = vmatprep.subr.mxu0 0.0
    %1303 = vmatpush1.msra.mxu0 0.0
    %1304 = vmatprep.subr.mxu0 0.0
    %1305 = vmatpush1.msra.mxu0 0.0
    %1306 = vmatprep.subr.mxu0 0.0
    %1307 = vmatpush1.msra.mxu0 0.0
    %1308 = vmatprep.subr.mxu0 0.0
    %1309 = vmatpush1.msra.mxu0 0.0
    %1310 = vmatprep.subr.mxu0 0.0
    %1311 = vmatpush1.msra.mxu0 0.0
    %1312 = vmatprep.subr.mxu0 0.0
    %1313 = vmatpush1.msra.mxu0 0.0
    %1314 = vmatprep.subr.mxu0 0.0
    %1315 = vmatpush1.msra.mxu0 0.0
    %1316 = vmatprep.subr.mxu0 0.0
    %1317 = vmatpush1.msra.mxu0 0.0
    %1318 = vmatprep.subr.mxu0 0.0
    %1319 = vmatpush1.msra.mxu0 0.0
    %1320 = vmatprep.subr.mxu0 0.0
    %1321 = vmatpush1.msra.mxu0 0.0
    %1322 = vmatprep.subr.mxu0 0.0
    %1323 = vmatpush1.msra.mxu0 0.0
    %1324 = vmatprep.subr.mxu0 0.0
    %1325 = vmatpush1.msra.mxu0 0.0
    %1326 = vmatprep.mubr.f32.mxu0 0.0
    %1327 = vmatmul.mubr.f32.gmra.mrb[0].mxu0 %v1260
    %v1328 = vpop.f32.mrb[0].mxu0
    %v1329 = vadd.f32 0.0, %v1328
    %v1330 = vpop.f32.mrb[0].mxu0
    %v1331 = vadd.f32 0.0, %v1330
    %1332 = vdwg.mxu0
    %v1335 = vrot.slane %v1329, 4
    %v1336 = vrot.slane %v1331, 4
    %v1339 = vadd.f32 %v559, %v1335
    %v1340 = vadd.f32 %v560, %v1336
    %v1341 = vxor.u32 %v1339, 2147483648
    %v1342 = vxor.u32 %v1340, 2147483648
    %v1343 = vmul.f32 %v1341, 1.442695
    %v1344 = vpow.pop %v1343
    %v1345 = vmul.f32 %v1342, 1.442695
    %v1346 = vpow.pop %v1345
    %v1347 = vadd.f32 %v1344, 1.0
    %v1348 = vadd.f32 %v1346, 1.0
    %v1349 = vrcp.pop %v1347
    %v1350 = vmul.f32 1.0, %v1349
    %v1351 = vrcp.pop %v1348
    %v1352 = vmul.f32 1.0, %v1351
    %v1353 = vtanh.pop %v1340
    %v1355 = vrot.slane %v1248, 6
    %v1357 = vmul.f32 %v1350, %v1355
    %v1358 = vmul.f32 %v1350, %v1353
    %1360 = vrot.lane.b32.xlu0 %v1358, 64
    %v1361 = vpop.permute.xlu0 %1360
    %v1363 = vadd.f32 %v1357, %v1361
    %v1364 = vtanh.pop %v1363
    %v1365 = vmul.f32 %v1352, %v1364
    %1367 = vrot.lane.b32.xlu0 %v1365, 64
    %v1368 = vpop.permute.xlu0 %1367
    %1370 = vst.msk [vmem:[#allocation2 + $0x8] sm:$0x30] %vm915, %v1368
    %1371 = vst.msk [vmem:[#allocation2 - $0x2] sm:$0x30] %vm917, %v1368
    %v1372 = vrot.slane %v1365, 4
    %1373 = vrot.lane.b32.xlu0 %v1372, 64
    %v1374 = vpop.permute.xlu0 %1373
    %v1375 = vsel %vm577, %v1374, 0
    %1377 = vmatprep.subr.mxu0 %v562
    %1378 = vmatpush1.msra.mxu0 %v561
    %1379 = vmatprep.subr.mxu0 %v564
    %1380 = vmatpush1.msra.mxu0 %v563
    %1381 = vmatprep.subr.mxu0 %v566
    %1382 = vmatpush1.msra.mxu0 %v565
    %1383 = vmatprep.subr.mxu0 %v568
    %1384 = vmatpush1.msra.mxu0 %v567
    %1385 = vmatprep.subr.mxu0 %v570
    %1386 = vmatpush1.msra.mxu0 %v569
    %1387 = vmatprep.subr.mxu0 %v572
    %1388 = vmatpush1.msra.mxu0 %v571
    %1389 = vmatprep.subr.mxu0 %v574
    %1390 = vmatpush1.msra.mxu0 %v573
    %1391 = vmatprep.subr.mxu0 %v576
    %1392 = vmatpush1.msra.mxu0 %v575
    %1393 = vmatprep.subr.mxu0 0.0
    %1394 = vmatpush1.msra.mxu0 0.0
    %1395 = vmatprep.subr.mxu0 0.0
    %1396 = vmatpush1.msra.mxu0 0.0
    %1397 = vmatprep.subr.mxu0 0.0
    %1398 = vmatpush1.msra.mxu0 0.0
    %1399 = vmatprep.subr.mxu0 0.0
    %1400 = vmatpush1.msra.mxu0 0.0
    %1401 = vmatprep.subr.mxu0 0.0
    %1402 = vmatpush1.msra.mxu0 0.0
    %1403 = vmatprep.subr.mxu0 0.0
    %1404 = vmatpush1.msra.mxu0 0.0
    %1405 = vmatprep.subr.mxu0 0.0
    %1406 = vmatpush1.msra.mxu0 0.0
    %1407 = vmatprep.subr.mxu0 0.0
    %1408 = vmatpush1.msra.mxu0 0.0
    %1409 = vmatprep.subr.mxu0 0.0
    %1410 = vmatpush1.msra.mxu0 0.0
    %1411 = vmatprep.subr.mxu0 0.0
    %1412 = vmatpush1.msra.mxu0 0.0
    %1413 = vmatprep.subr.mxu0 0.0
    %1414 = vmatpush1.msra.mxu0 0.0
    %1415 = vmatprep.subr.mxu0 0.0
    %1416 = vmatpush1.msra.mxu0 0.0
    %1417 = vmatprep.subr.mxu0 0.0
    %1418 = vmatpush1.msra.mxu0 0.0
    %1419 = vmatprep.subr.mxu0 0.0
    %1420 = vmatpush1.msra.mxu0 0.0
    %1421 = vmatprep.subr.mxu0 0.0
    %1422 = vmatpush1.msra.mxu0 0.0
    %1423 = vmatprep.subr.mxu0 0.0
    %1424 = vmatpush1.msra.mxu0 0.0
    %1425 = vmatprep.subr.mxu0 0.0
    %1426 = vmatpush1.msra.mxu0 0.0
    %1427 = vmatprep.subr.mxu0 0.0
    %1428 = vmatpush1.msra.mxu0 0.0
    %1429 = vmatprep.subr.mxu0 0.0
    %1430 = vmatpush1.msra.mxu0 0.0
    %1431 = vmatprep.subr.mxu0 0.0
    %1432 = vmatpush1.msra.mxu0 0.0
    %1433 = vmatprep.subr.mxu0 0.0
    %1434 = vmatpush1.msra.mxu0 0.0
    %1435 = vmatprep.subr.mxu0 0.0
    %1436 = vmatpush1.msra.mxu0 0.0
    %1437 = vmatprep.subr.mxu0 0.0
    %1438 = vmatpush1.msra.mxu0 0.0
    %1439 = vmatprep.subr.mxu0 0.0
    %1440 = vmatpush1.msra.mxu0 0.0
    %1441 = vmatprep.mubr.f32.mxu0 0.0
    %1442 = vmatmul.mubr.f32.gmra.mrb[0].mxu0 %v1375
    %v1443 = vpop.f32.mrb[0].mxu0
    %v1444 = vadd.f32 0.0, %v1443
    %v1445 = vpop.f32.mrb[0].mxu0
    %v1446 = vadd.f32 0.0, %v1445
    %1447 = vdwg.mxu0
    %v1450 = vrot.slane %v1444, 2
    %v1451 = vrot.slane %v1446, 2
    %v1454 = vadd.f32 %v559, %v1450
    %v1455 = vadd.f32 %v560, %v1451
    %v1456 = vxor.u32 %v1454, 2147483648
    %v1457 = vxor.u32 %v1455, 2147483648
    %v1458 = vmul.f32 %v1456, 1.442695
    %v1459 = vpow.pop %v1458
    %v1460 = vmul.f32 %v1457, 1.442695
    %v1461 = vpow.pop %v1460
    %v1462 = vadd.f32 %v1459, 1.0
    %v1463 = vadd.f32 %v1461, 1.0
    %v1464 = vrcp.pop %v1462
    %v1465 = vmul.f32 1.0, %v1464
    %v1466 = vrcp.pop %v1463
    %v1467 = vmul.f32 1.0, %v1466
    %v1468 = vtanh.pop %v1455
    %v1470 = vrot.slane %v1363, 6
    %v1472 = vmul.f32 %v1465, %v1470
    %v1473 = vmul.f32 %v1465, %v1468
    %1475 = vrot.lane.b32.xlu0 %v1473, 64
    %v1476 = vpop.permute.xlu0 %1475
    %v1478 = vadd.f32 %v1472, %v1476
    %v1479 = vtanh.pop %v1478
    %v1480 = vmul.f32 %v1467, %v1479
    %1482 = vrot.lane.b32.xlu0 %v1480, 64
    %v1483 = vpop.permute.xlu0 %1482
    %1485 = vst.msk [vmem:[#allocation2 + $0x8] sm:$0xc0] %vm1032, %v1483
    %1486 = vst.msk [vmem:[#allocation2 - $0x6] sm:$0xc0] %vm1034, %v1483
    %1487 = vst.msk [vmem:[#allocation12 - $0x6] sm:$0xc0] %vm1032, %v1483
    %1488 = vrot.lane.b32.xlu0 %v1480, 32
    %v1489 = vpop.permute.xlu0 %1488
    %s1491 = scalar_lea.vmem [#allocation12], 2
    %1492 = vst.msk [vmem:[%s1491 - $0x6] sm:$0xc0] %vm1032, %v1489
    %1494 = vrot.lane.b32.xlu0 %v1478, 64
    %v1495 = vpop.permute.xlu0 %1494
    %1497 = vst.msk [vmem:[#allocation13 - $0x6] sm:$0xc0] %vm1032, %v1495
    %1498 = vrot.lane.b32.xlu0 %v1478, 32
    %v1499 = vpop.permute.xlu0 %1498
    %s1501 = scalar_lea.vmem [#allocation13], 2
    %1502 = vst.msk [vmem:[%s1501 - $0x6] sm:$0xc0] %vm1032, %v1499
    %s1503 = scalar_lea.vmem %s12, 4
    %v1504 = vld [vmem:[%s1503] sm:$0x3]
    %s1505 = scalar_lea.vmem %s12, 6
    %v1506 = vld [vmem:[%s1505] sm:$0x3]
    %1508 = vrot.lane.b32.xlu0 %v1506, 32
    %v1509 = vpop.permute.xlu0 %1508
    %v1511 = vsel %vm271, %v1504, %v1509
    %s1512 = scalar_lea.vmem %s13, 4
    %v1513 = vld [vmem:[%s1512] sm:$0x3]
    %s1514 = scalar_lea.vmem %s13, 6
    %v1515 = vld [vmem:[%s1514] sm:$0x3]
    %1517 = vrot.lane.b32.xlu0 %v1515, 32
    %v1518 = vpop.permute.xlu0 %1517
    %v1520 = vsel %vm271, %v1513, %v1518
    %v1521 = vld [vmem:[#allocation2] sm:$0xff]
    %v1522 = vld [vmem:[#allocation2 + $0x8] sm:$0xff]
    %1523 = vmatprep.subr.mxu0 0.0
    %1524 = vmatpush1.msra.mxu0 %v1521
    %1525 = vmatprep.subr.mxu0 0.0
    %1526 = vmatpush1.msra.mxu0 %v1522
    %1527 = vmatprep.subr.mxu0 0.0
    %1528 = vmatpush1.msra.mxu0 0.0
    %1529 = vmatprep.subr.mxu0 0.0
    %1530 = vmatpush1.msra.mxu0 0.0
    %1531 = vmatprep.subr.mxu0 0.0
    %1532 = vmatpush1.msra.mxu0 0.0
    %1533 = vmatprep.subr.mxu0 0.0
    %1534 = vmatpush1.msra.mxu0 0.0
    %1535 = vmatprep.subr.mxu0 0.0
    %1536 = vmatpush1.msra.mxu0 0.0
    %1537 = vmatprep.subr.mxu0 0.0
    %1538 = vmatpush1.msra.mxu0 0.0
    %1539 = vmatprep.subr.mxu0 0.0
    %1540 = vmatpush1.msra.mxu0 0.0
    %1541 = vmatprep.subr.mxu0 0.0
    %1542 = vmatpush1.msra.mxu0 0.0
    %1543 = vmatprep.subr.mxu0 0.0
    %1544 = vmatpush1.msra.mxu0 0.0
    %1545 = vmatprep.subr.mxu0 0.0
    %1546 = vmatpush1.msra.mxu0 0.0
    %1547 = vmatprep.subr.mxu0 0.0
    %1548 = vmatpush1.msra.mxu0 0.0
    %1549 = vmatprep.subr.mxu0 0.0
    %1550 = vmatpush1.msra.mxu0 0.0
    %1551 = vmatprep.subr.mxu0 0.0
    %1552 = vmatpush1.msra.mxu0 0.0
    %1553 = vmatprep.subr.mxu0 0.0
    %1554 = vmatpush1.msra.mxu0 0.0
    %1555 = vmatprep.subr.mxu0 0.0
    %1556 = vmatpush1.msra.mxu0 0.0
    %1557 = vmatprep.subr.mxu0 0.0
    %1558 = vmatpush1.msra.mxu0 0.0
    %1559 = vmatprep.subr.mxu0 0.0
    %1560 = vmatpush1.msra.mxu0 0.0
    %1561 = vmatprep.subr.mxu0 0.0
    %1562 = vmatpush1.msra.mxu0 0.0
    %1563 = vmatprep.subr.mxu0 0.0
    %1564 = vmatpush1.msra.mxu0 0.0
    %1565 = vmatprep.subr.mxu0 0.0
    %1566 = vmatpush1.msra.mxu0 0.0
    %1567 = vmatprep.subr.mxu0 0.0
    %1568 = vmatpush1.msra.mxu0 0.0
    %1569 = vmatprep.subr.mxu0 0.0
    %1570 = vmatpush1.msra.mxu0 0.0
    %1571 = vmatprep.subr.mxu0 0.0
    %1572 = vmatpush1.msra.mxu0 0.0
    %1573 = vmatprep.subr.mxu0 0.0
    %1574 = vmatpush1.msra.mxu0 0.0
    %1575 = vmatprep.subr.mxu0 0.0
    %1576 = vmatpush1.msra.mxu0 0.0
    %1577 = vmatprep.subr.mxu0 0.0
    %1578 = vmatpush1.msra.mxu0 0.0
    %1579 = vmatprep.subr.mxu0 0.0
    %1580 = vmatpush1.msra.mxu0 0.0
    %1581 = vmatprep.subr.mxu0 0.0
    %1582 = vmatpush1.msra.mxu0 0.0
    %1583 = vmatprep.subr.mxu0 0.0
    %1584 = vmatpush1.msra.mxu0 0.0
    %1585 = vmatprep.subr.mxu0 0.0
    %1586 = vmatpush1.msra.mxu0 0.0
    %1587 = vmatprep.mubr.f32.mxu0 0.0
    %1588 = vmatmul.mubr.f32.gmra.mrb[0].mxu0 %v283
    %v1589 = vpop.f32.mrb[0].mxu0
    %v1590 = vadd.f32 0.0, %v1589
    %v1591 = vpop.f32.mrb[0].mxu0
    %1592 = vmatprep.mubr.f32.mxu0 0.0
    %1593 = vmatmul.mubr.f32.gmra.mrb[0].mxu0 %v286
    %v1594 = vpop.f32.mrb[0].mxu0
    %v1595 = vadd.f32 0.0, %v1594
    %v1596 = vpop.f32.mrb[0].mxu0
    %1597 = vdwg.mxu0
    %v1598 = vld [vmem:[%s8] sm:$0xff]
    %v1599 = vld [vmem:[%s8 + $0x8] sm:$0xff]
    %v1600 = vld [vmem:[%s8 + $0x10] sm:$0xff]
    %v1601 = vld [vmem:[%s8 + $0x18] sm:$0xff]
    %v1602 = vld [vmem:[%s8 + $0x20] sm:$0xff]
    %v1603 = vld [vmem:[%s8 + $0x28] sm:$0xff]
    %v1604 = vld [vmem:[%s8 + $0x30] sm:$0xff]
    %v1605 = vld [vmem:[%s8 + $0x38] sm:$0xff]
    %v1606 = vld [vmem:[%s8 + $0x40] sm:$0xff]
    %v1607 = vld [vmem:[%s8 + $0x48] sm:$0xff]
    %v1608 = vld [vmem:[%s8 + $0x50] sm:$0xff]
    %v1609 = vld [vmem:[%s8 + $0x58] sm:$0xff]
    %v1610 = vld [vmem:[%s8 + $0x60] sm:$0xff]
    %v1611 = vld [vmem:[%s8 + $0x68] sm:$0xff]
    %v1612 = vld [vmem:[%s8 + $0x70] sm:$0xff]
    %v1613 = vld [vmem:[%s8 + $0x78] sm:$0xff]
    %v1614 = vld [vmem:[%s9] sm:$0xff]
    %v1615 = vld [vmem:[%s9 + $0x8] sm:$0xff]
    %v1616 = vld [vmem:[%s9 + $0x10] sm:$0xff]
    %v1617 = vld [vmem:[%s9 + $0x18] sm:$0xff]
    %v1618 = vld [vmem:[%s9 + $0x20] sm:$0xff]
    %v1619 = vld [vmem:[%s9 + $0x28] sm:$0xff]
    %v1620 = vld [vmem:[%s9 + $0x30] sm:$0xff]
    %v1621 = vld [vmem:[%s9 + $0x38] sm:$0xff]
    %v1622 = vld [vmem:[%s9 + $0x40] sm:$0xff]
    %v1623 = vld [vmem:[%s9 + $0x48] sm:$0xff]
    %v1624 = vld [vmem:[%s9 + $0x50] sm:$0xff]
    %v1625 = vld [vmem:[%s9 + $0x58] sm:$0xff]
    %v1626 = vld [vmem:[%s9 + $0x60] sm:$0xff]
    %v1627 = vld [vmem:[%s9 + $0x68] sm:$0xff]
    %v1628 = vld [vmem:[%s9 + $0x70] sm:$0xff]
    %v1629 = vld [vmem:[%s9 + $0x78] sm:$0xff]
    %v1631 = vsel %vm577, %v1590, 0
    %v1634 = vsel %vm577, %v1595, 0
    %1636 = vmatprep.subr.mxu0 %v1615
    %1637 = vmatpush1.msra.mxu0 %v1614
    %1638 = vmatprep.subr.mxu0 %v1617
    %1639 = vmatpush1.msra.mxu0 %v1616
    %1640 = vmatprep.subr.mxu0 %v1619
    %1641 = vmatpush1.msra.mxu0 %v1618
    %1642 = vmatprep.subr.mxu0 %v1621
    %1643 = vmatpush1.msra.mxu0 %v1620
    %1644 = vmatprep.subr.mxu0 %v1623
    %1645 = vmatpush1.msra.mxu0 %v1622
    %1646 = vmatprep.subr.mxu0 %v1625
    %1647 = vmatpush1.msra.mxu0 %v1624
    %1648 = vmatprep.subr.mxu0 %v1627
    %1649 = vmatpush1.msra.mxu0 %v1626
    %1650 = vmatprep.subr.mxu0 %v1629
    %1651 = vmatpush1.msra.mxu0 %v1628
    %1652 = vmatprep.subr.mxu0 0.0
    %1653 = vmatpush1.msra.mxu0 0.0
    %1654 = vmatprep.subr.mxu0 0.0
    %1655 = vmatpush1.msra.mxu0 0.0
    %1656 = vmatprep.subr.mxu0 0.0
    %1657 = vmatpush1.msra.mxu0 0.0
    %1658 = vmatprep.subr.mxu0 0.0
    %1659 = vmatpush1.msra.mxu0 0.0
    %1660 = vmatprep.subr.mxu0 0.0
    %1661 = vmatpush1.msra.mxu0 0.0
    %1662 = vmatprep.subr.mxu0 0.0
    %1663 = vmatpush1.msra.mxu0 0.0
    %1664 = vmatprep.subr.mxu0 0.0
    %1665 = vmatpush1.msra.mxu0 0.0
    %1666 = vmatprep.subr.mxu0 0.0
    %1667 = vmatpush1.msra.mxu0 0.0
    %1668 = vmatprep.subr.mxu0 0.0
    %1669 = vmatpush1.msra.mxu0 0.0
    %1670 = vmatprep.subr.mxu0 0.0
    %1671 = vmatpush1.msra.mxu0 0.0
    %1672 = vmatprep.subr.mxu0 0.0
    %1673 = vmatpush1.msra.mxu0 0.0
    %1674 = vmatprep.subr.mxu0 0.0
    %1675 = vmatpush1.msra.mxu0 0.0
    %1676 = vmatprep.subr.mxu0 0.0
    %1677 = vmatpush1.msra.mxu0 0.0
    %1678 = vmatprep.subr.mxu0 0.0
    %1679 = vmatpush1.msra.mxu0 0.0
    %1680 = vmatprep.subr.mxu0 0.0
    %1681 = vmatpush1.msra.mxu0 0.0
    %1682 = vmatprep.subr.mxu0 0.0
    %1683 = vmatpush1.msra.mxu0 0.0
    %1684 = vmatprep.subr.mxu0 0.0
    %1685 = vmatpush1.msra.mxu0 0.0
    %1686 = vmatprep.subr.mxu0 0.0
    %1687 = vmatpush1.msra.mxu0 0.0
    %1688 = vmatprep.subr.mxu0 0.0
    %1689 = vmatpush1.msra.mxu0 0.0
    %1690 = vmatprep.subr.mxu0 0.0
    %1691 = vmatpush1.msra.mxu0 0.0
    %1692 = vmatprep.subr.mxu0 0.0
    %1693 = vmatpush1.msra.mxu0 0.0
    %1694 = vmatprep.subr.mxu0 0.0
    %1695 = vmatpush1.msra.mxu0 0.0
    %1696 = vmatprep.subr.mxu0 0.0
    %1697 = vmatpush1.msra.mxu0 0.0
    %1698 = vmatprep.subr.mxu0 0.0
    %1699 = vmatpush1.msra.mxu0 0.0
    %1700 = vmatprep.mubr.f32.mxu0 0.0
    %1701 = vmatmul.mubr.f32.gmra.mrb[0].mxu0 %v1631
    %v1702 = vpop.f32.mrb[0].mxu0
    %v1703 = vadd.f32 0.0, %v1702
    %v1704 = vpop.f32.mrb[0].mxu0
    %v1705 = vadd.f32 0.0, %v1704
    %1706 = vmatprep.mubr.f32.mxu0 0.0
    %1707 = vmatmul.mubr.f32.gmra.mrb[0].mxu0 %v1634
    %v1708 = vpop.f32.mrb[0].mxu0
    %v1709 = vadd.f32 0.0, %v1708
    %v1710 = vpop.f32.mrb[0].mxu0
    %v1711 = vadd.f32 0.0, %v1710
    %1712 = vdwg.mxu0
    %v1714 = vsel %vm577, %v1521, 0
    %v1717 = vsel %vm577, %v1522, 0
    %1719 = vmatprep.subr.mxu0 %v1599
    %1720 = vmatpush1.msra.mxu0 %v1598
    %1721 = vmatprep.subr.mxu0 %v1601
    %1722 = vmatpush1.msra.mxu0 %v1600
    %1723 = vmatprep.subr.mxu0 %v1603
    %1724 = vmatpush1.msra.mxu0 %v1602
    %1725 = vmatprep.subr.mxu0 %v1605
    %1726 = vmatpush1.msra.mxu0 %v1604
    %1727 = vmatprep.subr.mxu0 %v1607
    %1728 = vmatpush1.msra.mxu0 %v1606
    %1729 = vmatprep.subr.mxu0 %v1609
    %1730 = vmatpush1.msra.mxu0 %v1608
    %1731 = vmatprep.subr.mxu0 %v1611
    %1732 = vmatpush1.msra.mxu0 %v1610
    %1733 = vmatprep.subr.mxu0 %v1613
    %1734 = vmatpush1.msra.mxu0 %v1612
    %1735 = vmatprep.subr.mxu0 0.0
    %1736 = vmatpush1.msra.mxu0 0.0
    %1737 = vmatprep.subr.mxu0 0.0
    %1738 = vmatpush1.msra.mxu0 0.0
    %1739 = vmatprep.subr.mxu0 0.0
    %1740 = vmatpush1.msra.mxu0 0.0
    %1741 = vmatprep.subr.mxu0 0.0
    %1742 = vmatpush1.msra.mxu0 0.0
    %1743 = vmatprep.subr.mxu0 0.0
    %1744 = vmatpush1.msra.mxu0 0.0
    %1745 = vmatprep.subr.mxu0 0.0
    %1746 = vmatpush1.msra.mxu0 0.0
    %1747 = vmatprep.subr.mxu0 0.0
    %1748 = vmatpush1.msra.mxu0 0.0
    %1749 = vmatprep.subr.mxu0 0.0
    %1750 = vmatpush1.msra.mxu0 0.0
    %1751 = vmatprep.subr.mxu0 0.0
    %1752 = vmatpush1.msra.mxu0 0.0
    %1753 = vmatprep.subr.mxu0 0.0
    %1754 = vmatpush1.msra.mxu0 0.0
    %1755 = vmatprep.subr.mxu0 0.0
    %1756 = vmatpush1.msra.mxu0 0.0
    %1757 = vmatprep.subr.mxu0 0.0
    %1758 = vmatpush1.msra.mxu0 0.0
    %1759 = vmatprep.subr.mxu0 0.0
    %1760 = vmatpush1.msra.mxu0 0.0
    %1761 = vmatprep.subr.mxu0 0.0
    %1762 = vmatpush1.msra.mxu0 0.0
    %1763 = vmatprep.subr.mxu0 0.0
    %1764 = vmatpush1.msra.mxu0 0.0
    %1765 = vmatprep.subr.mxu0 0.0
    %1766 = vmatpush1.msra.mxu0 0.0
    %1767 = vmatprep.subr.mxu0 0.0
    %1768 = vmatpush1.msra.mxu0 0.0
    %1769 = vmatprep.subr.mxu0 0.0
    %1770 = vmatpush1.msra.mxu0 0.0
    %1771 = vmatprep.subr.mxu0 0.0
    %1772 = vmatpush1.msra.mxu0 0.0
    %1773 = vmatprep.subr.mxu0 0.0
    %1774 = vmatpush1.msra.mxu0 0.0
    %1775 = vmatprep.subr.mxu0 0.0
    %1776 = vmatpush1.msra.mxu0 0.0
    %1777 = vmatprep.subr.mxu0 0.0
    %1778 = vmatpush1.msra.mxu0 0.0
    %1779 = vmatprep.subr.mxu0 0.0
    %1780 = vmatpush1.msra.mxu0 0.0
    %1781 = vmatprep.subr.mxu0 0.0
    %1782 = vmatpush1.msra.mxu0 0.0
    %1783 = vmatprep.mubr.f32.mxu0 0.0
    %1784 = vmatmul.mubr.f32.gmra.mrb[0].mxu0 %v1714
    %v1785 = vpop.f32.mrb[0].mxu0
    %v1786 = vadd.f32 %v1703, %v1785
    %v1787 = vpop.f32.mrb[0].mxu0
    %v1788 = vadd.f32 %v1705, %v1787
    %1789 = vmatprep.mubr.f32.mxu0 0.0
    %1790 = vmatmul.mubr.f32.gmra.mrb[0].mxu0 %v1717
    %v1791 = vpop.f32.mrb[0].mxu0
    %v1792 = vadd.f32 %v1709, %v1791
    %v1793 = vpop.f32.mrb[0].mxu0
    %v1794 = vadd.f32 %v1711, %v1793
    %1795 = vdwg.mxu0
    %v1796 = vld [vmem:[#allocation11] sm:$0x3]
    %v1798 = vlaneseq
    %v1799 = vshrl.u32 %v1798, 7
    %v1800 = vsub.s32 0, %v1799
    %v1801 = vrot.slane %v1796, %v1800
    %v1802 = vlaneseq
    %v1803 = vshrl.u32 %v1802, 7
    %v1804 = vsub.s32 1, %v1803
    %v1805 = vrot.slane %v1796, %v1804
    %v1808 = vadd.f32 %v1786, %v1801
    %v1809 = vadd.f32 %v1788, %v1805
    %v1810 = vadd.f32 %v1792, %v1801
    %v1811 = vadd.f32 %v1794, %v1805
    %v1812 = vld [vmem:[#allocation9] sm:$0xff]
    %v1813 = vld [vmem:[#allocation9 + $0x8] sm:$0xff]
    %v1814 = vld [vmem:[#allocation9 + $0x10] sm:$0xff]
    %v1815 = vld [vmem:[#allocation9 + $0x18] sm:$0xff]
    %v1816 = vld [vmem:[#allocation9 + $0x20] sm:$0xff]
    %v1817 = vld [vmem:[#allocation9 + $0x28] sm:$0xff]
    %v1818 = vld [vmem:[#allocation9 + $0x30] sm:$0xff]
    %v1819 = vld [vmem:[#allocation9 + $0x38] sm:$0xff]
    %v1820 = vld [vmem:[#allocation9 + $0x40] sm:$0xff]
    %v1821 = vld [vmem:[#allocation9 + $0x48] sm:$0xff]
    %v1822 = vld [vmem:[#allocation9 + $0x50] sm:$0xff]
    %v1823 = vld [vmem:[#allocation9 + $0x58] sm:$0xff]
    %v1824 = vld [vmem:[#allocation9 + $0x60] sm:$0xff]
    %v1825 = vld [vmem:[#allocation9 + $0x68] sm:$0xff]
    %v1826 = vld [vmem:[#allocation9 + $0x70] sm:$0xff]
    %v1827 = vld [vmem:[#allocation9 + $0x78] sm:$0xff]
    %v1829 = vsel %vm577, %v1511, 0
    %1831 = vmatprep.subr.mxu0 %v1813
    %1832 = vmatpush1.msra.mxu0 %v1812
    %1833 = vmatprep.subr.mxu0 %v1815
    %1834 = vmatpush1.msra.mxu0 %v1814
    %1835 = vmatprep.subr.mxu0 %v1817
    %1836 = vmatpush1.msra.mxu0 %v1816
    %1837 = vmatprep.subr.mxu0 %v1819
    %1838 = vmatpush1.msra.mxu0 %v1818
    %1839 = vmatprep.subr.mxu0 %v1821
    %1840 = vmatpush1.msra.mxu0 %v1820
    %1841 = vmatprep.subr.mxu0 %v1823
    %1842 = vmatpush1.msra.mxu0 %v1822
    %1843 = vmatprep.subr.mxu0 %v1825
    %1844 = vmatpush1.msra.mxu0 %v1824
    %1845 = vmatprep.subr.mxu0 %v1827
    %1846 = vmatpush1.msra.mxu0 %v1826
    %1847 = vmatprep.subr.mxu0 0.0
    %1848 = vmatpush1.msra.mxu0 0.0
    %1849 = vmatprep.subr.mxu0 0.0
    %1850 = vmatpush1.msra.mxu0 0.0
    %1851 = vmatprep.subr.mxu0 0.0
    %1852 = vmatpush1.msra.mxu0 0.0
    %1853 = vmatprep.subr.mxu0 0.0
    %1854 = vmatpush1.msra.mxu0 0.0
    %1855 = vmatprep.subr.mxu0 0.0
    %1856 = vmatpush1.msra.mxu0 0.0
    %1857 = vmatprep.subr.mxu0 0.0
    %1858 = vmatpush1.msra.mxu0 0.0
    %1859 = vmatprep.subr.mxu0 0.0
    %1860 = vmatpush1.msra.mxu0 0.0
    %1861 = vmatprep.subr.mxu0 0.0
    %1862 = vmatpush1.msra.mxu0 0.0
    %1863 = vmatprep.subr.mxu0 0.0
    %1864 = vmatpush1.msra.mxu0 0.0
    %1865 = vmatprep.subr.mxu0 0.0
    %1866 = vmatpush1.msra.mxu0 0.0
    %1867 = vmatprep.subr.mxu0 0.0
    %1868 = vmatpush1.msra.mxu0 0.0
    %1869 = vmatprep.subr.mxu0 0.0
    %1870 = vmatpush1.msra.mxu0 0.0
    %1871 = vmatprep.subr.mxu0 0.0
    %1872 = vmatpush1.msra.mxu0 0.0
    %1873 = vmatprep.subr.mxu0 0.0
    %1874 = vmatpush1.msra.mxu0 0.0
    %1875 = vmatprep.subr.mxu0 0.0
    %1876 = vmatpush1.msra.mxu0 0.0
    %1877 = vmatprep.subr.mxu0 0.0
    %1878 = vmatpush1.msra.mxu0 0.0
    %1879 = vmatprep.subr.mxu0 0.0
    %1880 = vmatpush1.msra.mxu0 0.0
    %1881 = vmatprep.subr.mxu0 0.0
    %1882 = vmatpush1.msra.mxu0 0.0
    %1883 = vmatprep.subr.mxu0 0.0
    %1884 = vmatpush1.msra.mxu0 0.0
    %1885 = vmatprep.subr.mxu0 0.0
    %1886 = vmatpush1.msra.mxu0 0.0
    %1887 = vmatprep.subr.mxu0 0.0
    %1888 = vmatpush1.msra.mxu0 0.0
    %1889 = vmatprep.subr.mxu0 0.0
    %1890 = vmatpush1.msra.mxu0 0.0
    %1891 = vmatprep.subr.mxu0 0.0
    %1892 = vmatpush1.msra.mxu0 0.0
    %1893 = vmatprep.subr.mxu0 0.0
    %1894 = vmatpush1.msra.mxu0 0.0
    %1895 = vmatprep.mubr.f32.mxu0 0.0
    %1896 = vmatmul.mubr.f32.gmra.mrb[0].mxu0 %v1829
    %v1897 = vpop.f32.mrb[0].mxu0
    %v1898 = vadd.f32 0.0, %v1897
    %v1899 = vpop.f32.mrb[0].mxu0
    %v1900 = vadd.f32 0.0, %v1899
    %1901 = vdwg.mxu0
    %v1902 = vadd.f32 %v1808, %v1898
    %v1903 = vadd.f32 %v1809, %v1900
    %v1904 = vxor.u32 %v1902, 2147483648
    %v1905 = vxor.u32 %v1903, 2147483648
    %v1906 = vmul.f32 %v1904, 1.442695
    %v1907 = vpow.pop %v1906
    %v1908 = vmul.f32 %v1905, 1.442695
    %v1909 = vpow.pop %v1908
    %v1910 = vadd.f32 %v1907, 1.0
    %v1911 = vadd.f32 %v1909, 1.0
    %v1912 = vrcp.pop %v1910
    %v1913 = vmul.f32 1.0, %v1912
    %v1914 = vrcp.pop %v1911
    %v1915 = vmul.f32 1.0, %v1914
    %v1916 = vtanh.pop %v1903
    %1918 = vrot.lane.b32.xlu0 %v1520, 64
    %v1919 = vpop.permute.xlu0 %1918
    %v1921 = vmul.f32 %v1913, %v1919
    %v1922 = vmul.f32 %v1913, %v1916
    %1924 = vrot.lane.b32.xlu0 %v1922, 64
    %v1925 = vpop.permute.xlu0 %1924
    %v1927 = vadd.f32 %v1921, %v1925
    %v1928 = vtanh.pop %v1927
    %v1929 = vmul.f32 %v1915, %v1928
    %v1932 = vunpack.c.l.s4 1983009808
    %v1933 = vunpack.c.0.s8 %v1932
    %v1934 = vlaneseq
    %v1935 = vshrl.u32 %v1934, 7
    %v1936 = vsub.s32 %v1933, %v1935
    %v1937 = vrot.slane %v1929, %v1936
    %1938 = vrot.lane.b32.xlu0 %v1937, 64
    %v1939 = vpop.permute.xlu0 %1938
    %1941 = vst.msk [vmem:[%s14] sm:$0x3] %vm684, %v1939
    %vm1942 = vcmask 1042176
    %1943 = vst.msk [vmem:[%s14 + $0x6] sm:$0x3] %vm1942, %v1929
    %1944 = vrot.lane.b32.xlu0 %v1929, 64
    %v1945 = vpop.permute.xlu0 %1944
    %v1946 = vsel %vm577, %v1945, 0
    %1948 = vmatprep.subr.mxu0 %v1813
    %1949 = vmatpush1.msra.mxu0 %v1812
    %1950 = vmatprep.subr.mxu0 %v1815
    %1951 = vmatpush1.msra.mxu0 %v1814
    %1952 = vmatprep.subr.mxu0 %v1817
    %1953 = vmatpush1.msra.mxu0 %v1816
    %1954 = vmatprep.subr.mxu0 %v1819
    %1955 = vmatpush1.msra.mxu0 %v1818
    %1956 = vmatprep.subr.mxu0 %v1821
    %1957 = vmatpush1.msra.mxu0 %v1820
    %1958 = vmatprep.subr.mxu0 %v1823
    %1959 = vmatpush1.msra.mxu0 %v1822
    %1960 = vmatprep.subr.mxu0 %v1825
    %1961 = vmatpush1.msra.mxu0 %v1824
    %1962 = vmatprep.subr.mxu0 %v1827
    %1963 = vmatpush1.msra.mxu0 %v1826
    %1964 = vmatprep.subr.mxu0 0.0
    %1965 = vmatpush1.msra.mxu0 0.0
    %1966 = vmatprep.subr.mxu0 0.0
    %1967 = vmatpush1.msra.mxu0 0.0
    %1968 = vmatprep.subr.mxu0 0.0
    %1969 = vmatpush1.msra.mxu0 0.0
    %1970 = vmatprep.subr.mxu0 0.0
    %1971 = vmatpush1.msra.mxu0 0.0
    %1972 = vmatprep.subr.mxu0 0.0
    %1973 = vmatpush1.msra.mxu0 0.0
    %1974 = vmatprep.subr.mxu0 0.0
    %1975 = vmatpush1.msra.mxu0 0.0
    %1976 = vmatprep.subr.mxu0 0.0
    %1977 = vmatpush1.msra.mxu0 0.0
    %1978 = vmatprep.subr.mxu0 0.0
    %1979 = vmatpush1.msra.mxu0 0.0
    %1980 = vmatprep.subr.mxu0 0.0
    %1981 = vmatpush1.msra.mxu0 0.0
    %1982 = vmatprep.subr.mxu0 0.0
    %1983 = vmatpush1.msra.mxu0 0.0
    %1984 = vmatprep.subr.mxu0 0.0
    %1985 = vmatpush1.msra.mxu0 0.0
    %1986 = vmatprep.subr.mxu0 0.0
    %1987 = vmatpush1.msra.mxu0 0.0
    %1988 = vmatprep.subr.mxu0 0.0
    %1989 = vmatpush1.msra.mxu0 0.0
    %1990 = vmatprep.subr.mxu0 0.0
    %1991 = vmatpush1.msra.mxu0 0.0
    %1992 = vmatprep.subr.mxu0 0.0
    %1993 = vmatpush1.msra.mxu0 0.0
    %1994 = vmatprep.subr.mxu0 0.0
    %1995 = vmatpush1.msra.mxu0 0.0
    %1996 = vmatprep.subr.mxu0 0.0
    %1997 = vmatpush1.msra.mxu0 0.0
    %1998 = vmatprep.subr.mxu0 0.0
    %1999 = vmatpush1.msra.mxu0 0.0
    %2000 = vmatprep.subr.mxu0 0.0
    %2001 = vmatpush1.msra.mxu0 0.0
    %2002 = vmatprep.subr.mxu0 0.0
    %2003 = vmatpush1.msra.mxu0 0.0
    %2004 = vmatprep.subr.mxu0 0.0
    %2005 = vmatpush1.msra.mxu0 0.0
    %2006 = vmatprep.subr.mxu0 0.0
    %2007 = vmatpush1.msra.mxu0 0.0
    %2008 = vmatprep.subr.mxu0 0.0
    %2009 = vmatpush1.msra.mxu0 0.0
    %2010 = vmatprep.subr.mxu0 0.0
    %2011 = vmatpush1.msra.mxu0 0.0
    %2012 = vmatprep.mubr.f32.mxu0 0.0
    %2013 = vmatmul.mubr.f32.gmra.mrb[0].mxu0 %v1946
    %v2014 = vpop.f32.mrb[0].mxu0
    %v2015 = vadd.f32 0.0, %v2014
    %v2016 = vpop.f32.mrb[0].mxu0
    %v2017 = vadd.f32 0.0, %v2016
    %2018 = vdwg.mxu0
    %v2021 = vrot.slane %v2015, 6
    %v2022 = vrot.slane %v2017, 6
    %v2025 = vadd.f32 %v1808, %v2021
    %v2026 = vadd.f32 %v1809, %v2022
    %v2027 = vxor.u32 %v2025, 2147483648
    %v2028 = vxor.u32 %v2026, 2147483648
    %v2029 = vmul.f32 %v2027, 1.442695
    %v2030 = vpow.pop %v2029
    %v2031 = vmul.f32 %v2028, 1.442695
    %v2032 = vpow.pop %v2031
    %v2033 = vadd.f32 %v2030, 1.0
    %v2034 = vadd.f32 %v2032, 1.0
    %v2035 = vrcp.pop %v2033
    %v2036 = vmul.f32 1.0, %v2035
    %v2037 = vrcp.pop %v2034
    %v2038 = vmul.f32 1.0, %v2037
    %v2039 = vtanh.pop %v2026
    %v2041 = vrot.slane %v1927, 6
    %v2043 = vmul.f32 %v2036, %v2041
    %v2044 = vmul.f32 %v2036, %v2039
    %2046 = vrot.lane.b32.xlu0 %v2044, 64
    %v2047 = vpop.permute.xlu0 %2046
    %v2049 = vadd.f32 %v2043, %v2047
    %v2050 = vtanh.pop %v2049
    %v2051 = vmul.f32 %v2038, %v2050
    %v2054 = vunpack.c.l.s4 1983009808
    %v2055 = vunpack.c.0.s8 %v2054
    %v2056 = vlaneseq
    %v2057 = vshrl.u32 %v2056, 7
    %v2058 = vsub.s32 %v2055, %v2057
    %v2059 = vrot.slane %v2051, %v2058
    %v2060 = vcombine.high %v2059, %v2059
    %vm2062 = vcmask 779776
    %2063 = vst.msk [vmem:[%s14] sm:$0x3] %vm2062, %v2060
    %2064 = vrot.lane.b32.xlu0 %v2060, 64
    %v2065 = vpop.permute.xlu0 %2064
    %2067 = vst.msk [vmem:[%s14 + $0x6] sm:$0x3] %vm686, %v2065
    %v2068 = vrot.slane %v2051, 2
    %2069 = vrot.lane.b32.xlu0 %v2068, 64
    %v2070 = vpop.permute.xlu0 %2069
    %v2071 = vsel %vm577, %v2070, 0
    %2073 = vmatprep.subr.mxu0 %v1813
    %2074 = vmatpush1.msra.mxu0 %v1812
    %2075 = vmatprep.subr.mxu0 %v1815
    %2076 = vmatpush1.msra.mxu0 %v1814
    %2077 = vmatprep.subr.mxu0 %v1817
    %2078 = vmatpush1.msra.mxu0 %v1816
    %2079 = vmatprep.subr.mxu0 %v1819
    %2080 = vmatpush1.msra.mxu0 %v1818
    %2081 = vmatprep.subr.mxu0 %v1821
    %2082 = vmatpush1.msra.mxu0 %v1820
    %2083 = vmatprep.subr.mxu0 %v1823
    %2084 = vmatpush1.msra.mxu0 %v1822
    %2085 = vmatprep.subr.mxu0 %v1825
    %2086 = vmatpush1.msra.mxu0 %v1824
    %2087 = vmatprep.subr.mxu0 %v1827
    %2088 = vmatpush1.msra.mxu0 %v1826
    %2089 = vmatprep.subr.mxu0 0.0
    %2090 = vmatpush1.msra.mxu0 0.0
    %2091 = vmatprep.subr.mxu0 0.0
    %2092 = vmatpush1.msra.mxu0 0.0
    %2093 = vmatprep.subr.mxu0 0.0
    %2094 = vmatpush1.msra.mxu0 0.0
    %2095 = vmatprep.subr.mxu0 0.0
    %2096 = vmatpush1.msra.mxu0 0.0
    %2097 = vmatprep.subr.mxu0 0.0
    %2098 = vmatpush1.msra.mxu0 0.0
    %2099 = vmatprep.subr.mxu0 0.0
    %2100 = vmatpush1.msra.mxu0 0.0
    %2101 = vmatprep.subr.mxu0 0.0
    %2102 = vmatpush1.msra.mxu0 0.0
    %2103 = vmatprep.subr.mxu0 0.0
    %2104 = vmatpush1.msra.mxu0 0.0
    %2105 = vmatprep.subr.mxu0 0.0
    %2106 = vmatpush1.msra.mxu0 0.0
    %2107 = vmatprep.subr.mxu0 0.0
    %2108 = vmatpush1.msra.mxu0 0.0
    %2109 = vmatprep.subr.mxu0 0.0
    %2110 = vmatpush1.msra.mxu0 0.0
    %2111 = vmatprep.subr.mxu0 0.0
    %2112 = vmatpush1.msra.mxu0 0.0
    %2113 = vmatprep.subr.mxu0 0.0
    %2114 = vmatpush1.msra.mxu0 0.0
    %2115 = vmatprep.subr.mxu0 0.0
    %2116 = vmatpush1.msra.mxu0 0.0
    %2117 = vmatprep.subr.mxu0 0.0
    %2118 = vmatpush1.msra.mxu0 0.0
    %2119 = vmatprep.subr.mxu0 0.0
    %2120 = vmatpush1.msra.mxu0 0.0
    %2121 = vmatprep.subr.mxu0 0.0
    %2122 = vmatpush1.msra.mxu0 0.0
    %2123 = vmatprep.subr.mxu0 0.0
    %2124 = vmatpush1.msra.mxu0 0.0
    %2125 = vmatprep.subr.mxu0 0.0
    %2126 = vmatpush1.msra.mxu0 0.0
    %2127 = vmatprep.subr.mxu0 0.0
    %2128 = vmatpush1.msra.mxu0 0.0
    %2129 = vmatprep.subr.mxu0 0.0
    %2130 = vmatpush1.msra.mxu0 0.0
    %2131 = vmatprep.subr.mxu0 0.0
    %2132 = vmatpush1.msra.mxu0 0.0
    %2133 = vmatprep.subr.mxu0 0.0
    %2134 = vmatpush1.msra.mxu0 0.0
    %2135 = vmatprep.subr.mxu0 0.0
    %2136 = vmatpush1.msra.mxu0 0.0
    %2137 = vmatprep.mubr.f32.mxu0 0.0
    %2138 = vmatmul.mubr.f32.gmra.mrb[0].mxu0 %v2071
    %v2139 = vpop.f32.mrb[0].mxu0
    %v2140 = vadd.f32 0.0, %v2139
    %v2141 = vpop.f32.mrb[0].mxu0
    %v2142 = vadd.f32 0.0, %v2141
    %2143 = vdwg.mxu0
    %v2146 = vrot.slane %v2140, 4
    %v2147 = vrot.slane %v2142, 4
    %v2150 = vadd.f32 %v1808, %v2146
    %v2151 = vadd.f32 %v1809, %v2147
    %v2152 = vxor.u32 %v2150, 2147483648
    %v2153 = vxor.u32 %v2151, 2147483648
    %v2154 = vmul.f32 %v2152, 1.442695
    %v2155 = vpow.pop %v2154
    %v2156 = vmul.f32 %v2153, 1.442695
    %v2157 = vpow.pop %v2156
    %v2158 = vadd.f32 %v2155, 1.0
    %v2159 = vadd.f32 %v2157, 1.0
    %v2160 = vrcp.pop %v2158
    %v2161 = vmul.f32 1.0, %v2160
    %v2162 = vrcp.pop %v2159
    %v2163 = vmul.f32 1.0, %v2162
    %v2164 = vtanh.pop %v2151
    %v2166 = vrot.slane %v2049, 6
    %v2168 = vmul.f32 %v2161, %v2166
    %v2169 = vmul.f32 %v2161, %v2164
    %2171 = vrot.lane.b32.xlu0 %v2169, 64
    %v2172 = vpop.permute.xlu0 %2171
    %v2174 = vadd.f32 %v2168, %v2172
    %v2175 = vtanh.pop %v2174
    %v2176 = vmul.f32 %v2163, %v2175
    %v2178 = vcombine.high %v2176, %v2176
    %v2180 = vunpack.c.l.s4 1983009808
    %v2181 = vunpack.c.0.s8 %v2180
    %v2182 = vlaneseq
    %v2183 = vshrl.u32 %v2182, 7
    %v2184 = vsub.s32 %v2181, %v2183
    %v2185 = vrot.slane %v2178, %v2184
    %2186 = vrot.lane.b32.xlu0 %v2185, 64
    %v2187 = vpop.permute.xlu0 %2186
    %2189 = vst.msk [vmem:[%s14 + $0x2] sm:$0x3] %vm684, %v2187
    %2191 = vst.msk [vmem:[%s14 + $0x4] sm:$0x3] %vm1942, %v2185
    %v2192 = vrot.slane %v2176, 4
    %2193 = vrot.lane.b32.xlu0 %v2192, 64
    %v2194 = vpop.permute.xlu0 %2193
    %v2195 = vsel %vm577, %v2194, 0
    %2197 = vmatprep.subr.mxu0 %v1813
    %2198 = vmatpush1.msra.mxu0 %v1812
    %2199 = vmatprep.subr.mxu0 %v1815
    %2200 = vmatpush1.msra.mxu0 %v1814
    %2201 = vmatprep.subr.mxu0 %v1817
    %2202 = vmatpush1.msra.mxu0 %v1816
    %2203 = vmatprep.subr.mxu0 %v1819
    %2204 = vmatpush1.msra.mxu0 %v1818
    %2205 = vmatprep.subr.mxu0 %v1821
    %2206 = vmatpush1.msra.mxu0 %v1820
    %2207 = vmatprep.subr.mxu0 %v1823
    %2208 = vmatpush1.msra.mxu0 %v1822
    %2209 = vmatprep.subr.mxu0 %v1825
    %2210 = vmatpush1.msra.mxu0 %v1824
    %2211 = vmatprep.subr.mxu0 %v1827
    %2212 = vmatpush1.msra.mxu0 %v1826
    %2213 = vmatprep.subr.mxu0 0.0
    %2214 = vmatpush1.msra.mxu0 0.0
    %2215 = vmatprep.subr.mxu0 0.0
    %2216 = vmatpush1.msra.mxu0 0.0
    %2217 = vmatprep.subr.mxu0 0.0
    %2218 = vmatpush1.msra.mxu0 0.0
    %2219 = vmatprep.subr.mxu0 0.0
    %2220 = vmatpush1.msra.mxu0 0.0
    %2221 = vmatprep.subr.mxu0 0.0
    %2222 = vmatpush1.msra.mxu0 0.0
    %2223 = vmatprep.subr.mxu0 0.0
    %2224 = vmatpush1.msra.mxu0 0.0
    %2225 = vmatprep.subr.mxu0 0.0
    %2226 = vmatpush1.msra.mxu0 0.0
    %2227 = vmatprep.subr.mxu0 0.0
    %2228 = vmatpush1.msra.mxu0 0.0
    %2229 = vmatprep.subr.mxu0 0.0
    %2230 = vmatpush1.msra.mxu0 0.0
    %2231 = vmatprep.subr.mxu0 0.0
    %2232 = vmatpush1.msra.mxu0 0.0
    %2233 = vmatprep.subr.mxu0 0.0
    %2234 = vmatpush1.msra.mxu0 0.0
    %2235 = vmatprep.subr.mxu0 0.0
    %2236 = vmatpush1.msra.mxu0 0.0
    %2237 = vmatprep.subr.mxu0 0.0
    %2238 = vmatpush1.msra.mxu0 0.0
    %2239 = vmatprep.subr.mxu0 0.0
    %2240 = vmatpush1.msra.mxu0 0.0
    %2241 = vmatprep.subr.mxu0 0.0
    %2242 = vmatpush1.msra.mxu0 0.0
    %2243 = vmatprep.subr.mxu0 0.0
    %2244 = vmatpush1.msra.mxu0 0.0
    %2245 = vmatprep.subr.mxu0 0.0
    %2246 = vmatpush1.msra.mxu0 0.0
    %2247 = vmatprep.subr.mxu0 0.0
    %2248 = vmatpush1.msra.mxu0 0.0
    %2249 = vmatprep.subr.mxu0 0.0
    %2250 = vmatpush1.msra.mxu0 0.0
    %2251 = vmatprep.subr.mxu0 0.0
    %2252 = vmatpush1.msra.mxu0 0.0
    %2253 = vmatprep.subr.mxu0 0.0
    %2254 = vmatpush1.msra.mxu0 0.0
    %2255 = vmatprep.subr.mxu0 0.0
    %2256 = vmatpush1.msra.mxu0 0.0
    %2257 = vmatprep.subr.mxu0 0.0
    %2258 = vmatpush1.msra.mxu0 0.0
    %2259 = vmatprep.subr.mxu0 0.0
    %2260 = vmatpush1.msra.mxu0 0.0
    %2261 = vmatprep.mubr.f32.mxu0 0.0
    %2262 = vmatmul.mubr.f32.gmra.mrb[0].mxu0 %v2195
    %v2263 = vpop.f32.mrb[0].mxu0
    %v2264 = vadd.f32 0.0, %v2263
    %v2265 = vpop.f32.mrb[0].mxu0
    %v2266 = vadd.f32 0.0, %v2265
    %2267 = vdwg.mxu0
    %v2270 = vrot.slane %v2264, 2
    %v2271 = vrot.slane %v2266, 2
    %v2274 = vadd.f32 %v1808, %v2270
    %v2275 = vadd.f32 %v1809, %v2271
    %v2276 = vxor.u32 %v2274, 2147483648
    %v2277 = vxor.u32 %v2275, 2147483648
    %v2278 = vmul.f32 %v2276, 1.442695
    %v2279 = vpow.pop %v2278
    %v2280 = vmul.f32 %v2277, 1.442695
    %v2281 = vpow.pop %v2280
    %v2282 = vadd.f32 %v2279, 1.0
    %v2283 = vadd.f32 %v2281, 1.0
    %v2284 = vrcp.pop %v2282
    %v2285 = vmul.f32 1.0, %v2284
    %v2286 = vrcp.pop %v2283
    %v2287 = vmul.f32 1.0, %v2286
    %v2288 = vtanh.pop %v2275
    %v2290 = vrot.slane %v2174, 6
    %v2292 = vmul.f32 %v2285, %v2290
    %v2293 = vmul.f32 %v2285, %v2288
    %2295 = vrot.lane.b32.xlu0 %v2293, 64
    %v2296 = vpop.permute.xlu0 %2295
    %v2298 = vadd.f32 %v2292, %v2296
    %v2299 = vtanh.pop %v2298
    %v2300 = vmul.f32 %v2287, %v2299
    %v2302 = vcombine.high %v2300, %v2300
    %v2304 = vunpack.c.l.s4 1983009808
    %v2305 = vunpack.c.0.s8 %v2304
    %v2306 = vlaneseq
    %v2307 = vshrl.u32 %v2306, 7
    %v2308 = vsub.s32 %v2305, %v2307
    %v2309 = vrot.slane %v2302, %v2308
    %v2310 = vcombine.high %v2309, %v2309
    %2312 = vst.msk [vmem:[%s14 + $0x2] sm:$0x3] %vm2062, %v2310
    %2313 = vrot.lane.b32.xlu0 %v2310, 64
    %v2314 = vpop.permute.xlu0 %2313
    %2316 = vst.msk [vmem:[%s14 + $0x4] sm:$0x3] %vm686, %v2314
    %v2317 = vrot.slane %v2300, 6
    %2318 = vrot.lane.b32.xlu0 %v2317, 64
    %v2319 = vpop.permute.xlu0 %2318
    %v2320 = vsel %vm577, %v2319, 0
    %2322 = vmatprep.subr.mxu0 %v1813
    %2323 = vmatpush1.msra.mxu0 %v1812
    %2324 = vmatprep.subr.mxu0 %v1815
    %2325 = vmatpush1.msra.mxu0 %v1814
    %2326 = vmatprep.subr.mxu0 %v1817
    %2327 = vmatpush1.msra.mxu0 %v1816
    %2328 = vmatprep.subr.mxu0 %v1819
    %2329 = vmatpush1.msra.mxu0 %v1818
    %2330 = vmatprep.subr.mxu0 %v1821
    %2331 = vmatpush1.msra.mxu0 %v1820
    %2332 = vmatprep.subr.mxu0 %v1823
    %2333 = vmatpush1.msra.mxu0 %v1822
    %2334 = vmatprep.subr.mxu0 %v1825
    %2335 = vmatpush1.msra.mxu0 %v1824
    %2336 = vmatprep.subr.mxu0 %v1827
    %2337 = vmatpush1.msra.mxu0 %v1826
    %2338 = vmatprep.subr.mxu0 0.0
    %2339 = vmatpush1.msra.mxu0 0.0
    %2340 = vmatprep.subr.mxu0 0.0
    %2341 = vmatpush1.msra.mxu0 0.0
    %2342 = vmatprep.subr.mxu0 0.0
    %2343 = vmatpush1.msra.mxu0 0.0
    %2344 = vmatprep.subr.mxu0 0.0
    %2345 = vmatpush1.msra.mxu0 0.0
    %2346 = vmatprep.subr.mxu0 0.0
    %2347 = vmatpush1.msra.mxu0 0.0
    %2348 = vmatprep.subr.mxu0 0.0
    %2349 = vmatpush1.msra.mxu0 0.0
    %2350 = vmatprep.subr.mxu0 0.0
    %2351 = vmatpush1.msra.mxu0 0.0
    %2352 = vmatprep.subr.mxu0 0.0
    %2353 = vmatpush1.msra.mxu0 0.0
    %2354 = vmatprep.subr.mxu0 0.0
    %2355 = vmatpush1.msra.mxu0 0.0
    %2356 = vmatprep.subr.mxu0 0.0
    %2357 = vmatpush1.msra.mxu0 0.0
    %2358 = vmatprep.subr.mxu0 0.0
    %2359 = vmatpush1.msra.mxu0 0.0
    %2360 = vmatprep.subr.mxu0 0.0
    %2361 = vmatpush1.msra.mxu0 0.0
    %2362 = vmatprep.subr.mxu0 0.0
    %2363 = vmatpush1.msra.mxu0 0.0
    %2364 = vmatprep.subr.mxu0 0.0
    %2365 = vmatpush1.msra.mxu0 0.0
    %2366 = vmatprep.subr.mxu0 0.0
    %2367 = vmatpush1.msra.mxu0 0.0
    %2368 = vmatprep.subr.mxu0 0.0
    %2369 = vmatpush1.msra.mxu0 0.0
    %2370 = vmatprep.subr.mxu0 0.0
    %2371 = vmatpush1.msra.mxu0 0.0
    %2372 = vmatprep.subr.mxu0 0.0
    %2373 = vmatpush1.msra.mxu0 0.0
    %2374 = vmatprep.subr.mxu0 0.0
    %2375 = vmatpush1.msra.mxu0 0.0
    %2376 = vmatprep.subr.mxu0 0.0
    %2377 = vmatpush1.msra.mxu0 0.0
    %2378 = vmatprep.subr.mxu0 0.0
    %2379 = vmatpush1.msra.mxu0 0.0
    %2380 = vmatprep.subr.mxu0 0.0
    %2381 = vmatpush1.msra.mxu0 0.0
    %2382 = vmatprep.subr.mxu0 0.0
    %2383 = vmatpush1.msra.mxu0 0.0
    %2384 = vmatprep.subr.mxu0 0.0
    %2385 = vmatpush1.msra.mxu0 0.0
    %2386 = vmatprep.mubr.f32.mxu0 0.0
    %2387 = vmatmul.mubr.f32.gmra.mrb[0].mxu0 %v2320
    %v2388 = vpop.f32.mrb[0].mxu0
    %v2389 = vadd.f32 0.0, %v2388
    %v2390 = vpop.f32.mrb[0].mxu0
    %v2391 = vadd.f32 0.0, %v2390
    %2392 = vdwg.mxu0
    %v2393 = vadd.f32 %v1810, %v2389
    %v2394 = vadd.f32 %v1811, %v2391
    %v2395 = vxor.u32 %v2393, 2147483648
    %v2396 = vxor.u32 %v2394, 2147483648
    %v2397 = vmul.f32 %v2395, 1.442695
    %v2398 = vpow.pop %v2397
    %v2399 = vmul.f32 %v2396, 1.442695
    %v2400 = vpow.pop %v2399
    %v2401 = vadd.f32 %v2398, 1.0
    %v2402 = vadd.f32 %v2400, 1.0
    %v2403 = vrcp.pop %v2401
    %v2404 = vmul.f32 1.0, %v2403
    %v2405 = vrcp.pop %v2402
    %v2406 = vmul.f32 1.0, %v2405
    %v2407 = vtanh.pop %v2394
    %v2409 = vrot.slane %v2298, 6
    %v2411 = vmul.f32 %v2404, %v2409
    %v2412 = vmul.f32 %v2404, %v2407
    %2414 = vrot.lane.b32.xlu0 %v2412, 64
    %v2415 = vpop.permute.xlu0 %2414
    %v2417 = vadd.f32 %v2411, %v2415
    %v2418 = vtanh.pop %v2417
    %v2419 = vmul.f32 %v2406, %v2418
    %v2422 = vunpack.c.l.s4 1983009808
    %v2423 = vunpack.c.0.s8 %v2422
    %v2424 = vlaneseq
    %v2425 = vshrl.u32 %v2424, 7
    %v2426 = vsub.s32 %v2423, %v2425
    %v2427 = vrot.slane %v2419, %v2426
    %2428 = vrot.lane.b32.xlu0 %v2427, 64
    %v2429 = vpop.permute.xlu0 %2428
    %2431 = vst.msk [vmem:[%s14 + $0x4] sm:$0x3] %vm684, %v2429
    %2432 = vst.msk [vmem:[%s14 + $0x2] sm:$0x3] %vm1942, %v2419
    %2433 = vrot.lane.b32.xlu0 %v2419, 64
    %v2434 = vpop.permute.xlu0 %2433
    %v2435 = vsel %vm577, %v2434, 0
    %2437 = vmatprep.subr.mxu0 %v1813
    %2438 = vmatpush1.msra.mxu0 %v1812
    %2439 = vmatprep.subr.mxu0 %v1815
    %2440 = vmatpush1.msra.mxu0 %v1814
    %2441 = vmatprep.subr.mxu0 %v1817
    %2442 = vmatpush1.msra.mxu0 %v1816
    %2443 = vmatprep.subr.mxu0 %v1819
    %2444 = vmatpush1.msra.mxu0 %v1818
    %2445 = vmatprep.subr.mxu0 %v1821
    %2446 = vmatpush1.msra.mxu0 %v1820
    %2447 = vmatprep.subr.mxu0 %v1823
    %2448 = vmatpush1.msra.mxu0 %v1822
    %2449 = vmatprep.subr.mxu0 %v1825
    %2450 = vmatpush1.msra.mxu0 %v1824
    %2451 = vmatprep.subr.mxu0 %v1827
    %2452 = vmatpush1.msra.mxu0 %v1826
    %2453 = vmatprep.subr.mxu0 0.0
    %2454 = vmatpush1.msra.mxu0 0.0
    %2455 = vmatprep.subr.mxu0 0.0
    %2456 = vmatpush1.msra.mxu0 0.0
    %2457 = vmatprep.subr.mxu0 0.0
    %2458 = vmatpush1.msra.mxu0 0.0
    %2459 = vmatprep.subr.mxu0 0.0
    %2460 = vmatpush1.msra.mxu0 0.0
    %2461 = vmatprep.subr.mxu0 0.0
    %2462 = vmatpush1.msra.mxu0 0.0
    %2463 = vmatprep.subr.mxu0 0.0
    %2464 = vmatpush1.msra.mxu0 0.0
    %2465 = vmatprep.subr.mxu0 0.0
    %2466 = vmatpush1.msra.mxu0 0.0
    %2467 = vmatprep.subr.mxu0 0.0
    %2468 = vmatpush1.msra.mxu0 0.0
    %2469 = vmatprep.subr.mxu0 0.0
    %2470 = vmatpush1.msra.mxu0 0.0
    %2471 = vmatprep.subr.mxu0 0.0
    %2472 = vmatpush1.msra.mxu0 0.0
    %2473 = vmatprep.subr.mxu0 0.0
    %2474 = vmatpush1.msra.mxu0 0.0
    %2475 = vmatprep.subr.mxu0 0.0
    %2476 = vmatpush1.msra.mxu0 0.0
    %2477 = vmatprep.subr.mxu0 0.0
    %2478 = vmatpush1.msra.mxu0 0.0
    %2479 = vmatprep.subr.mxu0 0.0
    %2480 = vmatpush1.msra.mxu0 0.0
    %2481 = vmatprep.subr.mxu0 0.0
    %2482 = vmatpush1.msra.mxu0 0.0
    %2483 = vmatprep.subr.mxu0 0.0
    %2484 = vmatpush1.msra.mxu0 0.0
    %2485 = vmatprep.subr.mxu0 0.0
    %2486 = vmatpush1.msra.mxu0 0.0
    %2487 = vmatprep.subr.mxu0 0.0
    %2488 = vmatpush1.msra.mxu0 0.0
    %2489 = vmatprep.subr.mxu0 0.0
    %2490 = vmatpush1.msra.mxu0 0.0
    %2491 = vmatprep.subr.mxu0 0.0
    %2492 = vmatpush1.msra.mxu0 0.0
    %2493 = vmatprep.subr.mxu0 0.0
    %2494 = vmatpush1.msra.mxu0 0.0
    %2495 = vmatprep.subr.mxu0 0.0
    %2496 = vmatpush1.msra.mxu0 0.0
    %2497 = vmatprep.subr.mxu0 0.0
    %2498 = vmatpush1.msra.mxu0 0.0
    %2499 = vmatprep.subr.mxu0 0.0
    %2500 = vmatpush1.msra.mxu0 0.0
    %2501 = vmatprep.mubr.f32.mxu0 0.0
    %2502 = vmatmul.mubr.f32.gmra.mrb[0].mxu0 %v2435
    %v2503 = vpop.f32.mrb[0].mxu0
    %v2504 = vadd.f32 0.0, %v2503
    %v2505 = vpop.f32.mrb[0].mxu0
    %v2506 = vadd.f32 0.0, %v2505
    %2507 = vdwg.mxu0
    %v2510 = vrot.slane %v2504, 6
    %v2511 = vrot.slane %v2506, 6
    %v2514 = vadd.f32 %v1810, %v2510
    %v2515 = vadd.f32 %v1811, %v2511
    %v2516 = vxor.u32 %v2514, 2147483648
    %v2517 = vxor.u32 %v2515, 2147483648
    %v2518 = vmul.f32 %v2516, 1.442695
    %v2519 = vpow.pop %v2518
    %v2520 = vmul.f32 %v2517, 1.442695
    %v2521 = vpow.pop %v2520
    %v2522 = vadd.f32 %v2519, 1.0
    %v2523 = vadd.f32 %v2521, 1.0
    %v2524 = vrcp.pop %v2522
    %v2525 = vmul.f32 1.0, %v2524
    %v2526 = vrcp.pop %v2523
    %v2527 = vmul.f32 1.0, %v2526
    %v2528 = vtanh.pop %v2515
    %v2530 = vrot.slane %v2417, 6
    %v2532 = vmul.f32 %v2525, %v2530
    %v2533 = vmul.f32 %v2525, %v2528
    %2535 = vrot.lane.b32.xlu0 %v2533, 64
    %v2536 = vpop.permute.xlu0 %2535
    %v2538 = vadd.f32 %v2532, %v2536
    %v2539 = vtanh.pop %v2538
    %v2540 = vmul.f32 %v2527, %v2539
    %v2543 = vunpack.c.l.s4 1983009808
    %v2544 = vunpack.c.0.s8 %v2543
    %v2545 = vlaneseq
    %v2546 = vshrl.u32 %v2545, 7
    %v2547 = vsub.s32 %v2544, %v2546
    %v2548 = vrot.slane %v2540, %v2547
    %v2549 = vcombine.high %v2548, %v2548
    %2551 = vst.msk [vmem:[%s14 + $0x4] sm:$0x3] %vm2062, %v2549
    %2552 = vrot.lane.b32.xlu0 %v2549, 64
    %v2553 = vpop.permute.xlu0 %2552
    %2555 = vst.msk [vmem:[%s14 + $0x2] sm:$0x3] %vm686, %v2553
    %v2556 = vrot.slane %v2540, 2
    %2557 = vrot.lane.b32.xlu0 %v2556, 64
    %v2558 = vpop.permute.xlu0 %2557
    %v2559 = vsel %vm577, %v2558, 0
    %2561 = vmatprep.subr.mxu0 %v1813
    %2562 = vmatpush1.msra.mxu0 %v1812
    %2563 = vmatprep.subr.mxu0 %v1815
    %2564 = vmatpush1.msra.mxu0 %v1814
    %2565 = vmatprep.subr.mxu0 %v1817
    %2566 = vmatpush1.msra.mxu0 %v1816
    %2567 = vmatprep.subr.mxu0 %v1819
    %2568 = vmatpush1.msra.mxu0 %v1818
    %2569 = vmatprep.subr.mxu0 %v1821
    %2570 = vmatpush1.msra.mxu0 %v1820
    %2571 = vmatprep.subr.mxu0 %v1823
    %2572 = vmatpush1.msra.mxu0 %v1822
    %2573 = vmatprep.subr.mxu0 %v1825
    %2574 = vmatpush1.msra.mxu0 %v1824
    %2575 = vmatprep.subr.mxu0 %v1827
    %2576 = vmatpush1.msra.mxu0 %v1826
    %2577 = vmatprep.subr.mxu0 0.0
    %2578 = vmatpush1.msra.mxu0 0.0
    %2579 = vmatprep.subr.mxu0 0.0
    %2580 = vmatpush1.msra.mxu0 0.0
    %2581 = vmatprep.subr.mxu0 0.0
    %2582 = vmatpush1.msra.mxu0 0.0
    %2583 = vmatprep.subr.mxu0 0.0
    %2584 = vmatpush1.msra.mxu0 0.0
    %2585 = vmatprep.subr.mxu0 0.0
    %2586 = vmatpush1.msra.mxu0 0.0
    %2587 = vmatprep.subr.mxu0 0.0
    %2588 = vmatpush1.msra.mxu0 0.0
    %2589 = vmatprep.subr.mxu0 0.0
    %2590 = vmatpush1.msra.mxu0 0.0
    %2591 = vmatprep.subr.mxu0 0.0
    %2592 = vmatpush1.msra.mxu0 0.0
    %2593 = vmatprep.subr.mxu0 0.0
    %2594 = vmatpush1.msra.mxu0 0.0
    %2595 = vmatprep.subr.mxu0 0.0
    %2596 = vmatpush1.msra.mxu0 0.0
    %2597 = vmatprep.subr.mxu0 0.0
    %2598 = vmatpush1.msra.mxu0 0.0
    %2599 = vmatprep.subr.mxu0 0.0
    %2600 = vmatpush1.msra.mxu0 0.0
    %2601 = vmatprep.subr.mxu0 0.0
    %2602 = vmatpush1.msra.mxu0 0.0
    %2603 = vmatprep.subr.mxu0 0.0
    %2604 = vmatpush1.msra.mxu0 0.0
    %2605 = vmatprep.subr.mxu0 0.0
    %2606 = vmatpush1.msra.mxu0 0.0
    %2607 = vmatprep.subr.mxu0 0.0
    %2608 = vmatpush1.msra.mxu0 0.0
    %2609 = vmatprep.subr.mxu0 0.0
    %2610 = vmatpush1.msra.mxu0 0.0
    %2611 = vmatprep.subr.mxu0 0.0
    %2612 = vmatpush1.msra.mxu0 0.0
    %2613 = vmatprep.subr.mxu0 0.0
    %2614 = vmatpush1.msra.mxu0 0.0
    %2615 = vmatprep.subr.mxu0 0.0
    %2616 = vmatpush1.msra.mxu0 0.0
    %2617 = vmatprep.subr.mxu0 0.0
    %2618 = vmatpush1.msra.mxu0 0.0
    %2619 = vmatprep.subr.mxu0 0.0
    %2620 = vmatpush1.msra.mxu0 0.0
    %2621 = vmatprep.subr.mxu0 0.0
    %2622 = vmatpush1.msra.mxu0 0.0
    %2623 = vmatprep.subr.mxu0 0.0
    %2624 = vmatpush1.msra.mxu0 0.0
    %2625 = vmatprep.mubr.f32.mxu0 0.0
    %2626 = vmatmul.mubr.f32.gmra.mrb[0].mxu0 %v2559
    %v2627 = vpop.f32.mrb[0].mxu0
    %v2628 = vadd.f32 0.0, %v2627
    %v2629 = vpop.f32.mrb[0].mxu0
    %v2630 = vadd.f32 0.0, %v2629
    %2631 = vdwg.mxu0
    %v2634 = vrot.slane %v2628, 4
    %v2635 = vrot.slane %v2630, 4
    %v2638 = vadd.f32 %v1810, %v2634
    %v2639 = vadd.f32 %v1811, %v2635
    %v2640 = vxor.u32 %v2638, 2147483648
    %v2641 = vxor.u32 %v2639, 2147483648
    %v2642 = vmul.f32 %v2640, 1.442695
    %v2643 = vpow.pop %v2642
    %v2644 = vmul.f32 %v2641, 1.442695
    %v2645 = vpow.pop %v2644
    %v2646 = vadd.f32 %v2643, 1.0
    %v2647 = vadd.f32 %v2645, 1.0
    %v2648 = vrcp.pop %v2646
    %v2649 = vmul.f32 1.0, %v2648
    %v2650 = vrcp.pop %v2647
    %v2651 = vmul.f32 1.0, %v2650
    %v2652 = vtanh.pop %v2639
    %v2654 = vrot.slane %v2538, 6
    %v2656 = vmul.f32 %v2649, %v2654
    %v2657 = vmul.f32 %v2649, %v2652
    %2659 = vrot.lane.b32.xlu0 %v2657, 64
    %v2660 = vpop.permute.xlu0 %2659
    %v2662 = vadd.f32 %v2656, %v2660
    %v2663 = vtanh.pop %v2662
    %v2664 = vmul.f32 %v2651, %v2663
    %v2666 = vcombine.high %v2664, %v2664
    %v2668 = vunpack.c.l.s4 1983009808
    %v2669 = vunpack.c.0.s8 %v2668
    %v2670 = vlaneseq
    %v2671 = vshrl.u32 %v2670, 7
    %v2672 = vsub.s32 %v2669, %v2671
    %v2673 = vrot.slane %v2666, %v2672
    %2674 = vrot.lane.b32.xlu0 %v2673, 64
    %v2675 = vpop.permute.xlu0 %2674
    %2677 = vst.msk [vmem:[%s14 + $0x6] sm:$0x3] %vm684, %v2675
    %2679 = vst.msk [vmem:[%s14] sm:$0x3] %vm1942, %v2673
    %v2680 = vrot.slane %v2664, 4
    %2681 = vrot.lane.b32.xlu0 %v2680, 64
    %v2682 = vpop.permute.xlu0 %2681
    %v2683 = vsel %vm577, %v2682, 0
    %2685 = vmatprep.subr.mxu0 %v1813
    %2686 = vmatpush1.msra.mxu0 %v1812
    %2687 = vmatprep.subr.mxu0 %v1815
    %2688 = vmatpush1.msra.mxu0 %v1814
    %2689 = vmatprep.subr.mxu0 %v1817
    %2690 = vmatpush1.msra.mxu0 %v1816
    %2691 = vmatprep.subr.mxu0 %v1819
    %2692 = vmatpush1.msra.mxu0 %v1818
    %2693 = vmatprep.subr.mxu0 %v1821
    %2694 = vmatpush1.msra.mxu0 %v1820
    %2695 = vmatprep.subr.mxu0 %v1823
    %2696 = vmatpush1.msra.mxu0 %v1822
    %2697 = vmatprep.subr.mxu0 %v1825
    %2698 = vmatpush1.msra.mxu0 %v1824
    %2699 = vmatprep.subr.mxu0 %v1827
    %2700 = vmatpush1.msra.mxu0 %v1826
    %2701 = vmatprep.subr.mxu0 0.0
    %2702 = vmatpush1.msra.mxu0 0.0
    %2703 = vmatprep.subr.mxu0 0.0
    %2704 = vmatpush1.msra.mxu0 0.0
    %2705 = vmatprep.subr.mxu0 0.0
    %2706 = vmatpush1.msra.mxu0 0.0
    %2707 = vmatprep.subr.mxu0 0.0
    %2708 = vmatpush1.msra.mxu0 0.0
    %2709 = vmatprep.subr.mxu0 0.0
    %2710 = vmatpush1.msra.mxu0 0.0
    %2711 = vmatprep.subr.mxu0 0.0
    %2712 = vmatpush1.msra.mxu0 0.0
    %2713 = vmatprep.subr.mxu0 0.0
    %2714 = vmatpush1.msra.mxu0 0.0
    %2715 = vmatprep.subr.mxu0 0.0
    %2716 = vmatpush1.msra.mxu0 0.0
    %2717 = vmatprep.subr.mxu0 0.0
    %2718 = vmatpush1.msra.mxu0 0.0
    %2719 = vmatprep.subr.mxu0 0.0
    %2720 = vmatpush1.msra.mxu0 0.0
    %2721 = vmatprep.subr.mxu0 0.0
    %2722 = vmatpush1.msra.mxu0 0.0
    %2723 = vmatprep.subr.mxu0 0.0
    %2724 = vmatpush1.msra.mxu0 0.0
    %2725 = vmatprep.subr.mxu0 0.0
    %2726 = vmatpush1.msra.mxu0 0.0
    %2727 = vmatprep.subr.mxu0 0.0
    %2728 = vmatpush1.msra.mxu0 0.0
    %2729 = vmatprep.subr.mxu0 0.0
    %2730 = vmatpush1.msra.mxu0 0.0
    %2731 = vmatprep.subr.mxu0 0.0
    %2732 = vmatpush1.msra.mxu0 0.0
    %2733 = vmatprep.subr.mxu0 0.0
    %2734 = vmatpush1.msra.mxu0 0.0
    %2735 = vmatprep.subr.mxu0 0.0
    %2736 = vmatpush1.msra.mxu0 0.0
    %2737 = vmatprep.subr.mxu0 0.0
    %2738 = vmatpush1.msra.mxu0 0.0
    %2739 = vmatprep.subr.mxu0 0.0
    %2740 = vmatpush1.msra.mxu0 0.0
    %2741 = vmatprep.subr.mxu0 0.0
    %2742 = vmatpush1.msra.mxu0 0.0
    %2743 = vmatprep.subr.mxu0 0.0
    %2744 = vmatpush1.msra.mxu0 0.0
    %2745 = vmatprep.subr.mxu0 0.0
    %2746 = vmatpush1.msra.mxu0 0.0
    %2747 = vmatprep.subr.mxu0 0.0
    %2748 = vmatpush1.msra.mxu0 0.0
    %2749 = vmatprep.mubr.f32.mxu0 0.0
    %2750 = vmatmul.mubr.f32.gmra.mrb[0].mxu0 %v2683
    %v2751 = vpop.f32.mrb[0].mxu0
    %v2752 = vadd.f32 0.0, %v2751
    %v2753 = vpop.f32.mrb[0].mxu0
    %v2754 = vadd.f32 0.0, %v2753
    %2755 = vdwg.mxu0
    %v2758 = vrot.slane %v2752, 2
    %v2759 = vrot.slane %v2754, 2
    %v2762 = vadd.f32 %v1810, %v2758
    %v2763 = vadd.f32 %v1811, %v2759
    %v2764 = vxor.u32 %v2762, 2147483648
    %v2765 = vxor.u32 %v2763, 2147483648
    %v2766 = vmul.f32 %v2764, 1.442695
    %v2767 = vpow.pop %v2766
    %v2768 = vmul.f32 %v2765, 1.442695
    %v2769 = vpow.pop %v2768
    %v2770 = vadd.f32 %v2767, 1.0
    %v2771 = vadd.f32 %v2769, 1.0
    %v2772 = vrcp.pop %v2770
    %v2773 = vmul.f32 1.0, %v2772
    %v2774 = vrcp.pop %v2771
    %v2775 = vmul.f32 1.0, %v2774
    %v2776 = vtanh.pop %v2763
    %v2778 = vrot.slane %v2662, 6
    %v2780 = vmul.f32 %v2773, %v2778
    %v2781 = vmul.f32 %v2773, %v2776
    %2783 = vrot.lane.b32.xlu0 %v2781, 64
    %v2784 = vpop.permute.xlu0 %2783
    %v2786 = vadd.f32 %v2780, %v2784
    %v2787 = vtanh.pop %v2786
    %v2788 = vmul.f32 %v2775, %v2787
    %v2790 = vcombine.high %v2788, %v2788
    %v2792 = vunpack.c.l.s4 1983009808
    %v2793 = vunpack.c.0.s8 %v2792
    %v2794 = vlaneseq
    %v2795 = vshrl.u32 %v2794, 7
    %v2796 = vsub.s32 %v2793, %v2795
    %v2797 = vrot.slane %v2790, %v2796
    %v2798 = vcombine.high %v2797, %v2797
    %2800 = vst.msk [vmem:[%s14 + $0x6] sm:$0x3] %vm2062, %v2798
    %2801 = vrot.lane.b32.xlu0 %v2798, 64
    %v2802 = vpop.permute.xlu0 %2801
    %2804 = vst.msk [vmem:[%s14] sm:$0x3] %vm686, %v2802
    %2805 = vrot.lane.b32.xlu0 %v2788, 64
    %v2806 = vpop.permute.xlu0 %2805
    %s2808 = scalar_lea.vmem [#allocation12], 4
    %2809 = vst.msk [vmem:[%s2808 - $0x6] sm:$0xc0] %vm1032, %v2806
    %2810 = vrot.lane.b32.xlu0 %v2788, 32
    %v2811 = vpop.permute.xlu0 %2810
    %s2813 = scalar_lea.vmem [#allocation12], 6
    %2814 = vst.msk [vmem:[%s2813 - $0x6] sm:$0xc0] %vm1032, %v2811
    %2816 = vrot.lane.b32.xlu0 %v2786, 64
    %v2817 = vpop.permute.xlu0 %2816
    %s2819 = scalar_lea.vmem [#allocation13], 4
    %2820 = vst.msk [vmem:[%s2819 - $0x6] sm:$0xc0] %vm1032, %v2817
    %2821 = vrot.lane.b32.xlu0 %v2786, 32
    %v2822 = vpop.permute.xlu0 %2821
    %s2824 = scalar_lea.vmem [#allocation13], 6
    %2825 = vst.msk [vmem:[%s2824 - $0x6] sm:$0xc0] %vm1032, %v2822
    // Predicated region
    $region78: #{encoder_forward.1} parent=1 // pred_check
      _
    $region79: #{encoder_forward.1} parent=1 // pred_check_branch
      %2827 = sbr.rel (0) target = $region81
    $region80: #{encoder_forward.1} parent=1 // pred_region
      _
    $region81: #{encoder_forward.1} parent=1 // pred_fallthru
      _
    // Predicated region
    $region82: #{encoder_forward.1} parent=1 // pred_check
      _
    $region83: #{encoder_forward.1} parent=1 // pred_check_branch
      %2829 = sbr.rel (0) target = $region85
    $region84: #{encoder_forward.1} parent=1 // pred_region
      %s2831 = ssub.s32 128, 128
      %2832 = vsyncadd [#allocation5], %s2831
      %s2833 = sshll.u32 [#allocation12], 4
      %s2834 = int_to_ptr.vmem [resolvable:$true] %s2833
      %2839 = dma.vmem_to_hbm [thread:$0]  %s2834, 128, %s15, [#allocation5], 32, 32, 2
    $region85: #{encoder_forward.1} parent=1 // pred_fallthru
      _
    // Predicated region
    $region86: #{encoder_forward.1} parent=1 // pred_check
      _
    $region87: #{encoder_forward.1} parent=1 // pred_check_branch
      %2841 = sbr.rel (0) target = $region89
    $region88: #{encoder_forward.1} parent=1 // pred_region
      %s2843 = ssub.s32 128, 128
      %2844 = vsyncadd [#allocation14], %s2843
      %s2845 = sshll.u32 [#allocation13], 4
      %s2846 = int_to_ptr.vmem [resolvable:$true] %s2845
      %2851 = dma.vmem_to_hbm [thread:$0]  %s2846, 128, %s16, [#allocation14], 32, 32, 2
    $region89: #{encoder_forward.1} parent=1 // pred_fallthru
      _
    // Predicated region
    $region90: #{encoder_forward.1} parent=1 // pred_check
      _
    $region91: #{encoder_forward.1} parent=1 // pred_check_branch
      %2853 = sbr.rel (0) target = $region93
    $region92: #{encoder_forward.1} parent=1 // pred_region
      _
    $region93: #{encoder_forward.1} parent=1 // pred_fallthru
      _
    // Predicated region
    $region94: #{encoder_forward.1} parent=1 // pred_check
      _
    $region95: #{encoder_forward.1} parent=1 // pred_check_branch
      %2855 = sbr.rel (0) target = $region97
    $region96: #{encoder_forward.1} parent=1 // pred_region
      %2856 = dma.done [#allocation5], 128
    $region97: #{encoder_forward.1} parent=1 // pred_fallthru
      _
    // Predicated region
    $region98: #{encoder_forward.1} parent=1 // pred_check
      _
    $region99: #{encoder_forward.1} parent=1 // pred_check_branch
      %2858 = sbr.rel (0) target = $region101
    $region100: #{encoder_forward.1} parent=1 // pred_region
      %2859 = dma.done [#allocation14], 128
    $region101: #{encoder_forward.1} parent=1 // pred_fallthru
      _
    %2860 = vsyncpa [#allocation4], 1
    %2861 = vsyncpa [#allocation7], 1
    %2862 = vsyncpa [#allocation10], 1
    %2863 = vsyncpa [#allocation5], 1
    %2864 = vsyncpa [#allocation14], 1

</llo_original>
